<compile_context>
chip_gen: v7x
topology: tpu7x:2x2x1
jax: 0.10.0
libtpu: 0.0.40
codegen_flags: <defaults>
</compile_context>

<pallas_src>
import math
import functools

import jax
import jax.numpy as jnp
from jax.experimental import pallas as pl
from jax.experimental.pallas import tpu as pltpu

PAD = 128                       # lane-padded feature / RBF width
LOG2 = math.log(2.0)


# ------------------------------------------------------------------ helpers --

def _ssp(x):
    # SSPlus = shifted softplus: softplus(x) - ln(2), numerically stable, f32.
    return jnp.maximum(x, 0.0) + jnp.log1p(jnp.exp(-jnp.abs(x))) - LOG2


def _mm(a, b):
    # bf16 MXU operands (cast only if needed), f32 accumulation.
    if a.dtype != jnp.bfloat16:
        a = a.astype(jnp.bfloat16)
    if b.dtype != jnp.bfloat16:
        b = b.astype(jnp.bfloat16)
    return jnp.dot(a, b, preferred_element_type=jnp.float32)


# ------------------------------------------------------------------- kernel --

def _make_zschnet_kernel(n_interactions, gamma, step):
    def kernel(x0_ref, s_ref, d_ref, src_ref, dst_ref, nuc_ref, w_ref, b_ref, o_ref):
        n_nodes = x0_ref.shape[0]
        n_edges = d_ref.shape[0]
        batch = s_ref.shape[0]

        # ---- stacked-weight unpack (order must match pack order in init) ----
        wi = [0]
        bi = [0]

        def W():
            out = w_ref[wi[0]]          # [PAD, PAD] bf16, static index
            wi[0] += 1
            return out

        def B():
            out = b_ref[bi[0]]          # [1, PAD] f32, static index
            bi[0] += 1
            return out

        # ---- 0/1 gather / scatter / readout masks built in-register (bf16) --
        src_m = (jax.lax.broadcasted_iota(jnp.int32, (n_edges, n_nodes), 1)
                 == src_ref[...]).astype(jnp.bfloat16)                      # [E, N]
        dstT_m = (jax.lax.broadcasted_iota(jnp.int32, (n_nodes, n_edges), 0)
                  == dst_ref[...]).astype(jnp.bfloat16)                     # [N, E]
        nuc_m = (jax.lax.broadcasted_iota(jnp.int32, (batch, n_nodes), 1)
                 == nuc_ref[...]).astype(jnp.bfloat16)                      # [B, N]

        # ---- Gaussian RBF expansion of edge distances (once, f32, EUP exp) --
        centers = (jax.lax.broadcasted_iota(jnp.int32, (1, PAD), 1)
                   .astype(jnp.float32) * step)                             # [1, PAD]
        rbf = jnp.exp(-gamma * (d_ref[...] - centers) ** 2)                 # [E, PAD]
        rbf_bf = rbf.astype(jnp.bfloat16)      # hoisted: loop-invariant bf16 cast
        # (rows >= n_rbf of the filter weights are zero, so extra lanes are inert)

        x = x0_ref[...]                                                     # [N, PAD] f32

        # TODO(synk): Z_CFConv definition not provided upstream; implementing the
        #             standard distance-RBF CFConv (no cosine cutoff); z enters
        #             only through the node embedding.
        for _ in range(n_interactions):
            lw, cw1, cw2, mw1, mw2 = W(), W(), W(), W(), W()
            lb, cb1, cb2, mb1, mb2 = B(), B(), B(), B(), B()
            m = _mm(x, lw) + lb                                             # lin_1
            filt = _mm(_ssp(_mm(rbf_bf, cw1) + cb1), cw2) + cb2             # filter MLP
            msg = _mm(src_m, m) * filt                                      # gather * filter
            agg = _mm(dstT_m, msg)                                          # scatter-add
            v = _mm(_ssp(_mm(agg, mw1) + mb1), mw2) + mb2                   # mlp
            x = x + v                                                       # residual

        ws1, ws2 = W(), W()                   # mlp_solv
        wp1, wp2 = W(), W()                   # post_mlp
        wq1x, wq1s, wq2, wq3 = W(), W(), W(), W()   # post_mlp2 (1st layer split)
        bs1, bs2 = B(), B()
        bp1, bp2 = B(), B()
        bq1, bq2, bq3 = B(), B(), B()

        # post_mlp on nodes, then nuc-index gather
        xp = _mm(_ssp(_mm(x, wp1) + bp1), wp2) + bp2                        # [N, PAD]
        x_nuc = _mm(nuc_m, xp)                                              # [B, PAD]

        # solvent MLP + readout (first post_mlp2 layer split over the concat)
        s2 = _mm(_ssp(_mm(s_ref[...], ws1) + bs1), ws2) + bs2
        h = _ssp(_mm(x_nuc, wq1x) + _mm(s2, wq1s) + bq1)
        h = _ssp(_mm(h, wq2) + bq2)
        o_ref[...] = _mm(h, wq3) + bq3                                      # [B, PAD]

    return kernel


# --------------------------------------------------------------- parameters --

def _init_linear_padded(key, fan_in, fan_out):
    """PyTorch nn.Linear default init, zero-padded to [PAD, PAD] / [1, PAD].
    W stored bf16 (MXU operand), bias f32.  Zero pad rows/cols keep padded
    channels exactly 0 through Linear -> SSPlus chains (SSPlus(0) == 0)."""
    kw, kb = jax.random.split(key)
    bound = 1.0 / math.sqrt(fan_in)
    w = jax.random.uniform(kw, (fan_in, fan_out), jnp.float32, -bound, bound)
    b = jax.random.uniform(kb, (1, fan_out), jnp.float32, -bound, bound)
    wp = jnp.zeros((PAD, PAD), jnp.float32).at[:fan_in, :fan_out].set(w)
    bp = jnp.zeros((1, PAD), jnp.float32).at[:, :fan_out].set(b)
    return wp.astype(jnp.bfloat16), bp


def init_zschnet_params(key, n_filters=64, n_interactions=2,
                        u_max=5.0, step=0.1, output_dim=1):
    n_rbf = int(round(u_max / step))              # 50 gaussians
    assert n_filters <= PAD and n_rbf <= PAD and output_dim <= PAD
    keys = iter(jax.random.split(key, 64))

    def lin(fan_in, fan_out):
        return _init_linear_padded(next(keys), fan_in, fan_out)

    emb_z = jax.random.normal(next(keys), (100, n_filters), jnp.float32)
    emb_z = emb_z.at[0].set(0.0)                  # padding_idx=0
    emb_z_p = jnp.zeros((100, PAD), jnp.float32).at[:, :n_filters].set(emb_z)
    emb_s = jax.random.normal(next(keys), (4, 64), jnp.float32)
    emb_s_p = jnp.zeros((4, PAD), jnp.float32).at[:, :64].set(emb_s)

    w_list, b_list = [], []

    # interaction blocks: lin_1, cfconv (filter MLP), mlp
    for _ in range(n_interactions):
        lw, lb = lin(n_filters, n_filters)
        cw1, cb1 = lin(n_rbf, n_filters)
        cw2, cb2 = lin(n_filters, n_filters)
        mw1, mb1 = lin(n_filters, n_filters)
        mw2, mb2 = lin(n_filters, n_filters)
        w_list += [lw, cw1, cw2, mw1, mw2]
        b_list += [lb, cb1, cb2, mb1, mb2]

    # mlp_solv: Linear(64,64) -> SSP -> Linear(64,32)
    ws1, bs1 = lin(64, 64)
    ws2, bs2 = lin(64, 32)
    # post_mlp: Linear(nf,nf) -> SSP -> Linear(nf,64)
    wp1, bp1 = lin(n_filters, n_filters)
    wp2, bp2 = lin(n_filters, 64)

    # post_mlp2: Linear(64+32, 128) -> SSP -> Linear(128, 32) -> SSP -> Linear(32, out)
    # First layer is split over the concat([x_nuc(64), solvent(32)]) so the kernel
    # never builds a 96-wide concat: h = x_nuc @ Wx + s @ Ws + b.
    kw, kb = jax.random.split(next(keys))
    bound = 1.0 / math.sqrt(64 + 32)
    wq1 = jax.random.uniform(kw, (96, 128), jnp.float32, -bound, bound)
    bq1 = jax.random.uniform(kb, (1, PAD), jnp.float32, -bound, bound)
    wq1x = jnp.zeros((PAD, PAD), jnp.float32).at[:64, :128].set(wq1[:64]).astype(jnp.bfloat16)
    wq1s = jnp.zeros((PAD, PAD), jnp.float32).at[:32, :128].set(wq1[64:]).astype(jnp.bfloat16)
    wq2, bq2 = lin(128, 32)
    wq3, bq3 = lin(32, output_dim)

    w_list += [ws1, ws2, wp1, wp2, wq1x, wq1s, wq2, wq3]
    b_list += [bs1, bs2, bp1, bp2, bq1, bq2, bq3]

    return {
        "emb_z": emb_z_p,                       # [100, PAD] f32
        "emb_solv": emb_s_p,                    # [4,   PAD] f32
        "w_stack": jnp.stack(w_list),           # [n_w, PAD, PAD] bf16
        "b_stack": jnp.stack(b_list),           # [n_b, 1,   PAD] f32
    }


# ------------------------------------------------------------------ forward --

def zschnet_forward(params, z, edge_index, pos, solvent, nuc_index_1based,
                    n_interactions=2, gamma=10.0, step=0.1, output_dim=1):
    n_edges = edge_index.shape[1]
    batch = solvent.shape[0]
    b_pad = max(8, ((batch + 7) // 8) * 8)        # sublane-aligned readout rows

    # plain-JAX glue: embedding-table gathers + edge geometry (tiny)
    x0 = jnp.take(params["emb_z"], z.reshape(-1), axis=0)            # [N, PAD]
    s = jnp.take(params["emb_solv"], solvent.reshape(-1), axis=0)    # [B, PAD]
    s = jnp.zeros((b_pad, PAD), jnp.float32).at[:batch].set(s)       # pad rows

    src = edge_index[0]
    dst = edge_index[1]
    diff = pos[dst] - pos[src]
    d = jnp.sqrt(jnp.sum(diff * diff, axis=-1) + 1e-12).reshape(n_edges, 1)

    src_ids = src.reshape(n_edges, 1).astype(jnp.int32)
    dst_ids = dst.reshape(1, n_edges).astype(jnp.int32)
    # pad rows use index -1 -> all-zero gather mask -> discarded after slicing
    nuc_ids = jnp.full((b_pad, 1), -1, jnp.int32).at[:batch, 0].set(
        nuc_index_1based.astype(jnp.int32) - 1)

    kernel = _make_zschnet_kernel(n_interactions, gamma, step)
    vmem = pl.BlockSpec(memory_space=pltpu.MemorySpace.VMEM)
    # Toy sizes: weights (~600 KiB bf16 stacked) + tiny activations fit VMEM, so a
    # single grid-less invocation with 8 input DMAs is optimal.
    out = pl.pallas_call(
        kernel,
        out_shape=jax.ShapeDtypeStruct((b_pad, PAD), jnp.float32),
        in_specs=[vmem] * 8,
        out_specs=vmem,
    )(x0, s, d, src_ids, dst_ids, nuc_ids, params["w_stack"], params["b_stack"])
    return out[:batch, :output_dim]


# --------------------------------------------------------------------- main --

if __name__ == "__main__":
    key = jax.random.PRNGKey(0)
    k_param, k_z, k_pos, k_edge, k_solv = jax.random.split(key, 5)

    N_FILTERS = 64
    N_INTER = 2
    U_MAX, GAMMA, STEP = 5.0, 10.0, 0.1
    OUTPUT_DIM = 1

    n_nodes = 16      # total atoms across the batch
    n_edges = 48
    batch = 2         # number of molecules / graphs

    params = init_zschnet_params(k_param, N_FILTERS, N_INTER, U_MAX, STEP, OUTPUT_DIM)

    z = jax.random.randint(k_z, (n_nodes,), 1, 10, dtype=jnp.int32)        # atomic numbers
    pos = jax.random.normal(k_pos, (n_nodes, 3), jnp.float32) * 2.0        # coordinates
    edge_index = jax.random.randint(k_edge, (2, n_edges), 0, n_nodes, dtype=jnp.int32)
    solvent = jax.random.randint(k_solv, (batch,), 0, 4, dtype=jnp.int32)
    nuc_index_1based = jnp.array([1, 9], dtype=jnp.int32)                  # 1-based, as in data.nuc_index

    fwd = jax.jit(functools.partial(zschnet_forward, n_interactions=N_INTER,
                                    gamma=GAMMA, step=STEP, output_dim=OUTPUT_DIM))
    out = fwd(params, z, edge_index, pos, solvent, nuc_index_1based)
    out = jax.block_until_ready(out)
    assert out.shape == (batch, OUTPUT_DIM)
    print("KERNEL_OK")
</pallas_src>

<mosaic_0001>
module attributes {stable_mosaic.version = 11 : i64} {
  func.func @kernel(%arg0: memref<16x128xf32, #tpu.memory_space<vmem>>, %arg1: memref<8x128xf32, #tpu.memory_space<vmem>>, %arg2: memref<48x1xf32, #tpu.memory_space<vmem>>, %arg3: memref<48x1xi32, #tpu.memory_space<vmem>>, %arg4: memref<1x48xi32, #tpu.memory_space<vmem>>, %arg5: memref<8x1xi32, #tpu.memory_space<vmem>>, %arg6: memref<18x128x128xbf16, #tpu.memory_space<vmem>>, %arg7: memref<17x1x128xf32, #tpu.memory_space<vmem>>, %arg8: memref<8x128xf32, #tpu.memory_space<vmem>>) attributes {dimension_semantics = [], scalar_prefetch = 0 : i64, scratch_operands = 0 : i64, tpu.core_type = #tpu.core_type<tc>} {
    %0 = tpu.iota {dimensions = array<i32: 1>} : vector<48x16xi32>
    %c0 = arith.constant 0 : index
    %c0_0 = arith.constant 0 : index
    %1 = vector.load %arg3[%c0, %c0_0] : memref<48x1xi32, #tpu.memory_space<vmem>>, vector<48x1xi32>
    %2 = vector.broadcast %1 : vector<48x1xi32> to vector<48x16xi32>
    %3 = arith.cmpi eq, %0, %2 : vector<48x16xi32>
    %4 = arith.extui %3 : vector<48x16xi1> to vector<48x16xi32>
    %5 = arith.sitofp %4 : vector<48x16xi32> to vector<48x16xf32>
    %6 = arith.truncf %5 : vector<48x16xf32> to vector<48x16xbf16>
    %7 = tpu.iota {dimensions = array<i32: 0>} : vector<16x48xi32>
    %c0_1 = arith.constant 0 : index
    %c0_2 = arith.constant 0 : index
    %8 = vector.load %arg4[%c0_1, %c0_2] : memref<1x48xi32, #tpu.memory_space<vmem>>, vector<1x48xi32>
    %9 = vector.broadcast %8 : vector<1x48xi32> to vector<16x48xi32>
    %10 = arith.cmpi eq, %7, %9 : vector<16x48xi32>
    %11 = arith.extui %10 : vector<16x48xi1> to vector<16x48xi32>
    %12 = arith.sitofp %11 : vector<16x48xi32> to vector<16x48xf32>
    %13 = arith.truncf %12 : vector<16x48xf32> to vector<16x48xbf16>
    %14 = tpu.iota {dimensions = array<i32: 1>} : vector<8x16xi32>
    %c0_3 = arith.constant 0 : index
    %c0_4 = arith.constant 0 : index
    %15 = vector.load %arg5[%c0_3, %c0_4] : memref<8x1xi32, #tpu.memory_space<vmem>>, vector<8x1xi32>
    %16 = vector.broadcast %15 : vector<8x1xi32> to vector<8x16xi32>
    %17 = arith.cmpi eq, %14, %16 : vector<8x16xi32>
    %18 = arith.extui %17 : vector<8x16xi1> to vector<8x16xi32>
    %19 = arith.sitofp %18 : vector<8x16xi32> to vector<8x16xf32>
    %20 = arith.truncf %19 : vector<8x16xf32> to vector<8x16xbf16>
    %21 = tpu.iota {dimensions = array<i32: 1>} : vector<1x128xi32>
    %22 = arith.sitofp %21 : vector<1x128xi32> to vector<1x128xf32>
    %cst = arith.constant 1.000000e-01 : f32
    %23 = vector.broadcast %cst : f32 to vector<1x128xf32>
    %24 = arith.mulf %22, %23 : vector<1x128xf32>
    %c0_5 = arith.constant 0 : index
    %c0_6 = arith.constant 0 : index
    %25 = vector.load %arg2[%c0_5, %c0_6] : memref<48x1xf32, #tpu.memory_space<vmem>>, vector<48x1xf32>
    %26 = vector.broadcast %25 : vector<48x1xf32> to vector<48x128xf32>
    %27 = vector.broadcast %24 : vector<1x128xf32> to vector<48x128xf32>
    %28 = arith.subf %26, %27 : vector<48x128xf32>
    %29 = arith.mulf %28, %28 : vector<48x128xf32>
    %cst_7 = arith.constant -1.000000e+01 : f32
    %30 = vector.broadcast %cst_7 : f32 to vector<48x128xf32>
    %31 = arith.mulf %30, %29 : vector<48x128xf32>
    %32 = math.exp %31 : vector<48x128xf32>
    %33 = arith.truncf %32 : vector<48x128xf32> to vector<48x128xbf16>
    %c0_8 = arith.constant 0 : index
    %c0_9 = arith.constant 0 : index
    %34 = vector.load %arg0[%c0_8, %c0_9] : memref<16x128xf32, #tpu.memory_space<vmem>>, vector<16x128xf32>
    %c0_10 = arith.constant 0 : index
    %c0_11 = arith.constant 0 : index
    %c0_12 = arith.constant 0 : index
    %35 = vector.load %arg6[%c0_10, %c0_11, %c0_12] : memref<18x128x128xbf16, #tpu.memory_space<vmem>>, vector<1x128x128xbf16>
    %36 = vector.shape_cast %35 : vector<1x128x128xbf16> to vector<128x128xbf16>
    %c1 = arith.constant 1 : index
    %c0_13 = arith.constant 0 : index
    %c0_14 = arith.constant 0 : index
    %37 = vector.load %arg6[%c1, %c0_13, %c0_14] : memref<18x128x128xbf16, #tpu.memory_space<vmem>>, vector<1x128x128xbf16>
    %38 = vector.shape_cast %37 : vector<1x128x128xbf16> to vector<128x128xbf16>
    %c2 = arith.constant 2 : index
    %c0_15 = arith.constant 0 : index
    %c0_16 = arith.constant 0 : index
    %39 = vector.load %arg6[%c2, %c0_15, %c0_16] : memref<18x128x128xbf16, #tpu.memory_space<vmem>>, vector<1x128x128xbf16>
    %40 = vector.shape_cast %39 : vector<1x128x128xbf16> to vector<128x128xbf16>
    %c3 = arith.constant 3 : index
    %c0_17 = arith.constant 0 : index
    %c0_18 = arith.constant 0 : index
    %41 = vector.load %arg6[%c3, %c0_17, %c0_18] : memref<18x128x128xbf16, #tpu.memory_space<vmem>>, vector<1x128x128xbf16>
    %42 = vector.shape_cast %41 : vector<1x128x128xbf16> to vector<128x128xbf16>
    %c4 = arith.constant 4 : index
    %c0_19 = arith.constant 0 : index
    %c0_20 = arith.constant 0 : index
    %43 = vector.load %arg6[%c4, %c0_19, %c0_20] : memref<18x128x128xbf16, #tpu.memory_space<vmem>>, vector<1x128x128xbf16>
    %44 = vector.shape_cast %43 : vector<1x128x128xbf16> to vector<128x128xbf16>
    %c0_21 = arith.constant 0 : index
    %c0_22 = arith.constant 0 : index
    %c0_23 = arith.constant 0 : index
    %45 = vector.load %arg7[%c0_21, %c0_22, %c0_23] : memref<17x1x128xf32, #tpu.memory_space<vmem>>, vector<1x1x128xf32>
    %46 = vector.shape_cast %45 : vector<1x1x128xf32> to vector<1x128xf32>
    %c1_24 = arith.constant 1 : index
    %c0_25 = arith.constant 0 : index
    %c0_26 = arith.constant 0 : index
    %47 = vector.load %arg7[%c1_24, %c0_25, %c0_26] : memref<17x1x128xf32, #tpu.memory_space<vmem>>, vector<1x1x128xf32>
    %48 = vector.shape_cast %47 : vector<1x1x128xf32> to vector<1x128xf32>
    %c2_27 = arith.constant 2 : index
    %c0_28 = arith.constant 0 : index
    %c0_29 = arith.constant 0 : index
    %49 = vector.load %arg7[%c2_27, %c0_28, %c0_29] : memref<17x1x128xf32, #tpu.memory_space<vmem>>, vector<1x1x128xf32>
    %50 = vector.shape_cast %49 : vector<1x1x128xf32> to vector<1x128xf32>
    %c3_30 = arith.constant 3 : index
    %c0_31 = arith.constant 0 : index
    %c0_32 = arith.constant 0 : index
    %51 = vector.load %arg7[%c3_30, %c0_31, %c0_32] : memref<17x1x128xf32, #tpu.memory_space<vmem>>, vector<1x1x128xf32>
    %52 = vector.shape_cast %51 : vector<1x1x128xf32> to vector<1x128xf32>
    %c4_33 = arith.constant 4 : index
    %c0_34 = arith.constant 0 : index
    %c0_35 = arith.constant 0 : index
    %53 = vector.load %arg7[%c4_33, %c0_34, %c0_35] : memref<17x1x128xf32, #tpu.memory_space<vmem>>, vector<1x1x128xf32>
    %54 = vector.shape_cast %53 : vector<1x1x128xf32> to vector<1x128xf32>
    %55 = arith.truncf %34 : vector<16x128xf32> to vector<16x128xbf16>
    %cst_36 = arith.constant dense<0.000000e+00> : vector<16x128xf32>
    %56 = tpu.matmul %55, %36, %cst_36 {dimension_numbers = #tpu.dot_dimension_numbers<[1], [0], [0], [1], [0, 0, 1, 1], [], []>} : vector<16x128xbf16>, vector<128x128xbf16>, vector<16x128xf32> -> vector<16x128xf32>
    %57 = vector.broadcast %46 : vector<1x128xf32> to vector<16x128xf32>
    %58 = arith.addf %56, %57 : vector<16x128xf32>
    %cst_37 = arith.constant dense<0.000000e+00> : vector<48x128xf32>
    %59 = tpu.matmul %33, %38, %cst_37 {dimension_numbers = #tpu.dot_dimension_numbers<[1], [0], [0], [1], [0, 0, 1, 1], [], []>} : vector<48x128xbf16>, vector<128x128xbf16>, vector<48x128xf32> -> vector<48x128xf32>
    %60 = vector.broadcast %48 : vector<1x128xf32> to vector<48x128xf32>
    %61 = arith.addf %59, %60 : vector<48x128xf32>
    %cst_38 = arith.constant 0.000000e+00 : f32
    %62 = vector.broadcast %cst_38 : f32 to vector<48x128xf32>
    %63 = arith.maximumf %61, %62 : vector<48x128xf32>
    %64 = math.absf %61 : vector<48x128xf32>
    %cst_39 = arith.constant 0.000000e+00 : f32
    %65 = vector.broadcast %cst_39 : f32 to vector<48x128xf32>
    %66 = arith.subf %65, %64 : vector<48x128xf32>
    %67 = math.exp %66 : vector<48x128xf32>
    %68 = math.log1p %67 : vector<48x128xf32>
    %69 = arith.addf %63, %68 : vector<48x128xf32>
    %cst_40 = arith.constant 0.693147182 : f32
    %70 = vector.broadcast %cst_40 : f32 to vector<48x128xf32>
    %71 = arith.subf %69, %70 : vector<48x128xf32>
    %72 = arith.truncf %71 : vector<48x128xf32> to vector<48x128xbf16>
    %cst_41 = arith.constant dense<0.000000e+00> : vector<48x128xf32>
    %73 = tpu.matmul %72, %40, %cst_41 {dimension_numbers = #tpu.dot_dimension_numbers<[1], [0], [0], [1], [0, 0, 1, 1], [], []>} : vector<48x128xbf16>, vector<128x128xbf16>, vector<48x128xf32> -> vector<48x128xf32>
    %74 = vector.broadcast %50 : vector<1x128xf32> to vector<48x128xf32>
    %75 = arith.addf %73, %74 : vector<48x128xf32>
    %76 = arith.truncf %58 : vector<16x128xf32> to vector<16x128xbf16>
    %cst_42 = arith.constant dense<0.000000e+00> : vector<48x128xf32>
    %77 = tpu.matmul %6, %76, %cst_42 {dimension_numbers = #tpu.dot_dimension_numbers<[1], [0], [0], [1], [0, 0, 1, 1], [], []>} : vector<48x16xbf16>, vector<16x128xbf16>, vector<48x128xf32> -> vector<48x128xf32>
    %78 = arith.mulf %77, %75 : vector<48x128xf32>
    %79 = arith.truncf %78 : vector<48x128xf32> to vector<48x128xbf16>
    %cst_43 = arith.constant dense<0.000000e+00> : vector<16x128xf32>
    %80 = tpu.matmul %13, %79, %cst_43 {dimension_numbers = #tpu.dot_dimension_numbers<[1], [0], [0], [1], [0, 0, 1, 1], [], []>} : vector<16x48xbf16>, vector<48x128xbf16>, vector<16x128xf32> -> vector<16x128xf32>
    %81 = arith.truncf %80 : vector<16x128xf32> to vector<16x128xbf16>
    %cst_44 = arith.constant dense<0.000000e+00> : vector<16x128xf32>
    %82 = tpu.matmul %81, %42, %cst_44 {dimension_numbers = #tpu.dot_dimension_numbers<[1], [0], [0], [1], [0, 0, 1, 1], [], []>} : vector<16x128xbf16>, vector<128x128xbf16>, vector<16x128xf32> -> vector<16x128xf32>
    %83 = vector.broadcast %52 : vector<1x128xf32> to vector<16x128xf32>
    %84 = arith.addf %82, %83 : vector<16x128xf32>
    %cst_45 = arith.constant 0.000000e+00 : f32
    %85 = vector.broadcast %cst_45 : f32 to vector<16x128xf32>
    %86 = arith.maximumf %84, %85 : vector<16x128xf32>
    %87 = math.absf %84 : vector<16x128xf32>
    %cst_46 = arith.constant 0.000000e+00 : f32
    %88 = vector.broadcast %cst_46 : f32 to vector<16x128xf32>
    %89 = arith.subf %88, %87 : vector<16x128xf32>
    %90 = math.exp %89 : vector<16x128xf32>
    %91 = math.log1p %90 : vector<16x128xf32>
    %92 = arith.addf %86, %91 : vector<16x128xf32>
    %cst_47 = arith.constant 0.693147182 : f32
    %93 = vector.broadcast %cst_47 : f32 to vector<16x128xf32>
    %94 = arith.subf %92, %93 : vector<16x128xf32>
    %95 = arith.truncf %94 : vector<16x128xf32> to vector<16x128xbf16>
    %cst_48 = arith.constant dense<0.000000e+00> : vector<16x128xf32>
    %96 = tpu.matmul %95, %44, %cst_48 {dimension_numbers = #tpu.dot_dimension_numbers<[1], [0], [0], [1], [0, 0, 1, 1], [], []>} : vector<16x128xbf16>, vector<128x128xbf16>, vector<16x128xf32> -> vector<16x128xf32>
    %97 = vector.broadcast %54 : vector<1x128xf32> to vector<16x128xf32>
    %98 = arith.addf %96, %97 : vector<16x128xf32>
    %99 = arith.addf %34, %98 : vector<16x128xf32>
    %c5 = arith.constant 5 : index
    %c0_49 = arith.constant 0 : index
    %c0_50 = arith.constant 0 : index
    %100 = vector.load %arg6[%c5, %c0_49, %c0_50] : memref<18x128x128xbf16, #tpu.memory_space<vmem>>, vector<1x128x128xbf16>
    %101 = vector.shape_cast %100 : vector<1x128x128xbf16> to vector<128x128xbf16>
    %c6 = arith.constant 6 : index
    %c0_51 = arith.constant 0 : index
    %c0_52 = arith.constant 0 : index
    %102 = vector.load %arg6[%c6, %c0_51, %c0_52] : memref<18x128x128xbf16, #tpu.memory_space<vmem>>, vector<1x128x128xbf16>
    %103 = vector.shape_cast %102 : vector<1x128x128xbf16> to vector<128x128xbf16>
    %c7 = arith.constant 7 : index
    %c0_53 = arith.constant 0 : index
    %c0_54 = arith.constant 0 : index
    %104 = vector.load %arg6[%c7, %c0_53, %c0_54] : memref<18x128x128xbf16, #tpu.memory_space<vmem>>, vector<1x128x128xbf16>
    %105 = vector.shape_cast %104 : vector<1x128x128xbf16> to vector<128x128xbf16>
    %c8 = arith.constant 8 : index
    %c0_55 = arith.constant 0 : index
    %c0_56 = arith.constant 0 : index
    %106 = vector.load %arg6[%c8, %c0_55, %c0_56] : memref<18x128x128xbf16, #tpu.memory_space<vmem>>, vector<1x128x128xbf16>
    %107 = vector.shape_cast %106 : vector<1x128x128xbf16> to vector<128x128xbf16>
    %c9 = arith.constant 9 : index
    %c0_57 = arith.constant 0 : index
    %c0_58 = arith.constant 0 : index
    %108 = vector.load %arg6[%c9, %c0_57, %c0_58] : memref<18x128x128xbf16, #tpu.memory_space<vmem>>, vector<1x128x128xbf16>
    %109 = vector.shape_cast %108 : vector<1x128x128xbf16> to vector<128x128xbf16>
    %c5_59 = arith.constant 5 : index
    %c0_60 = arith.constant 0 : index
    %c0_61 = arith.constant 0 : index
    %110 = vector.load %arg7[%c5_59, %c0_60, %c0_61] : memref<17x1x128xf32, #tpu.memory_space<vmem>>, vector<1x1x128xf32>
    %111 = vector.shape_cast %110 : vector<1x1x128xf32> to vector<1x128xf32>
    %c6_62 = arith.constant 6 : index
    %c0_63 = arith.constant 0 : index
    %c0_64 = arith.constant 0 : index
    %112 = vector.load %arg7[%c6_62, %c0_63, %c0_64] : memref<17x1x128xf32, #tpu.memory_space<vmem>>, vector<1x1x128xf32>
    %113 = vector.shape_cast %112 : vector<1x1x128xf32> to vector<1x128xf32>
    %c7_65 = arith.constant 7 : index
    %c0_66 = arith.constant 0 : index
    %c0_67 = arith.constant 0 : index
    %114 = vector.load %arg7[%c7_65, %c0_66, %c0_67] : memref<17x1x128xf32, #tpu.memory_space<vmem>>, vector<1x1x128xf32>
    %115 = vector.shape_cast %114 : vector<1x1x128xf32> to vector<1x128xf32>
    %c8_68 = arith.constant 8 : index
    %c0_69 = arith.constant 0 : index
    %c0_70 = arith.constant 0 : index
    %116 = vector.load %arg7[%c8_68, %c0_69, %c0_70] : memref<17x1x128xf32, #tpu.memory_space<vmem>>, vector<1x1x128xf32>
    %117 = vector.shape_cast %116 : vector<1x1x128xf32> to vector<1x128xf32>
    %c9_71 = arith.constant 9 : index
    %c0_72 = arith.constant 0 : index
    %c0_73 = arith.constant 0 : index
    %118 = vector.load %arg7[%c9_71, %c0_72, %c0_73] : memref<17x1x128xf32, #tpu.memory_space<vmem>>, vector<1x1x128xf32>
    %119 = vector.shape_cast %118 : vector<1x1x128xf32> to vector<1x128xf32>
    %120 = arith.truncf %99 : vector<16x128xf32> to vector<16x128xbf16>
    %cst_74 = arith.constant dense<0.000000e+00> : vector<16x128xf32>
    %121 = tpu.matmul %120, %101, %cst_74 {dimension_numbers = #tpu.dot_dimension_numbers<[1], [0], [0], [1], [0, 0, 1, 1], [], []>} : vector<16x128xbf16>, vector<128x128xbf16>, vector<16x128xf32> -> vector<16x128xf32>
    %122 = vector.broadcast %111 : vector<1x128xf32> to vector<16x128xf32>
    %123 = arith.addf %121, %122 : vector<16x128xf32>
    %cst_75 = arith.constant dense<0.000000e+00> : vector<48x128xf32>
    %124 = tpu.matmul %33, %103, %cst_75 {dimension_numbers = #tpu.dot_dimension_numbers<[1], [0], [0], [1], [0, 0, 1, 1], [], []>} : vector<48x128xbf16>, vector<128x128xbf16>, vector<48x128xf32> -> vector<48x128xf32>
    %125 = vector.broadcast %113 : vector<1x128xf32> to vector<48x128xf32>
    %126 = arith.addf %124, %125 : vector<48x128xf32>
    %cst_76 = arith.constant 0.000000e+00 : f32
    %127 = vector.broadcast %cst_76 : f32 to vector<48x128xf32>
    %128 = arith.maximumf %126, %127 : vector<48x128xf32>
    %129 = math.absf %126 : vector<48x128xf32>
    %cst_77 = arith.constant 0.000000e+00 : f32
    %130 = vector.broadcast %cst_77 : f32 to vector<48x128xf32>
    %131 = arith.subf %130, %129 : vector<48x128xf32>
    %132 = math.exp %131 : vector<48x128xf32>
    %133 = math.log1p %132 : vector<48x128xf32>
    %134 = arith.addf %128, %133 : vector<48x128xf32>
    %cst_78 = arith.constant 0.693147182 : f32
    %135 = vector.broadcast %cst_78 : f32 to vector<48x128xf32>
    %136 = arith.subf %134, %135 : vector<48x128xf32>
    %137 = arith.truncf %136 : vector<48x128xf32> to vector<48x128xbf16>
    %cst_79 = arith.constant dense<0.000000e+00> : vector<48x128xf32>
    %138 = tpu.matmul %137, %105, %cst_79 {dimension_numbers = #tpu.dot_dimension_numbers<[1], [0], [0], [1], [0, 0, 1, 1], [], []>} : vector<48x128xbf16>, vector<128x128xbf16>, vector<48x128xf32> -> vector<48x128xf32>
    %139 = vector.broadcast %115 : vector<1x128xf32> to vector<48x128xf32>
    %140 = arith.addf %138, %139 : vector<48x128xf32>
    %141 = arith.truncf %123 : vector<16x128xf32> to vector<16x128xbf16>
    %cst_80 = arith.constant dense<0.000000e+00> : vector<48x128xf32>
    %142 = tpu.matmul %6, %141, %cst_80 {dimension_numbers = #tpu.dot_dimension_numbers<[1], [0], [0], [1], [0, 0, 1, 1], [], []>} : vector<48x16xbf16>, vector<16x128xbf16>, vector<48x128xf32> -> vector<48x128xf32>
    %143 = arith.mulf %142, %140 : vector<48x128xf32>
    %144 = arith.truncf %143 : vector<48x128xf32> to vector<48x128xbf16>
    %cst_81 = arith.constant dense<0.000000e+00> : vector<16x128xf32>
    %145 = tpu.matmul %13, %144, %cst_81 {dimension_numbers = #tpu.dot_dimension_numbers<[1], [0], [0], [1], [0, 0, 1, 1], [], []>} : vector<16x48xbf16>, vector<48x128xbf16>, vector<16x128xf32> -> vector<16x128xf32>
    %146 = arith.truncf %145 : vector<16x128xf32> to vector<16x128xbf16>
    %cst_82 = arith.constant dense<0.000000e+00> : vector<16x128xf32>
    %147 = tpu.matmul %146, %107, %cst_82 {dimension_numbers = #tpu.dot_dimension_numbers<[1], [0], [0], [1], [0, 0, 1, 1], [], []>} : vector<16x128xbf16>, vector<128x128xbf16>, vector<16x128xf32> -> vector<16x128xf32>
    %148 = vector.broadcast %117 : vector<1x128xf32> to vector<16x128xf32>
    %149 = arith.addf %147, %148 : vector<16x128xf32>
    %cst_83 = arith.constant 0.000000e+00 : f32
    %150 = vector.broadcast %cst_83 : f32 to vector<16x128xf32>
    %151 = arith.maximumf %149, %150 : vector<16x128xf32>
    %152 = math.absf %149 : vector<16x128xf32>
    %cst_84 = arith.constant 0.000000e+00 : f32
    %153 = vector.broadcast %cst_84 : f32 to vector<16x128xf32>
    %154 = arith.subf %153, %152 : vector<16x128xf32>
    %155 = math.exp %154 : vector<16x128xf32>
    %156 = math.log1p %155 : vector<16x128xf32>
    %157 = arith.addf %151, %156 : vector<16x128xf32>
    %cst_85 = arith.constant 0.693147182 : f32
    %158 = vector.broadcast %cst_85 : f32 to vector<16x128xf32>
    %159 = arith.subf %157, %158 : vector<16x128xf32>
    %160 = arith.truncf %159 : vector<16x128xf32> to vector<16x128xbf16>
    %cst_86 = arith.constant dense<0.000000e+00> : vector<16x128xf32>
    %161 = tpu.matmul %160, %109, %cst_86 {dimension_numbers = #tpu.dot_dimension_numbers<[1], [0], [0], [1], [0, 0, 1, 1], [], []>} : vector<16x128xbf16>, vector<128x128xbf16>, vector<16x128xf32> -> vector<16x128xf32>
    %162 = vector.broadcast %119 : vector<1x128xf32> to vector<16x128xf32>
    %163 = arith.addf %161, %162 : vector<16x128xf32>
    %164 = arith.addf %99, %163 : vector<16x128xf32>
    %c10 = arith.constant 10 : index
    %c0_87 = arith.constant 0 : index
    %c0_88 = arith.constant 0 : index
    %165 = vector.load %arg6[%c10, %c0_87, %c0_88] : memref<18x128x128xbf16, #tpu.memory_space<vmem>>, vector<1x128x128xbf16>
    %166 = vector.shape_cast %165 : vector<1x128x128xbf16> to vector<128x128xbf16>
    %c11 = arith.constant 11 : index
    %c0_89 = arith.constant 0 : index
    %c0_90 = arith.constant 0 : index
    %167 = vector.load %arg6[%c11, %c0_89, %c0_90] : memref<18x128x128xbf16, #tpu.memory_space<vmem>>, vector<1x128x128xbf16>
    %168 = vector.shape_cast %167 : vector<1x128x128xbf16> to vector<128x128xbf16>
    %c12 = arith.constant 12 : index
    %c0_91 = arith.constant 0 : index
    %c0_92 = arith.constant 0 : index
    %169 = vector.load %arg6[%c12, %c0_91, %c0_92] : memref<18x128x128xbf16, #tpu.memory_space<vmem>>, vector<1x128x128xbf16>
    %170 = vector.shape_cast %169 : vector<1x128x128xbf16> to vector<128x128xbf16>
    %c13 = arith.constant 13 : index
    %c0_93 = arith.constant 0 : index
    %c0_94 = arith.constant 0 : index
    %171 = vector.load %arg6[%c13, %c0_93, %c0_94] : memref<18x128x128xbf16, #tpu.memory_space<vmem>>, vector<1x128x128xbf16>
    %172 = vector.shape_cast %171 : vector<1x128x128xbf16> to vector<128x128xbf16>
    %c14 = arith.constant 14 : index
    %c0_95 = arith.constant 0 : index
    %c0_96 = arith.constant 0 : index
    %173 = vector.load %arg6[%c14, %c0_95, %c0_96] : memref<18x128x128xbf16, #tpu.memory_space<vmem>>, vector<1x128x128xbf16>
    %174 = vector.shape_cast %173 : vector<1x128x128xbf16> to vector<128x128xbf16>
    %c15 = arith.constant 15 : index
    %c0_97 = arith.constant 0 : index
    %c0_98 = arith.constant 0 : index
    %175 = vector.load %arg6[%c15, %c0_97, %c0_98] : memref<18x128x128xbf16, #tpu.memory_space<vmem>>, vector<1x128x128xbf16>
    %176 = vector.shape_cast %175 : vector<1x128x128xbf16> to vector<128x128xbf16>
    %c16 = arith.constant 16 : index
    %c0_99 = arith.constant 0 : index
    %c0_100 = arith.constant 0 : index
    %177 = vector.load %arg6[%c16, %c0_99, %c0_100] : memref<18x128x128xbf16, #tpu.memory_space<vmem>>, vector<1x128x128xbf16>
    %178 = vector.shape_cast %177 : vector<1x128x128xbf16> to vector<128x128xbf16>
    %c17 = arith.constant 17 : index
    %c0_101 = arith.constant 0 : index
    %c0_102 = arith.constant 0 : index
    %179 = vector.load %arg6[%c17, %c0_101, %c0_102] : memref<18x128x128xbf16, #tpu.memory_space<vmem>>, vector<1x128x128xbf16>
    %180 = vector.shape_cast %179 : vector<1x128x128xbf16> to vector<128x128xbf16>
    %c10_103 = arith.constant 10 : index
    %c0_104 = arith.constant 0 : index
    %c0_105 = arith.constant 0 : index
    %181 = vector.load %arg7[%c10_103, %c0_104, %c0_105] : memref<17x1x128xf32, #tpu.memory_space<vmem>>, vector<1x1x128xf32>
    %182 = vector.shape_cast %181 : vector<1x1x128xf32> to vector<1x128xf32>
    %c11_106 = arith.constant 11 : index
    %c0_107 = arith.constant 0 : index
    %c0_108 = arith.constant 0 : index
    %183 = vector.load %arg7[%c11_106, %c0_107, %c0_108] : memref<17x1x128xf32, #tpu.memory_space<vmem>>, vector<1x1x128xf32>
    %184 = vector.shape_cast %183 : vector<1x1x128xf32> to vector<1x128xf32>
    %c12_109 = arith.constant 12 : index
    %c0_110 = arith.constant 0 : index
    %c0_111 = arith.constant 0 : index
    %185 = vector.load %arg7[%c12_109, %c0_110, %c0_111] : memref<17x1x128xf32, #tpu.memory_space<vmem>>, vector<1x1x128xf32>
    %186 = vector.shape_cast %185 : vector<1x1x128xf32> to vector<1x128xf32>
    %c13_112 = arith.constant 13 : index
    %c0_113 = arith.constant 0 : index
    %c0_114 = arith.constant 0 : index
    %187 = vector.load %arg7[%c13_112, %c0_113, %c0_114] : memref<17x1x128xf32, #tpu.memory_space<vmem>>, vector<1x1x128xf32>
    %188 = vector.shape_cast %187 : vector<1x1x128xf32> to vector<1x128xf32>
    %c14_115 = arith.constant 14 : index
    %c0_116 = arith.constant 0 : index
    %c0_117 = arith.constant 0 : index
    %189 = vector.load %arg7[%c14_115, %c0_116, %c0_117] : memref<17x1x128xf32, #tpu.memory_space<vmem>>, vector<1x1x128xf32>
    %190 = vector.shape_cast %189 : vector<1x1x128xf32> to vector<1x128xf32>
    %c15_118 = arith.constant 15 : index
    %c0_119 = arith.constant 0 : index
    %c0_120 = arith.constant 0 : index
    %191 = vector.load %arg7[%c15_118, %c0_119, %c0_120] : memref<17x1x128xf32, #tpu.memory_space<vmem>>, vector<1x1x128xf32>
    %192 = vector.shape_cast %191 : vector<1x1x128xf32> to vector<1x128xf32>
    %c16_121 = arith.constant 16 : index
    %c0_122 = arith.constant 0 : index
    %c0_123 = arith.constant 0 : index
    %193 = vector.load %arg7[%c16_121, %c0_122, %c0_123] : memref<17x1x128xf32, #tpu.memory_space<vmem>>, vector<1x1x128xf32>
    %194 = vector.shape_cast %193 : vector<1x1x128xf32> to vector<1x128xf32>
    %195 = arith.truncf %164 : vector<16x128xf32> to vector<16x128xbf16>
    %cst_124 = arith.constant dense<0.000000e+00> : vector<16x128xf32>
    %196 = tpu.matmul %195, %170, %cst_124 {dimension_numbers = #tpu.dot_dimension_numbers<[1], [0], [0], [1], [0, 0, 1, 1], [], []>} : vector<16x128xbf16>, vector<128x128xbf16>, vector<16x128xf32> -> vector<16x128xf32>
    %197 = vector.broadcast %186 : vector<1x128xf32> to vector<16x128xf32>
    %198 = arith.addf %196, %197 : vector<16x128xf32>
    %cst_125 = arith.constant 0.000000e+00 : f32
    %199 = vector.broadcast %cst_125 : f32 to vector<16x128xf32>
    %200 = arith.maximumf %198, %199 : vector<16x128xf32>
    %201 = math.absf %198 : vector<16x128xf32>
    %cst_126 = arith.constant 0.000000e+00 : f32
    %202 = vector.broadcast %cst_126 : f32 to vector<16x128xf32>
    %203 = arith.subf %202, %201 : vector<16x128xf32>
    %204 = math.exp %203 : vector<16x128xf32>
    %205 = math.log1p %204 : vector<16x128xf32>
    %206 = arith.addf %200, %205 : vector<16x128xf32>
    %cst_127 = arith.constant 0.693147182 : f32
    %207 = vector.broadcast %cst_127 : f32 to vector<16x128xf32>
    %208 = arith.subf %206, %207 : vector<16x128xf32>
    %209 = arith.truncf %208 : vector<16x128xf32> to vector<16x128xbf16>
    %cst_128 = arith.constant dense<0.000000e+00> : vector<16x128xf32>
    %210 = tpu.matmul %209, %172, %cst_128 {dimension_numbers = #tpu.dot_dimension_numbers<[1], [0], [0], [1], [0, 0, 1, 1], [], []>} : vector<16x128xbf16>, vector<128x128xbf16>, vector<16x128xf32> -> vector<16x128xf32>
    %211 = vector.broadcast %188 : vector<1x128xf32> to vector<16x128xf32>
    %212 = arith.addf %210, %211 : vector<16x128xf32>
    %213 = arith.truncf %212 : vector<16x128xf32> to vector<16x128xbf16>
    %cst_129 = arith.constant dense<0.000000e+00> : vector<8x128xf32>
    %214 = tpu.matmul %20, %213, %cst_129 {dimension_numbers = #tpu.dot_dimension_numbers<[1], [0], [0], [1], [0, 0, 1, 1], [], []>} : vector<8x16xbf16>, vector<16x128xbf16>, vector<8x128xf32> -> vector<8x128xf32>
    %c0_130 = arith.constant 0 : index
    %c0_131 = arith.constant 0 : index
    %215 = vector.load %arg1[%c0_130, %c0_131] : memref<8x128xf32, #tpu.memory_space<vmem>>, vector<8x128xf32>
    %216 = arith.truncf %215 : vector<8x128xf32> to vector<8x128xbf16>
    %cst_132 = arith.constant dense<0.000000e+00> : vector<8x128xf32>
    %217 = tpu.matmul %216, %166, %cst_132 {dimension_numbers = #tpu.dot_dimension_numbers<[1], [0], [0], [1], [0, 0, 1, 1], [], []>} : vector<8x128xbf16>, vector<128x128xbf16>, vector<8x128xf32> -> vector<8x128xf32>
    %218 = vector.broadcast %182 : vector<1x128xf32> to vector<8x128xf32>
    %219 = arith.addf %217, %218 : vector<8x128xf32>
    %cst_133 = arith.constant 0.000000e+00 : f32
    %220 = vector.broadcast %cst_133 : f32 to vector<8x128xf32>
    %221 = arith.maximumf %219, %220 : vector<8x128xf32>
    %222 = math.absf %219 : vector<8x128xf32>
    %cst_134 = arith.constant 0.000000e+00 : f32
    %223 = vector.broadcast %cst_134 : f32 to vector<8x128xf32>
    %224 = arith.subf %223, %222 : vector<8x128xf32>
    %225 = math.exp %224 : vector<8x128xf32>
    %226 = math.log1p %225 : vector<8x128xf32>
    %227 = arith.addf %221, %226 : vector<8x128xf32>
    %cst_135 = arith.constant 0.693147182 : f32
    %228 = vector.broadcast %cst_135 : f32 to vector<8x128xf32>
    %229 = arith.subf %227, %228 : vector<8x128xf32>
    %230 = arith.truncf %229 : vector<8x128xf32> to vector<8x128xbf16>
    %cst_136 = arith.constant dense<0.000000e+00> : vector<8x128xf32>
    %231 = tpu.matmul %230, %168, %cst_136 {dimension_numbers = #tpu.dot_dimension_numbers<[1], [0], [0], [1], [0, 0, 1, 1], [], []>} : vector<8x128xbf16>, vector<128x128xbf16>, vector<8x128xf32> -> vector<8x128xf32>
    %232 = vector.broadcast %184 : vector<1x128xf32> to vector<8x128xf32>
    %233 = arith.addf %231, %232 : vector<8x128xf32>
    %234 = arith.truncf %214 : vector<8x128xf32> to vector<8x128xbf16>
    %cst_137 = arith.constant dense<0.000000e+00> : vector<8x128xf32>
    %235 = tpu.matmul %234, %174, %cst_137 {dimension_numbers = #tpu.dot_dimension_numbers<[1], [0], [0], [1], [0, 0, 1, 1], [], []>} : vector<8x128xbf16>, vector<128x128xbf16>, vector<8x128xf32> -> vector<8x128xf32>
    %236 = arith.truncf %233 : vector<8x128xf32> to vector<8x128xbf16>
    %cst_138 = arith.constant dense<0.000000e+00> : vector<8x128xf32>
    %237 = tpu.matmul %236, %176, %cst_138 {dimension_numbers = #tpu.dot_dimension_numbers<[1], [0], [0], [1], [0, 0, 1, 1], [], []>} : vector<8x128xbf16>, vector<128x128xbf16>, vector<8x128xf32> -> vector<8x128xf32>
    %238 = arith.addf %235, %237 : vector<8x128xf32>
    %239 = vector.broadcast %190 : vector<1x128xf32> to vector<8x128xf32>
    %240 = arith.addf %238, %239 : vector<8x128xf32>
    %cst_139 = arith.constant 0.000000e+00 : f32
    %241 = vector.broadcast %cst_139 : f32 to vector<8x128xf32>
    %242 = arith.maximumf %240, %241 : vector<8x128xf32>
    %243 = math.absf %240 : vector<8x128xf32>
    %cst_140 = arith.constant 0.000000e+00 : f32
    %244 = vector.broadcast %cst_140 : f32 to vector<8x128xf32>
    %245 = arith.subf %244, %243 : vector<8x128xf32>
    %246 = math.exp %245 : vector<8x128xf32>
    %247 = math.log1p %246 : vector<8x128xf32>
    %248 = arith.addf %242, %247 : vector<8x128xf32>
    %cst_141 = arith.constant 0.693147182 : f32
    %249 = vector.broadcast %cst_141 : f32 to vector<8x128xf32>
    %250 = arith.subf %248, %249 : vector<8x128xf32>
    %251 = arith.truncf %250 : vector<8x128xf32> to vector<8x128xbf16>
    %cst_142 = arith.constant dense<0.000000e+00> : vector<8x128xf32>
    %252 = tpu.matmul %251, %178, %cst_142 {dimension_numbers = #tpu.dot_dimension_numbers<[1], [0], [0], [1], [0, 0, 1, 1], [], []>} : vector<8x128xbf16>, vector<128x128xbf16>, vector<8x128xf32> -> vector<8x128xf32>
    %253 = vector.broadcast %192 : vector<1x128xf32> to vector<8x128xf32>
    %254 = arith.addf %252, %253 : vector<8x128xf32>
    %cst_143 = arith.constant 0.000000e+00 : f32
    %255 = vector.broadcast %cst_143 : f32 to vector<8x128xf32>
    %256 = arith.maximumf %254, %255 : vector<8x128xf32>
    %257 = math.absf %254 : vector<8x128xf32>
    %cst_144 = arith.constant 0.000000e+00 : f32
    %258 = vector.broadcast %cst_144 : f32 to vector<8x128xf32>
    %259 = arith.subf %258, %257 : vector<8x128xf32>
    %260 = math.exp %259 : vector<8x128xf32>
    %261 = math.log1p %260 : vector<8x128xf32>
    %262 = arith.addf %256, %261 : vector<8x128xf32>
    %cst_145 = arith.constant 0.693147182 : f32
    %263 = vector.broadcast %cst_145 : f32 to vector<8x128xf32>
    %264 = arith.subf %262, %263 : vector<8x128xf32>
    %265 = arith.truncf %264 : vector<8x128xf32> to vector<8x128xbf16>
    %cst_146 = arith.constant dense<0.000000e+00> : vector<8x128xf32>
    %266 = tpu.matmul %265, %180, %cst_146 {dimension_numbers = #tpu.dot_dimension_numbers<[1], [0], [0], [1], [0, 0, 1, 1], [], []>} : vector<8x128xbf16>, vector<128x128xbf16>, vector<8x128xf32> -> vector<8x128xf32>
    %267 = vector.broadcast %194 : vector<1x128xf32> to vector<8x128xf32>
    %268 = arith.addf %266, %267 : vector<8x128xf32>
    %c0_147 = arith.constant 0 : index
    %c0_148 = arith.constant 0 : index
    %269 = vector.load %arg8[%c0_147, %c0_148] : memref<8x128xf32, #tpu.memory_space<vmem>>, vector<8x128xf32>
    tpu.vector_store %arg8[%c0_147, %c0_148], %268 {strides = array<i32>} : memref<8x128xf32, #tpu.memory_space<vmem>>, vector<8x128xf32>,
    return
  }
}

</mosaic_0001>

<llo_original>
// kernel: zschnet_forward.1
$region0: #{zschnet_forward.1}
  #allocation0 [shape = 'u32[]', space=smem, size = 0x4, offset = 0x4, fixed_abs, tag = 'smem constant byte address 0x4 - core index']
  #allocation1 [shape = 'u32[144,128]{1,0:T(1,128)}', space=vmem, size = 0x12000, scoped, tag = 'internal scratch']
  %s0 = inlined_call_operand.vmem [shape: f32[16,128], index: 0, kind: input, shape index: {}]
  %s1 = inlined_call_operand.vmem [shape: f32[8,128], index: 1, kind: input, shape index: {}]
  %s2 = inlined_call_operand.vmem [shape: f32[48,1], index: 2, kind: input, shape index: {}]
  %s3 = inlined_call_operand.vmem [shape: s32[48,1], index: 3, kind: input, shape index: {}]
  %s4 = inlined_call_operand.vmem [shape: s32[1,48], index: 4, kind: input, shape index: {}]
  %s5 = inlined_call_operand.vmem [shape: s32[8,1], index: 5, kind: input, shape index: {}]
  %s6 = inlined_call_operand.vmem [shape: bf16[18,128,128], index: 6, kind: input, shape index: {}]
  %s7 = inlined_call_operand.vmem [shape: f32[17,1,128], index: 7, kind: input, shape index: {}]
  %s8 = inlined_call_operand.vmem [shape: f32[8,128], index: 8, kind: output, shape index: {}]
  %s9 = sld [smem:[#allocation0]]
  $region42: #{zschnet_forward.1} parent=0
    _
  %s11 = ssub.s32 1, %s9
  %s12 = scalar_select 0, %s11, %s9
  // Predicated region
  $region2: #{zschnet_forward.1} parent=0 // pred_check
    _
  $region3: #{zschnet_forward.1} parent=0 // pred_check_branch
    %14 = sbr.rel (0) target = $region5
  $region4: #{zschnet_forward.1} parent=0 // pred_region
    _
  $region5: #{zschnet_forward.1} parent=0 // pred_fallthru
    _
  // Predicated region
  $region6: #{zschnet_forward.1} parent=0 // pred_check
    _
  $region7: #{zschnet_forward.1} parent=0 // pred_check_branch
    %16 = sbr.rel (0) target = $region9
  $region8: #{zschnet_forward.1} parent=0 // pred_region
    _
  $region9: #{zschnet_forward.1} parent=0 // pred_fallthru
    _
  // Predicated region
  $region10: #{zschnet_forward.1} parent=0 // pred_check
    _
  $region11: #{zschnet_forward.1} parent=0 // pred_check_branch
    %18 = sbr.rel (0) target = $region13
  $region12: #{zschnet_forward.1} parent=0 // pred_region
    _
  $region13: #{zschnet_forward.1} parent=0 // pred_fallthru
    _
  // Predicated region
  $region14: #{zschnet_forward.1} parent=0 // pred_check
    _
  $region15: #{zschnet_forward.1} parent=0 // pred_check_branch
    %20 = sbr.rel (0) target = $region17
  $region16: #{zschnet_forward.1} parent=0 // pred_region
    _
  $region17: #{zschnet_forward.1} parent=0 // pred_fallthru
    _
  // Predicated region
  $region18: #{zschnet_forward.1} parent=0 // pred_check
    _
  $region19: #{zschnet_forward.1} parent=0 // pred_check_branch
    %22 = sbr.rel (0) target = $region21
  $region20: #{zschnet_forward.1} parent=0 // pred_region
    _
  $region21: #{zschnet_forward.1} parent=0 // pred_fallthru
    _
  // Predicated region
  $region22: #{zschnet_forward.1} parent=0 // pred_check
    _
  $region23: #{zschnet_forward.1} parent=0 // pred_check_branch
    %24 = sbr.rel (0) target = $region25
  $region24: #{zschnet_forward.1} parent=0 // pred_region
    _
  $region25: #{zschnet_forward.1} parent=0 // pred_fallthru
    _
  // Predicated region
  $region26: #{zschnet_forward.1} parent=0 // pred_check
    _
  $region27: #{zschnet_forward.1} parent=0 // pred_check_branch
    %26 = sbr.rel (0) target = $region29
  $region28: #{zschnet_forward.1} parent=0 // pred_region
    _
  $region29: #{zschnet_forward.1} parent=0 // pred_fallthru
    _
  // Predicated region
  $region30: #{zschnet_forward.1} parent=0 // pred_check
    _
  $region31: #{zschnet_forward.1} parent=0 // pred_check_branch
    %28 = sbr.rel (0) target = $region33
  $region32: #{zschnet_forward.1} parent=0 // pred_region
    _
  $region33: #{zschnet_forward.1} parent=0 // pred_fallthru
    _
  %v30 = vlaneseq
  %v31 = vand.u32 %v30, 127
  %v32 = vld [vmem:[%s3] sm:$0xff]
  %v33 = vld [vmem:[%s3 + $0x8] sm:$0xff]
  %v34 = vld [vmem:[%s3 + $0x10] sm:$0xff]
  %v35 = vld [vmem:[%s3 + $0x18] sm:$0xff]
  %v36 = vld [vmem:[%s3 + $0x20] sm:$0xff]
  %v37 = vld [vmem:[%s3 + $0x28] sm:$0xff]
  %38 = vset.pattern.permute.xlu0 0
  %39 = vperm.xlu0 %38, %v32
  %v40 = vpop.permute.xlu0 %39
  %41 = vset.pattern.permute.xlu0 0
  %42 = vperm.xlu0 %41, %v33
  %v43 = vpop.permute.xlu0 %42
  %44 = vset.pattern.permute.xlu0 0
  %45 = vperm.xlu0 %44, %v34
  %v46 = vpop.permute.xlu0 %45
  %47 = vset.pattern.permute.xlu0 0
  %48 = vperm.xlu0 %47, %v35
  %v49 = vpop.permute.xlu0 %48
  %50 = vset.pattern.permute.xlu0 0
  %51 = vperm.xlu0 %50, %v36
  %v52 = vpop.permute.xlu0 %51
  %53 = vset.pattern.permute.xlu0 0
  %54 = vperm.xlu0 %53, %v37
  %v55 = vpop.permute.xlu0 %54
  %vm56 = vcmp.eq.s32.totalorder %v31, %v40
  %vm57 = vcmp.eq.s32.totalorder %v31, %v43
  %vm58 = vcmp.eq.s32.totalorder %v31, %v46
  %vm59 = vcmp.eq.s32.totalorder %v31, %v49
  %vm60 = vcmp.eq.s32.totalorder %v31, %v52
  %vm61 = vcmp.eq.s32.totalorder %v31, %v55
  %v62 = vsel %vm56, 1, 0
  %v63 = vsel %vm57, 1, 0
  %v64 = vsel %vm58, 1, 0
  %v65 = vsel %vm59, 1, 0
  %v66 = vsel %vm60, 1, 0
  %v67 = vsel %vm61, 1, 0
  %v68 = vcvt.s32.f32 %v62
  %v69 = vcvt.s32.f32 %v63
  %v70 = vcvt.s32.f32 %v64
  %v71 = vcvt.s32.f32 %v65
  %v72 = vcvt.s32.f32 %v66
  %v73 = vcvt.s32.f32 %v67
  %v74 = vpack.c.bf16 %v69, %v68
  %v75 = vpack.c.bf16 %v71, %v70
  %v76 = vpack.c.bf16 %v73, %v72
  %v77 = vlaneseq
  %v78 = vshrl.u32 %v77, 7
  %v79 = vadd.s32 %v78, 8
  %v80 = vld [vmem:[%s4] sm:$0x1]
  %v81 = vlaneseq
  %v82 = vshrl.u32 %v81, 7
  %v83 = vsub.s32 0, %v82
  %v84 = vrot.slane %v80, %v83
  %vm85 = vcmp.eq.s32.totalorder %v78, %v84
  %vm86 = vcmp.eq.s32.totalorder %v79, %v84
  %v87 = vsel %vm85, 1, 0
  %v88 = vsel %vm86, 1, 0
  %v89 = vcvt.s32.f32 %v87
  %v90 = vcvt.s32.f32 %v88
  %v91 = vpack.c.bf16 %v90, %v89
  %v92 = vld [vmem:[%s5] sm:$0xff]
  %93 = vset.pattern.permute.xlu0 0
  %94 = vperm.xlu0 %93, %v92
  %v95 = vpop.permute.xlu0 %94
  %vm96 = vcmp.eq.s32.totalorder %v31, %v95
  %v97 = vsel %vm96, 1, 0
  %v98 = vcvt.s32.f32 %v97
  %v99 = vpack.c.bf16 %v98, %v98
  %v100 = vcvt.s32.f32 %v31
  %v101 = vmul.f32 %v100, 0.1
  %v102 = vld [vmem:[%s2] sm:$0xff]
  %v103 = vld [vmem:[%s2 + $0x8] sm:$0xff]
  %v104 = vld [vmem:[%s2 + $0x10] sm:$0xff]
  %v105 = vld [vmem:[%s2 + $0x18] sm:$0xff]
  %v106 = vld [vmem:[%s2 + $0x20] sm:$0xff]
  %v107 = vld [vmem:[%s2 + $0x28] sm:$0xff]
  %109 = vset.pattern.permute.xlu0 0
  %110 = vperm.xlu0 %109, %v102
  %v111 = vpop.permute.xlu0 %110
  %114 = vset.pattern.permute.xlu0 0
  %115 = vperm.xlu0 %114, %v103
  %v116 = vpop.permute.xlu0 %115
  %119 = vset.pattern.permute.xlu0 0
  %120 = vperm.xlu0 %119, %v104
  %v121 = vpop.permute.xlu0 %120
  %124 = vset.pattern.permute.xlu0 0
  %125 = vperm.xlu0 %124, %v105
  %v126 = vpop.permute.xlu0 %125
  %129 = vset.pattern.permute.xlu0 0
  %130 = vperm.xlu0 %129, %v106
  %v131 = vpop.permute.xlu0 %130
  %134 = vset.pattern.permute.xlu0 0
  %135 = vperm.xlu0 %134, %v107
  %v136 = vpop.permute.xlu0 %135
  %v138 = vsub.f32 %v111, %v101
  %v139 = vsub.f32 %v116, %v101
  %v140 = vsub.f32 %v121, %v101
  %v141 = vsub.f32 %v126, %v101
  %v142 = vsub.f32 %v131, %v101
  %v143 = vsub.f32 %v136, %v101
  %v144 = vmul.f32 %v138, %v138
  %v145 = vmul.f32 %v139, %v139
  %v146 = vmul.f32 %v140, %v140
  %v147 = vmul.f32 %v141, %v141
  %v148 = vmul.f32 %v142, %v142
  %v149 = vmul.f32 %v143, %v143
  %v150 = vmul.f32 %v144, -10.0
  %v151 = vmul.f32 %v145, -10.0
  %v152 = vmul.f32 %v146, -10.0
  %v153 = vmul.f32 %v147, -10.0
  %v154 = vmul.f32 %v148, -10.0
  %v155 = vmul.f32 %v149, -10.0
  %v156 = vmul.f32 %v150, 1.442695
  %v157 = vpow.pop %v156
  %v158 = vmul.f32 %v151, 1.442695
  %v159 = vpow.pop %v158
  %v160 = vmul.f32 %v152, 1.442695
  %v161 = vpow.pop %v160
  %v162 = vmul.f32 %v153, 1.442695
  %v163 = vpow.pop %v162
  %v164 = vmul.f32 %v154, 1.442695
  %v165 = vpow.pop %v164
  %v166 = vmul.f32 %v155, 1.442695
  %v167 = vpow.pop %v166
  %v168 = vpack.c.bf16 %v159, %v157
  %v169 = vpack.c.bf16 %v163, %v161
  %v170 = vpack.c.bf16 %v167, %v165
  %v171 = vld [vmem:[%s0] sm:$0xff]
  %v172 = vld [vmem:[%s0 + $0x8] sm:$0xff]
  %v173 = vld [vmem:[%s6] sm:$0xf]
  %v174 = vld [vmem:[%s6 + $0x4] sm:$0xf]
  %v175 = vld [vmem:[%s6 + $0x8] sm:$0xf]
  %v176 = vld [vmem:[%s6 + $0xc] sm:$0xf]
  %v177 = vld [vmem:[%s6 + $0x10] sm:$0xf]
  %v178 = vld [vmem:[%s6 + $0x14] sm:$0xf]
  %v179 = vld [vmem:[%s6 + $0x18] sm:$0xf]
  %v180 = vld [vmem:[%s6 + $0x1c] sm:$0xf]
  %v181 = vld [vmem:[%s6 + $0x20] sm:$0xf]
  %v182 = vld [vmem:[%s6 + $0x24] sm:$0xf]
  %v183 = vld [vmem:[%s6 + $0x28] sm:$0xf]
  %v184 = vld [vmem:[%s6 + $0x2c] sm:$0xf]
  %v185 = vld [vmem:[%s6 + $0x30] sm:$0xf]
  %v186 = vld [vmem:[%s6 + $0x34] sm:$0xf]
  %v187 = vld [vmem:[%s6 + $0x38] sm:$0xf]
  %v188 = vld [vmem:[%s6 + $0x3c] sm:$0xf]
  %s189 = scalar_lea.vmem %s6, 64
  %v190 = vld [vmem:[%s189] sm:$0xf]
  %v191 = vld [vmem:[%s189 + $0x4] sm:$0xf]
  %v192 = vld [vmem:[%s189 + $0x8] sm:$0xf]
  %v193 = vld [vmem:[%s189 + $0xc] sm:$0xf]
  %v194 = vld [vmem:[%s189 + $0x10] sm:$0xf]
  %v195 = vld [vmem:[%s189 + $0x14] sm:$0xf]
  %v196 = vld [vmem:[%s189 + $0x18] sm:$0xf]
  %v197 = vld [vmem:[%s189 + $0x1c] sm:$0xf]
  %v198 = vld [vmem:[%s189 + $0x20] sm:$0xf]
  %v199 = vld [vmem:[%s189 + $0x24] sm:$0xf]
  %v200 = vld [vmem:[%s189 + $0x28] sm:$0xf]
  %v201 = vld [vmem:[%s189 + $0x2c] sm:$0xf]
  %v202 = vld [vmem:[%s189 + $0x30] sm:$0xf]
  %v203 = vld [vmem:[%s189 + $0x34] sm:$0xf]
  %v204 = vld [vmem:[%s189 + $0x38] sm:$0xf]
  %v205 = vld [vmem:[%s189 + $0x3c] sm:$0xf]
  %s206 = scalar_lea.vmem %s6, 128
  %v207 = vld [vmem:[%s206] sm:$0xf]
  %v208 = vld [vmem:[%s206 + $0x4] sm:$0xf]
  %v209 = vld [vmem:[%s206 + $0x8] sm:$0xf]
  %v210 = vld [vmem:[%s206 + $0xc] sm:$0xf]
  %v211 = vld [vmem:[%s206 + $0x10] sm:$0xf]
  %v212 = vld [vmem:[%s206 + $0x14] sm:$0xf]
  %v213 = vld [vmem:[%s206 + $0x18] sm:$0xf]
  %v214 = vld [vmem:[%s206 + $0x1c] sm:$0xf]
  %v215 = vld [vmem:[%s206 + $0x20] sm:$0xf]
  %v216 = vld [vmem:[%s206 + $0x24] sm:$0xf]
  %v217 = vld [vmem:[%s206 + $0x28] sm:$0xf]
  %v218 = vld [vmem:[%s206 + $0x2c] sm:$0xf]
  %v219 = vld [vmem:[%s206 + $0x30] sm:$0xf]
  %v220 = vld [vmem:[%s206 + $0x34] sm:$0xf]
  %v221 = vld [vmem:[%s206 + $0x38] sm:$0xf]
  %v222 = vld [vmem:[%s206 + $0x3c] sm:$0xf]
  %s223 = scalar_lea.vmem %s6, 192
  %v224 = vld [vmem:[%s223] sm:$0xf]
  %v225 = vld [vmem:[%s223 + $0x4] sm:$0xf]
  %v226 = vld [vmem:[%s223 + $0x8] sm:$0xf]
  %v227 = vld [vmem:[%s223 + $0xc] sm:$0xf]
  %v228 = vld [vmem:[%s223 + $0x10] sm:$0xf]
  %v229 = vld [vmem:[%s223 + $0x14] sm:$0xf]
  %v230 = vld [vmem:[%s223 + $0x18] sm:$0xf]
  %v231 = vld [vmem:[%s223 + $0x1c] sm:$0xf]
  %v232 = vld [vmem:[%s223 + $0x20] sm:$0xf]
  %v233 = vld [vmem:[%s223 + $0x24] sm:$0xf]
  %v234 = vld [vmem:[%s223 + $0x28] sm:$0xf]
  %v235 = vld [vmem:[%s223 + $0x2c] sm:$0xf]
  %v236 = vld [vmem:[%s223 + $0x30] sm:$0xf]
  %v237 = vld [vmem:[%s223 + $0x34] sm:$0xf]
  %v238 = vld [vmem:[%s223 + $0x38] sm:$0xf]
  %v239 = vld [vmem:[%s223 + $0x3c] sm:$0xf]
  %s240 = scalar_lea.vmem %s6, 256
  %v241 = vld [vmem:[%s240] sm:$0xf]
  %v242 = vld [vmem:[%s240 + $0x4] sm:$0xf]
  %v243 = vld [vmem:[%s240 + $0x8] sm:$0xf]
  %v244 = vld [vmem:[%s240 + $0xc] sm:$0xf]
  %v245 = vld [vmem:[%s240 + $0x10] sm:$0xf]
  %v246 = vld [vmem:[%s240 + $0x14] sm:$0xf]
  %v247 = vld [vmem:[%s240 + $0x18] sm:$0xf]
  %v248 = vld [vmem:[%s240 + $0x1c] sm:$0xf]
  %v249 = vld [vmem:[%s240 + $0x20] sm:$0xf]
  %v250 = vld [vmem:[%s240 + $0x24] sm:$0xf]
  %v251 = vld [vmem:[%s240 + $0x28] sm:$0xf]
  %v252 = vld [vmem:[%s240 + $0x2c] sm:$0xf]
  %v253 = vld [vmem:[%s240 + $0x30] sm:$0xf]
  %v254 = vld [vmem:[%s240 + $0x34] sm:$0xf]
  %v255 = vld [vmem:[%s240 + $0x38] sm:$0xf]
  %v256 = vld [vmem:[%s240 + $0x3c] sm:$0xf]
  %v257 = vld [vmem:[%s7] sm:$0x1]
  %s258 = scalar_lea.vmem %s7, 1
  %v259 = vld [vmem:[%s258] sm:$0x1]
  %s260 = scalar_lea.vmem %s7, 2
  %v261 = vld [vmem:[%s260] sm:$0x1]
  %s262 = scalar_lea.vmem %s7, 3
  %v263 = vld [vmem:[%s262] sm:$0x1]
  %s264 = scalar_lea.vmem %s7, 4
  %v265 = vld [vmem:[%s264] sm:$0x1]
  %v266 = vpack.c.bf16 %v172, %v171
  %v268 = vlaneseq
  %v269 = vshrl.u32 %v268, 7
  %v270 = vsub.s32 0, %v269
  %v271 = vrot.slane %v257, %v270
  %v289 = vunpack.c.l.b16 %v173
  %v290 = vunpack.c.l.b16 %v174
  %v291 = vunpack.c.l.b16 %v175
  %v292 = vunpack.c.l.b16 %v176
  %v293 = vunpack.c.l.b16 %v177
  %v294 = vunpack.c.l.b16 %v178
  %v295 = vunpack.c.l.b16 %v179
  %v296 = vunpack.c.l.b16 %v180
  %v297 = vunpack.c.l.b16 %v181
  %v298 = vunpack.c.l.b16 %v182
  %v299 = vunpack.c.l.b16 %v183
  %v300 = vunpack.c.l.b16 %v184
  %v301 = vunpack.c.l.b16 %v185
  %v302 = vunpack.c.l.b16 %v186
  %v303 = vunpack.c.l.b16 %v187
  %v304 = vunpack.c.l.b16 %v188
  %v305 = vpack.c.b16 %v290, %v289
  %v306 = vpack.c.b16 %v292, %v291
  %v307 = vpack.c.b16 %v294, %v293
  %v308 = vpack.c.b16 %v296, %v295
  %v309 = vpack.c.b16 %v298, %v297
  %v310 = vpack.c.b16 %v300, %v299
  %v311 = vpack.c.b16 %v302, %v301
  %v312 = vpack.c.b16 %v304, %v303
  %321 = vmatprep.subr.bf16.mxu0 0
  %322 = vmatpush1.bf16.msra.mxu0 %v305
  %323 = vmatprep.subr.bf16.mxu0 0
  %324 = vmatpush1.bf16.msra.mxu0 %v306
  %325 = vmatprep.subr.bf16.mxu0 0
  %326 = vmatpush1.bf16.msra.mxu0 %v307
  %327 = vmatprep.subr.bf16.mxu0 0
  %328 = vmatpush1.bf16.msra.mxu0 %v308
  %329 = vmatprep.subr.bf16.mxu0 0
  %330 = vmatpush1.bf16.msra.mxu0 %v309
  %331 = vmatprep.subr.bf16.mxu0 0
  %332 = vmatpush1.bf16.msra.mxu0 %v310
  %333 = vmatprep.subr.bf16.mxu0 0
  %334 = vmatpush1.bf16.msra.mxu0 %v311
  %335 = vmatprep.subr.bf16.mxu0 0
  %336 = vmatpush1.bf16.msra.mxu0 %v312
  %337 = vmatprep.subr.bf16.mxu0 0
  %338 = vmatpush1.bf16.msra.mxu0 0
  %339 = vmatprep.subr.bf16.mxu0 0
  %340 = vmatpush1.bf16.msra.mxu0 0
  %341 = vmatprep.subr.bf16.mxu0 0
  %342 = vmatpush1.bf16.msra.mxu0 0
  %343 = vmatprep.subr.bf16.mxu0 0
  %344 = vmatpush1.bf16.msra.mxu0 0
  %345 = vmatprep.subr.bf16.mxu0 0
  %346 = vmatpush1.bf16.msra.mxu0 0
  %347 = vmatprep.subr.bf16.mxu0 0
  %348 = vmatpush1.bf16.msra.mxu0 0
  %349 = vmatprep.subr.bf16.mxu0 0
  %350 = vmatpush1.bf16.msra.mxu0 0
  %351 = vmatprep.subr.bf16.mxu0 0
  %352 = vmatpush1.bf16.msra.mxu0 0
  %353 = vmatprep.mubr.bf16.mxu0 0
  %354 = vmatmul.mubr.bf16.gmra.mrb[0].mxu0 %v266
  %v355 = vpop.f32.mrb[0].mxu0
  %v356 = vadd.f32 %v271, %v355
  %v357 = vpop.f32.mrb[0].mxu0
  %v358 = vpop.f32.mrb[0].mxu0
  %v359 = vadd.f32 %v271, %v358
  %v360 = vpop.f32.mrb[0].mxu0
  %361 = vdwg.mxu0
  %v363 = vlaneseq
  %v364 = vshrl.u32 %v363, 7
  %v365 = vsub.s32 0, %v364
  %v366 = vrot.slane %v259, %v365
  %v384 = vunpack.c.l.b16 %v190
  %v385 = vunpack.c.l.b16 %v191
  %v386 = vunpack.c.l.b16 %v192
  %v387 = vunpack.c.l.b16 %v193
  %v388 = vunpack.c.l.b16 %v194
  %v389 = vunpack.c.l.b16 %v195
  %v390 = vunpack.c.l.b16 %v196
  %v391 = vunpack.c.l.b16 %v197
  %v392 = vunpack.c.l.b16 %v198
  %v393 = vunpack.c.l.b16 %v199
  %v394 = vunpack.c.l.b16 %v200
  %v395 = vunpack.c.l.b16 %v201
  %v396 = vunpack.c.l.b16 %v202
  %v397 = vunpack.c.l.b16 %v203
  %v398 = vunpack.c.l.b16 %v204
  %v399 = vunpack.c.l.b16 %v205
  %v400 = vpack.c.b16 %v385, %v384
  %v401 = vpack.c.b16 %v387, %v386
  %v402 = vpack.c.b16 %v389, %v388
  %v403 = vpack.c.b16 %v391, %v390
  %v404 = vpack.c.b16 %v393, %v392
  %v405 = vpack.c.b16 %v395, %v394
  %v406 = vpack.c.b16 %v397, %v396
  %v407 = vpack.c.b16 %v399, %v398
  %416 = vmatprep.subr.bf16.mxu0 0
  %417 = vmatpush1.bf16.msra.mxu0 %v400
  %418 = vmatprep.subr.bf16.mxu0 0
  %419 = vmatpush1.bf16.msra.mxu0 %v401
  %420 = vmatprep.subr.bf16.mxu0 0
  %421 = vmatpush1.bf16.msra.mxu0 %v402
  %422 = vmatprep.subr.bf16.mxu0 0
  %423 = vmatpush1.bf16.msra.mxu0 %v403
  %424 = vmatprep.subr.bf16.mxu0 0
  %425 = vmatpush1.bf16.msra.mxu0 %v404
  %426 = vmatprep.subr.bf16.mxu0 0
  %427 = vmatpush1.bf16.msra.mxu0 %v405
  %428 = vmatprep.subr.bf16.mxu0 0
  %429 = vmatpush1.bf16.msra.mxu0 %v406
  %430 = vmatprep.subr.bf16.mxu0 0
  %431 = vmatpush1.bf16.msra.mxu0 %v407
  %432 = vmatprep.subr.bf16.mxu0 0
  %433 = vmatpush1.bf16.msra.mxu0 0
  %434 = vmatprep.subr.bf16.mxu0 0
  %435 = vmatpush1.bf16.msra.mxu0 0
  %436 = vmatprep.subr.bf16.mxu0 0
  %437 = vmatpush1.bf16.msra.mxu0 0
  %438 = vmatprep.subr.bf16.mxu0 0
  %439 = vmatpush1.bf16.msra.mxu0 0
  %440 = vmatprep.subr.bf16.mxu0 0
  %441 = vmatpush1.bf16.msra.mxu0 0
  %442 = vmatprep.subr.bf16.mxu0 0
  %443 = vmatpush1.bf16.msra.mxu0 0
  %444 = vmatprep.subr.bf16.mxu0 0
  %445 = vmatpush1.bf16.msra.mxu0 0
  %446 = vmatprep.subr.bf16.mxu0 0
  %447 = vmatpush1.bf16.msra.mxu0 0
  %448 = vmatprep.mubr.bf16.mxu0 0
  %449 = vmatmul.mubr.bf16.gmra.mrb[0].mxu0 %v168
  %v450 = vpop.f32.mrb[0].mxu0
  %v451 = vadd.f32 %v366, %v450
  %v452 = vpop.f32.mrb[0].mxu0
  %v453 = vpop.f32.mrb[0].mxu0
  %v454 = vadd.f32 %v366, %v453
  %v455 = vpop.f32.mrb[0].mxu0
  %456 = vmatprep.mubr.bf16.mxu0 0
  %457 = vmatmul.mubr.bf16.gmra.mrb[0].mxu0 %v169
  %v458 = vpop.f32.mrb[0].mxu0
  %v459 = vadd.f32 %v366, %v458
  %v460 = vpop.f32.mrb[0].mxu0
  %v461 = vpop.f32.mrb[0].mxu0
  %v462 = vadd.f32 %v366, %v461
  %v463 = vpop.f32.mrb[0].mxu0
  %464 = vmatprep.mubr.bf16.mxu0 0
  %465 = vmatmul.mubr.bf16.gmra.mrb[0].mxu0 %v170
  %v466 = vpop.f32.mrb[0].mxu0
  %v467 = vadd.f32 %v366, %v466
  %v468 = vpop.f32.mrb[0].mxu0
  %v469 = vpop.f32.mrb[0].mxu0
  %v470 = vadd.f32 %v366, %v469
  %v471 = vpop.f32.mrb[0].mxu0
  %472 = vdwg.mxu0
  %v473 = vmax.f32 %v451, 0.0
  %v474 = vmax.f32 %v454, 0.0
  %v475 = vmax.f32 %v459, 0.0
  %v476 = vmax.f32 %v462, 0.0
  %v477 = vmax.f32 %v467, 0.0
  %v478 = vmax.f32 %v470, 0.0
  %v479 = vand.u32 2147483647, %v451
  %v480 = vand.u32 2147483647, %v454
  %v481 = vand.u32 2147483647, %v459
  %v482 = vand.u32 2147483647, %v462
  %v483 = vand.u32 2147483647, %v467
  %v484 = vand.u32 2147483647, %v470
  %v485 = vsub.f32 0.0, %v479
  %v486 = vsub.f32 0.0, %v480
  %v487 = vsub.f32 0.0, %v481
  %v488 = vsub.f32 0.0, %v482
  %v489 = vsub.f32 0.0, %v483
  %v490 = vsub.f32 0.0, %v484
  %v491 = vmul.f32 %v485, 1.442695
  %v492 = vpow.pop %v491
  %v493 = vmul.f32 %v486, 1.442695
  %v494 = vpow.pop %v493
  %v495 = vmul.f32 %v487, 1.442695
  %v496 = vpow.pop %v495
  %v497 = vmul.f32 %v488, 1.442695
  %v498 = vpow.pop %v497
  %v499 = vmul.f32 %v489, 1.442695
  %v500 = vpow.pop %v499
  %v501 = vmul.f32 %v490, 1.442695
  %v502 = vpow.pop %v501
  %v503 = vadd.f32 %v492, 1.0
  %v504 = vlog2.pop %v503
  %v505 = vmul.f32 %v504, 0.6931472
  %v506 = vmul.f32 -0.5, %v492
  %v507 = vadd.f32 %v506, 1.0
  %v508 = vmul.f32 %v507, %v492
  %v509 = vand.u32 2147483647, %v492
  %vm510 = vcmp.lt.f32.partialorder %v509, 0.0004427343
  %v511 = vsel %vm510, %v508, %v505
  %v512 = vadd.f32 %v494, 1.0
  %v513 = vlog2.pop %v512
  %v514 = vmul.f32 %v513, 0.6931472
  %v515 = vmul.f32 -0.5, %v494
  %v516 = vadd.f32 %v515, 1.0
  %v517 = vmul.f32 %v516, %v494
  %v518 = vand.u32 2147483647, %v494
  %vm519 = vcmp.lt.f32.partialorder %v518, 0.0004427343
  %v520 = vsel %vm519, %v517, %v514
  %v521 = vadd.f32 %v496, 1.0
  %v522 = vlog2.pop %v521
  %v523 = vmul.f32 %v522, 0.6931472
  %v524 = vmul.f32 -0.5, %v496
  %v525 = vadd.f32 %v524, 1.0
  %v526 = vmul.f32 %v525, %v496
  %v527 = vand.u32 2147483647, %v496
  %vm528 = vcmp.lt.f32.partialorder %v527, 0.0004427343
  %v529 = vsel %vm528, %v526, %v523
  %v530 = vadd.f32 %v498, 1.0
  %v531 = vlog2.pop %v530
  %v532 = vmul.f32 %v531, 0.6931472
  %v533 = vmul.f32 -0.5, %v498
  %v534 = vadd.f32 %v533, 1.0
  %v535 = vmul.f32 %v534, %v498
  %v536 = vand.u32 2147483647, %v498
  %vm537 = vcmp.lt.f32.partialorder %v536, 0.0004427343
  %v538 = vsel %vm537, %v535, %v532
  %v539 = vadd.f32 %v500, 1.0
  %v540 = vlog2.pop %v539
  %v541 = vmul.f32 %v540, 0.6931472
  %v542 = vmul.f32 -0.5, %v500
  %v543 = vadd.f32 %v542, 1.0
  %v544 = vmul.f32 %v543, %v500
  %v545 = vand.u32 2147483647, %v500
  %vm546 = vcmp.lt.f32.partialorder %v545, 0.0004427343
  %v547 = vsel %vm546, %v544, %v541
  %v548 = vadd.f32 %v502, 1.0
  %v549 = vlog2.pop %v548
  %v550 = vmul.f32 %v549, 0.6931472
  %v551 = vmul.f32 -0.5, %v502
  %v552 = vadd.f32 %v551, 1.0
  %v553 = vmul.f32 %v552, %v502
  %v554 = vand.u32 2147483647, %v502
  %vm555 = vcmp.lt.f32.partialorder %v554, 0.0004427343
  %v556 = vsel %vm555, %v553, %v550
  %v557 = vadd.f32 %v473, %v511
  %v558 = vadd.f32 %v474, %v520
  %v559 = vadd.f32 %v475, %v529
  %v560 = vadd.f32 %v476, %v538
  %v561 = vadd.f32 %v477, %v547
  %v562 = vadd.f32 %v478, %v556
  %v563 = vsub.f32 %v557, 0.6931472
  %v564 = vsub.f32 %v558, 0.6931472
  %v565 = vsub.f32 %v559, 0.6931472
  %v566 = vsub.f32 %v560, 0.6931472
  %v567 = vsub.f32 %v561, 0.6931472
  %v568 = vsub.f32 %v562, 0.6931472
  %v569 = vpack.c.bf16 %v564, %v563
  %v570 = vpack.c.bf16 %v566, %v565
  %v571 = vpack.c.bf16 %v568, %v567
  %v573 = vlaneseq
  %v574 = vshrl.u32 %v573, 7
  %v575 = vsub.s32 0, %v574
  %v576 = vrot.slane %v261, %v575
  %v594 = vunpack.c.l.b16 %v207
  %v595 = vunpack.c.l.b16 %v208
  %v596 = vunpack.c.l.b16 %v209
  %v597 = vunpack.c.l.b16 %v210
  %v598 = vunpack.c.l.b16 %v211
  %v599 = vunpack.c.l.b16 %v212
  %v600 = vunpack.c.l.b16 %v213
  %v601 = vunpack.c.l.b16 %v214
  %v602 = vunpack.c.l.b16 %v215
  %v603 = vunpack.c.l.b16 %v216
  %v604 = vunpack.c.l.b16 %v217
  %v605 = vunpack.c.l.b16 %v218
  %v606 = vunpack.c.l.b16 %v219
  %v607 = vunpack.c.l.b16 %v220
  %v608 = vunpack.c.l.b16 %v221
  %v609 = vunpack.c.l.b16 %v222
  %v610 = vpack.c.b16 %v595, %v594
  %v611 = vpack.c.b16 %v597, %v596
  %v612 = vpack.c.b16 %v599, %v598
  %v613 = vpack.c.b16 %v601, %v600
  %v614 = vpack.c.b16 %v603, %v602
  %v615 = vpack.c.b16 %v605, %v604
  %v616 = vpack.c.b16 %v607, %v606
  %v617 = vpack.c.b16 %v609, %v608
  %626 = vmatprep.subr.bf16.mxu0 0
  %627 = vmatpush1.bf16.msra.mxu0 %v610
  %628 = vmatprep.subr.bf16.mxu0 0
  %629 = vmatpush1.bf16.msra.mxu0 %v611
  %630 = vmatprep.subr.bf16.mxu0 0
  %631 = vmatpush1.bf16.msra.mxu0 %v612
  %632 = vmatprep.subr.bf16.mxu0 0
  %633 = vmatpush1.bf16.msra.mxu0 %v613
  %634 = vmatprep.subr.bf16.mxu0 0
  %635 = vmatpush1.bf16.msra.mxu0 %v614
  %636 = vmatprep.subr.bf16.mxu0 0
  %637 = vmatpush1.bf16.msra.mxu0 %v615
  %638 = vmatprep.subr.bf16.mxu0 0
  %639 = vmatpush1.bf16.msra.mxu0 %v616
  %640 = vmatprep.subr.bf16.mxu0 0
  %641 = vmatpush1.bf16.msra.mxu0 %v617
  %642 = vmatprep.subr.bf16.mxu0 0
  %643 = vmatpush1.bf16.msra.mxu0 0
  %644 = vmatprep.subr.bf16.mxu0 0
  %645 = vmatpush1.bf16.msra.mxu0 0
  %646 = vmatprep.subr.bf16.mxu0 0
  %647 = vmatpush1.bf16.msra.mxu0 0
  %648 = vmatprep.subr.bf16.mxu0 0
  %649 = vmatpush1.bf16.msra.mxu0 0
  %650 = vmatprep.subr.bf16.mxu0 0
  %651 = vmatpush1.bf16.msra.mxu0 0
  %652 = vmatprep.subr.bf16.mxu0 0
  %653 = vmatpush1.bf16.msra.mxu0 0
  %654 = vmatprep.subr.bf16.mxu0 0
  %655 = vmatpush1.bf16.msra.mxu0 0
  %656 = vmatprep.subr.bf16.mxu0 0
  %657 = vmatpush1.bf16.msra.mxu0 0
  %658 = vmatprep.mubr.bf16.mxu0 0
  %659 = vmatmul.mubr.bf16.gmra.mrb[0].mxu0 %v569
  %v660 = vpop.f32.mrb[0].mxu0
  %v661 = vadd.f32 %v576, %v660
  %v662 = vpop.f32.mrb[0].mxu0
  %v663 = vpop.f32.mrb[0].mxu0
  %v664 = vadd.f32 %v576, %v663
  %v665 = vpop.f32.mrb[0].mxu0
  %666 = vmatprep.mubr.bf16.mxu0 0
  %667 = vmatmul.mubr.bf16.gmra.mrb[0].mxu0 %v570
  %v668 = vpop.f32.mrb[0].mxu0
  %v669 = vadd.f32 %v576, %v668
  %v670 = vpop.f32.mrb[0].mxu0
  %v671 = vpop.f32.mrb[0].mxu0
  %v672 = vadd.f32 %v576, %v671
  %v673 = vpop.f32.mrb[0].mxu0
  %674 = vmatprep.mubr.bf16.mxu0 0
  %675 = vmatmul.mubr.bf16.gmra.mrb[0].mxu0 %v571
  %v676 = vpop.f32.mrb[0].mxu0
  %v677 = vadd.f32 %v576, %v676
  %v678 = vpop.f32.mrb[0].mxu0
  %v679 = vpop.f32.mrb[0].mxu0
  %v680 = vadd.f32 %v576, %v679
  %v681 = vpop.f32.mrb[0].mxu0
  %682 = vdwg.mxu0
  %v683 = vpack.c.bf16 %v359, %v356
  %vm684 = vcmask 130048
  %v686 = vsel %vm684, %v74, 0
  %v689 = vsel %vm684, %v75, 0
  %v692 = vsel %vm684, %v76, 0
  %694 = vmatprep.subr.bf16.mxu0 0
  %695 = vmatpush1.bf16.msra.mxu0 %v683
  %696 = vmatprep.subr.bf16.mxu0 0
  %697 = vmatpush1.bf16.msra.mxu0 0
  %698 = vmatprep.subr.bf16.mxu0 0
  %699 = vmatpush1.bf16.msra.mxu0 0
  %700 = vmatprep.subr.bf16.mxu0 0
  %701 = vmatpush1.bf16.msra.mxu0 0
  %702 = vmatprep.subr.bf16.mxu0 0
  %703 = vmatpush1.bf16.msra.mxu0 0
  %704 = vmatprep.subr.bf16.mxu0 0
  %705 = vmatpush1.bf16.msra.mxu0 0
  %706 = vmatprep.subr.bf16.mxu0 0
  %707 = vmatpush1.bf16.msra.mxu0 0
  %708 = vmatprep.subr.bf16.mxu0 0
  %709 = vmatpush1.bf16.msra.mxu0 0
  %710 = vmatprep.subr.bf16.mxu0 0
  %711 = vmatpush1.bf16.msra.mxu0 0
  %712 = vmatprep.subr.bf16.mxu0 0
  %713 = vmatpush1.bf16.msra.mxu0 0
  %714 = vmatprep.subr.bf16.mxu0 0
  %715 = vmatpush1.bf16.msra.mxu0 0
  %716 = vmatprep.subr.bf16.mxu0 0
  %717 = vmatpush1.bf16.msra.mxu0 0
  %718 = vmatprep.subr.bf16.mxu0 0
  %719 = vmatpush1.bf16.msra.mxu0 0
  %720 = vmatprep.subr.bf16.mxu0 0
  %721 = vmatpush1.bf16.msra.mxu0 0
  %722 = vmatprep.subr.bf16.mxu0 0
  %723 = vmatpush1.bf16.msra.mxu0 0
  %724 = vmatprep.subr.bf16.mxu0 0
  %725 = vmatpush1.bf16.msra.mxu0 0
  %726 = vmatprep.mubr.bf16.mxu0 0
  %727 = vmatmul.mubr.bf16.gmra.mrb[0].mxu0 %v686
  %v728 = vpop.f32.mrb[0].mxu0
  %v729 = vadd.f32 0.0, %v728
  %v730 = vpop.f32.mrb[0].mxu0
  %v731 = vpop.f32.mrb[0].mxu0
  %v732 = vadd.f32 0.0, %v731
  %v733 = vpop.f32.mrb[0].mxu0
  %734 = vmatprep.mubr.bf16.mxu0 0
  %735 = vmatmul.mubr.bf16.gmra.mrb[0].mxu0 %v689
  %v736 = vpop.f32.mrb[0].mxu0
  %v737 = vadd.f32 0.0, %v736
  %v738 = vpop.f32.mrb[0].mxu0
  %v739 = vpop.f32.mrb[0].mxu0
  %v740 = vadd.f32 0.0, %v739
  %v741 = vpop.f32.mrb[0].mxu0
  %742 = vmatprep.mubr.bf16.mxu0 0
  %743 = vmatmul.mubr.bf16.gmra.mrb[0].mxu0 %v692
  %v744 = vpop.f32.mrb[0].mxu0
  %v745 = vadd.f32 0.0, %v744
  %v746 = vpop.f32.mrb[0].mxu0
  %v747 = vpop.f32.mrb[0].mxu0
  %v748 = vadd.f32 0.0, %v747
  %v749 = vpop.f32.mrb[0].mxu0
  %750 = vdwg.mxu0
  %v751 = vmul.f32 %v729, %v661
  %v752 = vmul.f32 %v732, %v664
  %v753 = vmul.f32 %v737, %v669
  %v754 = vmul.f32 %v740, %v672
  %v755 = vmul.f32 %v745, %v677
  %v756 = vmul.f32 %v748, %v680
  %v757 = vpack.c.bf16 %v752, %v751
  %v758 = vpack.c.bf16 %v754, %v753
  %v759 = vpack.c.bf16 %v756, %v755
  %vm760 = vcmask 392192
  %v762 = vsel %vm760, %v91, 0
  %764 = vmatprep.subr.bf16.mxu0 0
  %765 = vmatpush1.bf16.msra.mxu0 %v757
  %766 = vmatprep.subr.bf16.mxu0 0
  %767 = vmatpush1.bf16.msra.mxu0 %v758
  %768 = vmatprep.subr.bf16.mxu0 0
  %769 = vmatpush1.bf16.msra.mxu0 %v759
  %770 = vmatprep.subr.bf16.mxu0 0
  %771 = vmatpush1.bf16.msra.mxu0 0
  %772 = vmatprep.subr.bf16.mxu0 0
  %773 = vmatpush1.bf16.msra.mxu0 0
  %774 = vmatprep.subr.bf16.mxu0 0
  %775 = vmatpush1.bf16.msra.mxu0 0
  %776 = vmatprep.subr.bf16.mxu0 0
  %777 = vmatpush1.bf16.msra.mxu0 0
  %778 = vmatprep.subr.bf16.mxu0 0
  %779 = vmatpush1.bf16.msra.mxu0 0
  %780 = vmatprep.subr.bf16.mxu0 0
  %781 = vmatpush1.bf16.msra.mxu0 0
  %782 = vmatprep.subr.bf16.mxu0 0
  %783 = vmatpush1.bf16.msra.mxu0 0
  %784 = vmatprep.subr.bf16.mxu0 0
  %785 = vmatpush1.bf16.msra.mxu0 0
  %786 = vmatprep.subr.bf16.mxu0 0
  %787 = vmatpush1.bf16.msra.mxu0 0
  %788 = vmatprep.subr.bf16.mxu0 0
  %789 = vmatpush1.bf16.msra.mxu0 0
  %790 = vmatprep.subr.bf16.mxu0 0
  %791 = vmatpush1.bf16.msra.mxu0 0
  %792 = vmatprep.subr.bf16.mxu0 0
  %793 = vmatpush1.bf16.msra.mxu0 0
  %794 = vmatprep.subr.bf16.mxu0 0
  %795 = vmatpush1.bf16.msra.mxu0 0
  %796 = vmatprep.mubr.bf16.mxu0 0
  %797 = vmatmul.mubr.bf16.gmra.mrb[0].mxu0 %v762
  %v798 = vpop.f32.mrb[0].mxu0
  %v799 = vadd.f32 0.0, %v798
  %v800 = vpop.f32.mrb[0].mxu0
  %v801 = vpop.f32.mrb[0].mxu0
  %v802 = vadd.f32 0.0, %v801
  %v803 = vpop.f32.mrb[0].mxu0
  %804 = vdwg.mxu0
  %v805 = vpack.c.bf16 %v802, %v799
  %v807 = vlaneseq
  %v808 = vshrl.u32 %v807, 7
  %v809 = vsub.s32 0, %v808
  %v810 = vrot.slane %v263, %v809
  %v828 = vunpack.c.l.b16 %v224
  %v829 = vunpack.c.l.b16 %v225
  %v830 = vunpack.c.l.b16 %v226
  %v831 = vunpack.c.l.b16 %v227
  %v832 = vunpack.c.l.b16 %v228
  %v833 = vunpack.c.l.b16 %v229
  %v834 = vunpack.c.l.b16 %v230
  %v835 = vunpack.c.l.b16 %v231
  %v836 = vunpack.c.l.b16 %v232
  %v837 = vunpack.c.l.b16 %v233
  %v838 = vunpack.c.l.b16 %v234
  %v839 = vunpack.c.l.b16 %v235
  %v840 = vunpack.c.l.b16 %v236
  %v841 = vunpack.c.l.b16 %v237
  %v842 = vunpack.c.l.b16 %v238
  %v843 = vunpack.c.l.b16 %v239
  %v844 = vpack.c.b16 %v829, %v828
  %v845 = vpack.c.b16 %v831, %v830
  %v846 = vpack.c.b16 %v833, %v832
  %v847 = vpack.c.b16 %v835, %v834
  %v848 = vpack.c.b16 %v837, %v836
  %v849 = vpack.c.b16 %v839, %v838
  %v850 = vpack.c.b16 %v841, %v840
  %v851 = vpack.c.b16 %v843, %v842
  %860 = vmatprep.subr.bf16.mxu0 0
  %861 = vmatpush1.bf16.msra.mxu0 %v844
  %862 = vmatprep.subr.bf16.mxu0 0
  %863 = vmatpush1.bf16.msra.mxu0 %v845
  %864 = vmatprep.subr.bf16.mxu0 0
  %865 = vmatpush1.bf16.msra.mxu0 %v846
  %866 = vmatprep.subr.bf16.mxu0 0
  %867 = vmatpush1.bf16.msra.mxu0 %v847
  %868 = vmatprep.subr.bf16.mxu0 0
  %869 = vmatpush1.bf16.msra.mxu0 %v848
  %870 = vmatprep.subr.bf16.mxu0 0
  %871 = vmatpush1.bf16.msra.mxu0 %v849
  %872 = vmatprep.subr.bf16.mxu0 0
  %873 = vmatpush1.bf16.msra.mxu0 %v850
  %874 = vmatprep.subr.bf16.mxu0 0
  %875 = vmatpush1.bf16.msra.mxu0 %v851
  %876 = vmatprep.subr.bf16.mxu0 0
  %877 = vmatpush1.bf16.msra.mxu0 0
  %878 = vmatprep.subr.bf16.mxu0 0
  %879 = vmatpush1.bf16.msra.mxu0 0
  %880 = vmatprep.subr.bf16.mxu0 0
  %881 = vmatpush1.bf16.msra.mxu0 0
  %882 = vmatprep.subr.bf16.mxu0 0
  %883 = vmatpush1.bf16.msra.mxu0 0
  %884 = vmatprep.subr.bf16.mxu0 0
  %885 = vmatpush1.bf16.msra.mxu0 0
  %886 = vmatprep.subr.bf16.mxu0 0
  %887 = vmatpush1.bf16.msra.mxu0 0
  %888 = vmatprep.subr.bf16.mxu0 0
  %889 = vmatpush1.bf16.msra.mxu0 0
  %890 = vmatprep.subr.bf16.mxu0 0
  %891 = vmatpush1.bf16.msra.mxu0 0
  %892 = vmatprep.mubr.bf16.mxu0 0
  %893 = vmatmul.mubr.bf16.gmra.mrb[0].mxu0 %v805
  %v894 = vpop.f32.mrb[0].mxu0
  %v895 = vadd.f32 %v810, %v894
  %v896 = vpop.f32.mrb[0].mxu0
  %v897 = vpop.f32.mrb[0].mxu0
  %v898 = vadd.f32 %v810, %v897
  %v899 = vpop.f32.mrb[0].mxu0
  %900 = vdwg.mxu0
  %v901 = vmax.f32 %v895, 0.0
  %v902 = vmax.f32 %v898, 0.0
  %v903 = vand.u32 2147483647, %v895
  %v904 = vand.u32 2147483647, %v898
  %v905 = vsub.f32 0.0, %v903
  %v906 = vsub.f32 0.0, %v904
  %v907 = vmul.f32 %v905, 1.442695
  %v908 = vpow.pop %v907
  %v909 = vmul.f32 %v906, 1.442695
  %v910 = vpow.pop %v909
  %v911 = vadd.f32 %v908, 1.0
  %v912 = vlog2.pop %v911
  %v913 = vmul.f32 %v912, 0.6931472
  %v914 = vmul.f32 -0.5, %v908
  %v915 = vadd.f32 %v914, 1.0
  %v916 = vmul.f32 %v915, %v908
  %v917 = vand.u32 2147483647, %v908
  %vm918 = vcmp.lt.f32.partialorder %v917, 0.0004427343
  %v919 = vsel %vm918, %v916, %v913
  %v920 = vadd.f32 %v910, 1.0
  %v921 = vlog2.pop %v920
  %v922 = vmul.f32 %v921, 0.6931472
  %v923 = vmul.f32 -0.5, %v910
  %v924 = vadd.f32 %v923, 1.0
  %v925 = vmul.f32 %v924, %v910
  %v926 = vand.u32 2147483647, %v910
  %vm927 = vcmp.lt.f32.partialorder %v926, 0.0004427343
  %v928 = vsel %vm927, %v925, %v922
  %v929 = vadd.f32 %v901, %v919
  %v930 = vadd.f32 %v902, %v928
  %v931 = vsub.f32 %v929, 0.6931472
  %v932 = vsub.f32 %v930, 0.6931472
  %v933 = vpack.c.bf16 %v932, %v931
  %v935 = vlaneseq
  %v936 = vshrl.u32 %v935, 7
  %v937 = vsub.s32 0, %v936
  %v938 = vrot.slane %v265, %v937
  %v956 = vunpack.c.l.b16 %v241
  %v957 = vunpack.c.l.b16 %v242
  %v958 = vunpack.c.l.b16 %v243
  %v959 = vunpack.c.l.b16 %v244
  %v960 = vunpack.c.l.b16 %v245
  %v961 = vunpack.c.l.b16 %v246
  %v962 = vunpack.c.l.b16 %v247
  %v963 = vunpack.c.l.b16 %v248
  %v964 = vunpack.c.l.b16 %v249
  %v965 = vunpack.c.l.b16 %v250
  %v966 = vunpack.c.l.b16 %v251
  %v967 = vunpack.c.l.b16 %v252
  %v968 = vunpack.c.l.b16 %v253
  %v969 = vunpack.c.l.b16 %v254
  %v970 = vunpack.c.l.b16 %v255
  %v971 = vunpack.c.l.b16 %v256
  %v972 = vpack.c.b16 %v957, %v956
  %v973 = vpack.c.b16 %v959, %v958
  %v974 = vpack.c.b16 %v961, %v960
  %v975 = vpack.c.b16 %v963, %v962
  %v976 = vpack.c.b16 %v965, %v964
  %v977 = vpack.c.b16 %v967, %v966
  %v978 = vpack.c.b16 %v969, %v968
  %v979 = vpack.c.b16 %v971, %v970
  %988 = vmatprep.subr.bf16.mxu0 0
  %989 = vmatpush1.bf16.msra.mxu0 %v972
  %990 = vmatprep.subr.bf16.mxu0 0
  %991 = vmatpush1.bf16.msra.mxu0 %v973
  %992 = vmatprep.subr.bf16.mxu0 0
  %993 = vmatpush1.bf16.msra.mxu0 %v974
  %994 = vmatprep.subr.bf16.mxu0 0
  %995 = vmatpush1.bf16.msra.mxu0 %v975
  %996 = vmatprep.subr.bf16.mxu0 0
  %997 = vmatpush1.bf16.msra.mxu0 %v976
  %998 = vmatprep.subr.bf16.mxu0 0
  %999 = vmatpush1.bf16.msra.mxu0 %v977
  %1000 = vmatprep.subr.bf16.mxu0 0
  %1001 = vmatpush1.bf16.msra.mxu0 %v978
  %1002 = vmatprep.subr.bf16.mxu0 0
  %1003 = vmatpush1.bf16.msra.mxu0 %v979
  %1004 = vmatprep.subr.bf16.mxu0 0
  %1005 = vmatpush1.bf16.msra.mxu0 0
  %1006 = vmatprep.subr.bf16.mxu0 0
  %1007 = vmatpush1.bf16.msra.mxu0 0
  %1008 = vmatprep.subr.bf16.mxu0 0
  %1009 = vmatpush1.bf16.msra.mxu0 0
  %1010 = vmatprep.subr.bf16.mxu0 0
  %1011 = vmatpush1.bf16.msra.mxu0 0
  %1012 = vmatprep.subr.bf16.mxu0 0
  %1013 = vmatpush1.bf16.msra.mxu0 0
  %1014 = vmatprep.subr.bf16.mxu0 0
  %1015 = vmatpush1.bf16.msra.mxu0 0
  %1016 = vmatprep.subr.bf16.mxu0 0
  %1017 = vmatpush1.bf16.msra.mxu0 0
  %1018 = vmatprep.subr.bf16.mxu0 0
  %1019 = vmatpush1.bf16.msra.mxu0 0
  %1020 = vmatprep.mubr.bf16.mxu0 0
  %1021 = vmatmul.mubr.bf16.gmra.mrb[0].mxu0 %v933
  %v1022 = vpop.f32.mrb[0].mxu0
  %v1023 = vadd.f32 %v938, %v1022
  %v1024 = vpop.f32.mrb[0].mxu0
  %v1025 = vpop.f32.mrb[0].mxu0
  %v1026 = vadd.f32 %v938, %v1025
  %v1027 = vpop.f32.mrb[0].mxu0
  %1028 = vdwg.mxu0
  %v1029 = vadd.f32 %v171, %v1023
  %v1030 = vadd.f32 %v172, %v1026
  %s1031 = scalar_lea.vmem %s6, 320
  %v1032 = vld [vmem:[%s1031] sm:$0xf]
  %v1033 = vld [vmem:[%s1031 + $0x4] sm:$0xf]
  %v1034 = vld [vmem:[%s1031 + $0x8] sm:$0xf]
  %v1035 = vld [vmem:[%s1031 + $0xc] sm:$0xf]
  %v1036 = vld [vmem:[%s1031 + $0x10] sm:$0xf]
  %v1037 = vld [vmem:[%s1031 + $0x14] sm:$0xf]
  %v1038 = vld [vmem:[%s1031 + $0x18] sm:$0xf]
  %v1039 = vld [vmem:[%s1031 + $0x1c] sm:$0xf]
  %v1040 = vld [vmem:[%s1031 + $0x20] sm:$0xf]
  %v1041 = vld [vmem:[%s1031 + $0x24] sm:$0xf]
  %v1042 = vld [vmem:[%s1031 + $0x28] sm:$0xf]
  %v1043 = vld [vmem:[%s1031 + $0x2c] sm:$0xf]
  %v1044 = vld [vmem:[%s1031 + $0x30] sm:$0xf]
  %v1045 = vld [vmem:[%s1031 + $0x34] sm:$0xf]
  %v1046 = vld [vmem:[%s1031 + $0x38] sm:$0xf]
  %v1047 = vld [vmem:[%s1031 + $0x3c] sm:$0xf]
  %s1048 = scalar_lea.vmem %s6, 384
  %v1049 = vld [vmem:[%s1048] sm:$0xf]
  %v1050 = vld [vmem:[%s1048 + $0x4] sm:$0xf]
  %v1051 = vld [vmem:[%s1048 + $0x8] sm:$0xf]
  %v1052 = vld [vmem:[%s1048 + $0xc] sm:$0xf]
  %v1053 = vld [vmem:[%s1048 + $0x10] sm:$0xf]
  %v1054 = vld [vmem:[%s1048 + $0x14] sm:$0xf]
  %v1055 = vld [vmem:[%s1048 + $0x18] sm:$0xf]
  %v1056 = vld [vmem:[%s1048 + $0x1c] sm:$0xf]
  %v1057 = vld [vmem:[%s1048 + $0x20] sm:$0xf]
  %v1058 = vld [vmem:[%s1048 + $0x24] sm:$0xf]
  %v1059 = vld [vmem:[%s1048 + $0x28] sm:$0xf]
  %v1060 = vld [vmem:[%s1048 + $0x2c] sm:$0xf]
  %v1061 = vld [vmem:[%s1048 + $0x30] sm:$0xf]
  %v1062 = vld [vmem:[%s1048 + $0x34] sm:$0xf]
  %v1063 = vld [vmem:[%s1048 + $0x38] sm:$0xf]
  %v1064 = vld [vmem:[%s1048 + $0x3c] sm:$0xf]
  %s1065 = scalar_lea.vmem %s6, 448
  %v1066 = vld [vmem:[%s1065] sm:$0xf]
  %v1067 = vld [vmem:[%s1065 + $0x4] sm:$0xf]
  %v1068 = vld [vmem:[%s1065 + $0x8] sm:$0xf]
  %v1069 = vld [vmem:[%s1065 + $0xc] sm:$0xf]
  %v1070 = vld [vmem:[%s1065 + $0x10] sm:$0xf]
  %v1071 = vld [vmem:[%s1065 + $0x14] sm:$0xf]
  %v1072 = vld [vmem:[%s1065 + $0x18] sm:$0xf]
  %v1073 = vld [vmem:[%s1065 + $0x1c] sm:$0xf]
  %v1074 = vld [vmem:[%s1065 + $0x20] sm:$0xf]
  %v1075 = vld [vmem:[%s1065 + $0x24] sm:$0xf]
  %v1076 = vld [vmem:[%s1065 + $0x28] sm:$0xf]
  %v1077 = vld [vmem:[%s1065 + $0x2c] sm:$0xf]
  %v1078 = vld [vmem:[%s1065 + $0x30] sm:$0xf]
  %v1079 = vld [vmem:[%s1065 + $0x34] sm:$0xf]
  %v1080 = vld [vmem:[%s1065 + $0x38] sm:$0xf]
  %v1081 = vld [vmem:[%s1065 + $0x3c] sm:$0xf]
  %s1082 = scalar_lea.vmem %s6, 512
  %v1083 = vld [vmem:[%s1082] sm:$0xf]
  %v1084 = vld [vmem:[%s1082 + $0x4] sm:$0xf]
  %v1085 = vld [vmem:[%s1082 + $0x8] sm:$0xf]
  %v1086 = vld [vmem:[%s1082 + $0xc] sm:$0xf]
  %v1087 = vld [vmem:[%s1082 + $0x10] sm:$0xf]
  %v1088 = vld [vmem:[%s1082 + $0x14] sm:$0xf]
  %v1089 = vld [vmem:[%s1082 + $0x18] sm:$0xf]
  %v1090 = vld [vmem:[%s1082 + $0x1c] sm:$0xf]
  %v1091 = vld [vmem:[%s1082 + $0x20] sm:$0xf]
  %v1092 = vld [vmem:[%s1082 + $0x24] sm:$0xf]
  %v1093 = vld [vmem:[%s1082 + $0x28] sm:$0xf]
  %v1094 = vld [vmem:[%s1082 + $0x2c] sm:$0xf]
  %v1095 = vld [vmem:[%s1082 + $0x30] sm:$0xf]
  %v1096 = vld [vmem:[%s1082 + $0x34] sm:$0xf]
  %v1097 = vld [vmem:[%s1082 + $0x38] sm:$0xf]
  %v1098 = vld [vmem:[%s1082 + $0x3c] sm:$0xf]
  %s1099 = scalar_lea.vmem %s6, 576
  %v1100 = vld [vmem:[%s1099] sm:$0xf]
  %v1101 = vld [vmem:[%s1099 + $0x4] sm:$0xf]
  %v1102 = vld [vmem:[%s1099 + $0x8] sm:$0xf]
  %v1103 = vld [vmem:[%s1099 + $0xc] sm:$0xf]
  %v1104 = vld [vmem:[%s1099 + $0x10] sm:$0xf]
  %v1105 = vld [vmem:[%s1099 + $0x14] sm:$0xf]
  %v1106 = vld [vmem:[%s1099 + $0x18] sm:$0xf]
  %v1107 = vld [vmem:[%s1099 + $0x1c] sm:$0xf]
  %v1108 = vld [vmem:[%s1099 + $0x20] sm:$0xf]
  %v1109 = vld [vmem:[%s1099 + $0x24] sm:$0xf]
  %v1110 = vld [vmem:[%s1099 + $0x28] sm:$0xf]
  %v1111 = vld [vmem:[%s1099 + $0x2c] sm:$0xf]
  %v1112 = vld [vmem:[%s1099 + $0x30] sm:$0xf]
  %v1113 = vld [vmem:[%s1099 + $0x34] sm:$0xf]
  %v1114 = vld [vmem:[%s1099 + $0x38] sm:$0xf]
  %v1115 = vld [vmem:[%s1099 + $0x3c] sm:$0xf]
  %s1116 = scalar_lea.vmem %s7, 5
  %v1117 = vld [vmem:[%s1116] sm:$0x1]
  %s1118 = scalar_lea.vmem %s7, 6
  %v1119 = vld [vmem:[%s1118] sm:$0x1]
  %s1120 = scalar_lea.vmem %s7, 7
  %v1121 = vld [vmem:[%s1120] sm:$0x1]
  %s1122 = scalar_lea.vmem %s7, 8
  %v1123 = vld [vmem:[%s1122] sm:$0x1]
  %s1124 = scalar_lea.vmem %s7, 9
  %v1125 = vld [vmem:[%s1124] sm:$0x1]
  %v1126 = vpack.c.bf16 %v1030, %v1029
  %v1128 = vlaneseq
  %v1129 = vshrl.u32 %v1128, 7
  %v1130 = vsub.s32 0, %v1129
  %v1131 = vrot.slane %v1117, %v1130
  %v1149 = vunpack.c.l.b16 %v1032
  %v1150 = vunpack.c.l.b16 %v1033
  %v1151 = vunpack.c.l.b16 %v1034
  %v1152 = vunpack.c.l.b16 %v1035
  %v1153 = vunpack.c.l.b16 %v1036
  %v1154 = vunpack.c.l.b16 %v1037
  %v1155 = vunpack.c.l.b16 %v1038
  %v1156 = vunpack.c.l.b16 %v1039
  %v1157 = vunpack.c.l.b16 %v1040
  %v1158 = vunpack.c.l.b16 %v1041
  %v1159 = vunpack.c.l.b16 %v1042
  %v1160 = vunpack.c.l.b16 %v1043
  %v1161 = vunpack.c.l.b16 %v1044
  %v1162 = vunpack.c.l.b16 %v1045
  %v1163 = vunpack.c.l.b16 %v1046
  %v1164 = vunpack.c.l.b16 %v1047
  %v1165 = vpack.c.b16 %v1150, %v1149
  %v1166 = vpack.c.b16 %v1152, %v1151
  %v1167 = vpack.c.b16 %v1154, %v1153
  %v1168 = vpack.c.b16 %v1156, %v1155
  %v1169 = vpack.c.b16 %v1158, %v1157
  %v1170 = vpack.c.b16 %v1160, %v1159
  %v1171 = vpack.c.b16 %v1162, %v1161
  %v1172 = vpack.c.b16 %v1164, %v1163
  %1181 = vmatprep.subr.bf16.mxu0 0
  %1182 = vmatpush1.bf16.msra.mxu0 %v1165
  %1183 = vmatprep.subr.bf16.mxu0 0
  %1184 = vmatpush1.bf16.msra.mxu0 %v1166
  %1185 = vmatprep.subr.bf16.mxu0 0
  %1186 = vmatpush1.bf16.msra.mxu0 %v1167
  %1187 = vmatprep.subr.bf16.mxu0 0
  %1188 = vmatpush1.bf16.msra.mxu0 %v1168
  %1189 = vmatprep.subr.bf16.mxu0 0
  %1190 = vmatpush1.bf16.msra.mxu0 %v1169
  %1191 = vmatprep.subr.bf16.mxu0 0
  %1192 = vmatpush1.bf16.msra.mxu0 %v1170
  %1193 = vmatprep.subr.bf16.mxu0 0
  %1194 = vmatpush1.bf16.msra.mxu0 %v1171
  %1195 = vmatprep.subr.bf16.mxu0 0
  %1196 = vmatpush1.bf16.msra.mxu0 %v1172
  %1197 = vmatprep.subr.bf16.mxu0 0
  %1198 = vmatpush1.bf16.msra.mxu0 0
  %1199 = vmatprep.subr.bf16.mxu0 0
  %1200 = vmatpush1.bf16.msra.mxu0 0
  %1201 = vmatprep.subr.bf16.mxu0 0
  %1202 = vmatpush1.bf16.msra.mxu0 0
  %1203 = vmatprep.subr.bf16.mxu0 0
  %1204 = vmatpush1.bf16.msra.mxu0 0
  %1205 = vmatprep.subr.bf16.mxu0 0
  %1206 = vmatpush1.bf16.msra.mxu0 0
  %1207 = vmatprep.subr.bf16.mxu0 0
  %1208 = vmatpush1.bf16.msra.mxu0 0
  %1209 = vmatprep.subr.bf16.mxu0 0
  %1210 = vmatpush1.bf16.msra.mxu0 0
  %1211 = vmatprep.subr.bf16.mxu0 0
  %1212 = vmatpush1.bf16.msra.mxu0 0
  %1213 = vmatprep.mubr.bf16.mxu0 0
  %1214 = vmatmul.mubr.bf16.gmra.mrb[0].mxu0 %v1126
  %v1215 = vpop.f32.mrb[0].mxu0
  %v1216 = vadd.f32 %v1131, %v1215
  %v1217 = vpop.f32.mrb[0].mxu0
  %v1218 = vpop.f32.mrb[0].mxu0
  %v1219 = vadd.f32 %v1131, %v1218
  %v1220 = vpop.f32.mrb[0].mxu0
  %1221 = vdwg.mxu0
  %v1223 = vlaneseq
  %v1224 = vshrl.u32 %v1223, 7
  %v1225 = vsub.s32 0, %v1224
  %v1226 = vrot.slane %v1119, %v1225
  %v1244 = vunpack.c.l.b16 %v1049
  %v1245 = vunpack.c.l.b16 %v1050
  %v1246 = vunpack.c.l.b16 %v1051
  %v1247 = vunpack.c.l.b16 %v1052
  %v1248 = vunpack.c.l.b16 %v1053
  %v1249 = vunpack.c.l.b16 %v1054
  %v1250 = vunpack.c.l.b16 %v1055
  %v1251 = vunpack.c.l.b16 %v1056
  %v1252 = vunpack.c.l.b16 %v1057
  %v1253 = vunpack.c.l.b16 %v1058
  %v1254 = vunpack.c.l.b16 %v1059
  %v1255 = vunpack.c.l.b16 %v1060
  %v1256 = vunpack.c.l.b16 %v1061
  %v1257 = vunpack.c.l.b16 %v1062
  %v1258 = vunpack.c.l.b16 %v1063
  %v1259 = vunpack.c.l.b16 %v1064
  %v1260 = vpack.c.b16 %v1245, %v1244
  %v1261 = vpack.c.b16 %v1247, %v1246
  %v1262 = vpack.c.b16 %v1249, %v1248
  %v1263 = vpack.c.b16 %v1251, %v1250
  %v1264 = vpack.c.b16 %v1253, %v1252
  %v1265 = vpack.c.b16 %v1255, %v1254
  %v1266 = vpack.c.b16 %v1257, %v1256
  %v1267 = vpack.c.b16 %v1259, %v1258
  %1276 = vmatprep.subr.bf16.mxu0 0
  %1277 = vmatpush1.bf16.msra.mxu0 %v1260
  %1278 = vmatprep.subr.bf16.mxu0 0
  %1279 = vmatpush1.bf16.msra.mxu0 %v1261
  %1280 = vmatprep.subr.bf16.mxu0 0
  %1281 = vmatpush1.bf16.msra.mxu0 %v1262
  %1282 = vmatprep.subr.bf16.mxu0 0
  %1283 = vmatpush1.bf16.msra.mxu0 %v1263
  %1284 = vmatprep.subr.bf16.mxu0 0
  %1285 = vmatpush1.bf16.msra.mxu0 %v1264
  %1286 = vmatprep.subr.bf16.mxu0 0
  %1287 = vmatpush1.bf16.msra.mxu0 %v1265
  %1288 = vmatprep.subr.bf16.mxu0 0
  %1289 = vmatpush1.bf16.msra.mxu0 %v1266
  %1290 = vmatprep.subr.bf16.mxu0 0
  %1291 = vmatpush1.bf16.msra.mxu0 %v1267
  %1292 = vmatprep.subr.bf16.mxu0 0
  %1293 = vmatpush1.bf16.msra.mxu0 0
  %1294 = vmatprep.subr.bf16.mxu0 0
  %1295 = vmatpush1.bf16.msra.mxu0 0
  %1296 = vmatprep.subr.bf16.mxu0 0
  %1297 = vmatpush1.bf16.msra.mxu0 0
  %1298 = vmatprep.subr.bf16.mxu0 0
  %1299 = vmatpush1.bf16.msra.mxu0 0
  %1300 = vmatprep.subr.bf16.mxu0 0
  %1301 = vmatpush1.bf16.msra.mxu0 0
  %1302 = vmatprep.subr.bf16.mxu0 0
  %1303 = vmatpush1.bf16.msra.mxu0 0
  %1304 = vmatprep.subr.bf16.mxu0 0
  %1305 = vmatpush1.bf16.msra.mxu0 0
  %1306 = vmatprep.subr.bf16.mxu0 0
  %1307 = vmatpush1.bf16.msra.mxu0 0
  %1308 = vmatprep.mubr.bf16.mxu0 0
  %1309 = vmatmul.mubr.bf16.gmra.mrb[0].mxu0 %v168
  %v1310 = vpop.f32.mrb[0].mxu0
  %v1311 = vadd.f32 %v1226, %v1310
  %v1312 = vpop.f32.mrb[0].mxu0
  %v1313 = vpop.f32.mrb[0].mxu0
  %v1314 = vadd.f32 %v1226, %v1313
  %v1315 = vpop.f32.mrb[0].mxu0
  %1316 = vmatprep.mubr.bf16.mxu0 0
  %1317 = vmatmul.mubr.bf16.gmra.mrb[0].mxu0 %v169
  %v1318 = vpop.f32.mrb[0].mxu0
  %v1319 = vadd.f32 %v1226, %v1318
  %v1320 = vpop.f32.mrb[0].mxu0
  %v1321 = vpop.f32.mrb[0].mxu0
  %v1322 = vadd.f32 %v1226, %v1321
  %v1323 = vpop.f32.mrb[0].mxu0
  %1324 = vmatprep.mubr.bf16.mxu0 0
  %1325 = vmatmul.mubr.bf16.gmra.mrb[0].mxu0 %v170
  %v1326 = vpop.f32.mrb[0].mxu0
  %v1327 = vadd.f32 %v1226, %v1326
  %v1328 = vpop.f32.mrb[0].mxu0
  %v1329 = vpop.f32.mrb[0].mxu0
  %v1330 = vadd.f32 %v1226, %v1329
  %v1331 = vpop.f32.mrb[0].mxu0
  %1332 = vdwg.mxu0
  %v1333 = vmax.f32 %v1311, 0.0
  %v1334 = vmax.f32 %v1314, 0.0
  %v1335 = vmax.f32 %v1319, 0.0
  %v1336 = vmax.f32 %v1322, 0.0
  %v1337 = vmax.f32 %v1327, 0.0
  %v1338 = vmax.f32 %v1330, 0.0
  %v1339 = vand.u32 2147483647, %v1311
  %v1340 = vand.u32 2147483647, %v1314
  %v1341 = vand.u32 2147483647, %v1319
  %v1342 = vand.u32 2147483647, %v1322
  %v1343 = vand.u32 2147483647, %v1327
  %v1344 = vand.u32 2147483647, %v1330
  %v1345 = vsub.f32 0.0, %v1339
  %v1346 = vsub.f32 0.0, %v1340
  %v1347 = vsub.f32 0.0, %v1341
  %v1348 = vsub.f32 0.0, %v1342
  %v1349 = vsub.f32 0.0, %v1343
  %v1350 = vsub.f32 0.0, %v1344
  %v1351 = vmul.f32 %v1345, 1.442695
  %v1352 = vpow.pop %v1351
  %v1353 = vmul.f32 %v1346, 1.442695
  %v1354 = vpow.pop %v1353
  %v1355 = vmul.f32 %v1347, 1.442695
  %v1356 = vpow.pop %v1355
  %v1357 = vmul.f32 %v1348, 1.442695
  %v1358 = vpow.pop %v1357
  %v1359 = vmul.f32 %v1349, 1.442695
  %v1360 = vpow.pop %v1359
  %v1361 = vmul.f32 %v1350, 1.442695
  %v1362 = vpow.pop %v1361
  %v1363 = vadd.f32 %v1352, 1.0
  %v1364 = vlog2.pop %v1363
  %v1365 = vmul.f32 %v1364, 0.6931472
  %v1366 = vmul.f32 -0.5, %v1352
  %v1367 = vadd.f32 %v1366, 1.0
  %v1368 = vmul.f32 %v1367, %v1352
  %v1369 = vand.u32 2147483647, %v1352
  %vm1370 = vcmp.lt.f32.partialorder %v1369, 0.0004427343
  %v1371 = vsel %vm1370, %v1368, %v1365
  %v1372 = vadd.f32 %v1354, 1.0
  %v1373 = vlog2.pop %v1372
  %v1374 = vmul.f32 %v1373, 0.6931472
  %v1375 = vmul.f32 -0.5, %v1354
  %v1376 = vadd.f32 %v1375, 1.0
  %v1377 = vmul.f32 %v1376, %v1354
  %v1378 = vand.u32 2147483647, %v1354
  %vm1379 = vcmp.lt.f32.partialorder %v1378, 0.0004427343
  %v1380 = vsel %vm1379, %v1377, %v1374
  %v1381 = vadd.f32 %v1356, 1.0
  %v1382 = vlog2.pop %v1381
  %v1383 = vmul.f32 %v1382, 0.6931472
  %v1384 = vmul.f32 -0.5, %v1356
  %v1385 = vadd.f32 %v1384, 1.0
  %v1386 = vmul.f32 %v1385, %v1356
  %v1387 = vand.u32 2147483647, %v1356
  %vm1388 = vcmp.lt.f32.partialorder %v1387, 0.0004427343
  %v1389 = vsel %vm1388, %v1386, %v1383
  %v1390 = vadd.f32 %v1358, 1.0
  %v1391 = vlog2.pop %v1390
  %v1392 = vmul.f32 %v1391, 0.6931472
  %v1393 = vmul.f32 -0.5, %v1358
  %v1394 = vadd.f32 %v1393, 1.0
  %v1395 = vmul.f32 %v1394, %v1358
  %v1396 = vand.u32 2147483647, %v1358
  %vm1397 = vcmp.lt.f32.partialorder %v1396, 0.0004427343
  %v1398 = vsel %vm1397, %v1395, %v1392
  %v1399 = vadd.f32 %v1360, 1.0
  %v1400 = vlog2.pop %v1399
  %v1401 = vmul.f32 %v1400, 0.6931472
  %v1402 = vmul.f32 -0.5, %v1360
  %v1403 = vadd.f32 %v1402, 1.0
  %v1404 = vmul.f32 %v1403, %v1360
  %v1405 = vand.u32 2147483647, %v1360
  %vm1406 = vcmp.lt.f32.partialorder %v1405, 0.0004427343
  %v1407 = vsel %vm1406, %v1404, %v1401
  %v1408 = vadd.f32 %v1362, 1.0
  %v1409 = vlog2.pop %v1408
  %v1410 = vmul.f32 %v1409, 0.6931472
  %v1411 = vmul.f32 -0.5, %v1362
  %v1412 = vadd.f32 %v1411, 1.0
  %v1413 = vmul.f32 %v1412, %v1362
  %v1414 = vand.u32 2147483647, %v1362
  %vm1415 = vcmp.lt.f32.partialorder %v1414, 0.0004427343
  %v1416 = vsel %vm1415, %v1413, %v1410
  %v1417 = vadd.f32 %v1333, %v1371
  %v1418 = vadd.f32 %v1334, %v1380
  %v1419 = vadd.f32 %v1335, %v1389
  %v1420 = vadd.f32 %v1336, %v1398
  %v1421 = vadd.f32 %v1337, %v1407
  %v1422 = vadd.f32 %v1338, %v1416
  %v1423 = vsub.f32 %v1417, 0.6931472
  %v1424 = vsub.f32 %v1418, 0.6931472
  %v1425 = vsub.f32 %v1419, 0.6931472
  %v1426 = vsub.f32 %v1420, 0.6931472
  %v1427 = vsub.f32 %v1421, 0.6931472
  %v1428 = vsub.f32 %v1422, 0.6931472
  %v1429 = vpack.c.bf16 %v1424, %v1423
  %v1430 = vpack.c.bf16 %v1426, %v1425
  %v1431 = vpack.c.bf16 %v1428, %v1427
  %v1433 = vlaneseq
  %v1434 = vshrl.u32 %v1433, 7
  %v1435 = vsub.s32 0, %v1434
  %v1436 = vrot.slane %v1121, %v1435
  %v1454 = vunpack.c.l.b16 %v1066
  %v1455 = vunpack.c.l.b16 %v1067
  %v1456 = vunpack.c.l.b16 %v1068
  %v1457 = vunpack.c.l.b16 %v1069
  %v1458 = vunpack.c.l.b16 %v1070
  %v1459 = vunpack.c.l.b16 %v1071
  %v1460 = vunpack.c.l.b16 %v1072
  %v1461 = vunpack.c.l.b16 %v1073
  %v1462 = vunpack.c.l.b16 %v1074
  %v1463 = vunpack.c.l.b16 %v1075
  %v1464 = vunpack.c.l.b16 %v1076
  %v1465 = vunpack.c.l.b16 %v1077
  %v1466 = vunpack.c.l.b16 %v1078
  %v1467 = vunpack.c.l.b16 %v1079
  %v1468 = vunpack.c.l.b16 %v1080
  %v1469 = vunpack.c.l.b16 %v1081
  %v1470 = vpack.c.b16 %v1455, %v1454
  %v1471 = vpack.c.b16 %v1457, %v1456
  %v1472 = vpack.c.b16 %v1459, %v1458
  %v1473 = vpack.c.b16 %v1461, %v1460
  %v1474 = vpack.c.b16 %v1463, %v1462
  %v1475 = vpack.c.b16 %v1465, %v1464
  %v1476 = vpack.c.b16 %v1467, %v1466
  %v1477 = vpack.c.b16 %v1469, %v1468
  %1486 = vmatprep.subr.bf16.mxu0 0
  %1487 = vmatpush1.bf16.msra.mxu0 %v1470
  %1488 = vmatprep.subr.bf16.mxu0 0
  %1489 = vmatpush1.bf16.msra.mxu0 %v1471
  %1490 = vmatprep.subr.bf16.mxu0 0
  %1491 = vmatpush1.bf16.msra.mxu0 %v1472
  %1492 = vmatprep.subr.bf16.mxu0 0
  %1493 = vmatpush1.bf16.msra.mxu0 %v1473
  %1494 = vmatprep.subr.bf16.mxu0 0
  %1495 = vmatpush1.bf16.msra.mxu0 %v1474
  %1496 = vmatprep.subr.bf16.mxu0 0
  %1497 = vmatpush1.bf16.msra.mxu0 %v1475
  %1498 = vmatprep.subr.bf16.mxu0 0
  %1499 = vmatpush1.bf16.msra.mxu0 %v1476
  %1500 = vmatprep.subr.bf16.mxu0 0
  %1501 = vmatpush1.bf16.msra.mxu0 %v1477
  %1502 = vmatprep.subr.bf16.mxu0 0
  %1503 = vmatpush1.bf16.msra.mxu0 0
  %1504 = vmatprep.subr.bf16.mxu0 0
  %1505 = vmatpush1.bf16.msra.mxu0 0
  %1506 = vmatprep.subr.bf16.mxu0 0
  %1507 = vmatpush1.bf16.msra.mxu0 0
  %1508 = vmatprep.subr.bf16.mxu0 0
  %1509 = vmatpush1.bf16.msra.mxu0 0
  %1510 = vmatprep.subr.bf16.mxu0 0
  %1511 = vmatpush1.bf16.msra.mxu0 0
  %1512 = vmatprep.subr.bf16.mxu0 0
  %1513 = vmatpush1.bf16.msra.mxu0 0
  %1514 = vmatprep.subr.bf16.mxu0 0
  %1515 = vmatpush1.bf16.msra.mxu0 0
  %1516 = vmatprep.subr.bf16.mxu0 0
  %1517 = vmatpush1.bf16.msra.mxu0 0
  %1518 = vmatprep.mubr.bf16.mxu0 0
  %1519 = vmatmul.mubr.bf16.gmra.mrb[0].mxu0 %v1429
  %v1520 = vpop.f32.mrb[0].mxu0
  %v1521 = vadd.f32 %v1436, %v1520
  %v1522 = vpop.f32.mrb[0].mxu0
  %v1523 = vpop.f32.mrb[0].mxu0
  %v1524 = vadd.f32 %v1436, %v1523
  %v1525 = vpop.f32.mrb[0].mxu0
  %1526 = vmatprep.mubr.bf16.mxu0 0
  %1527 = vmatmul.mubr.bf16.gmra.mrb[0].mxu0 %v1430
  %v1528 = vpop.f32.mrb[0].mxu0
  %v1529 = vadd.f32 %v1436, %v1528
  %v1530 = vpop.f32.mrb[0].mxu0
  %v1531 = vpop.f32.mrb[0].mxu0
  %v1532 = vadd.f32 %v1436, %v1531
  %v1533 = vpop.f32.mrb[0].mxu0
  %1534 = vmatprep.mubr.bf16.mxu0 0
  %1535 = vmatmul.mubr.bf16.gmra.mrb[0].mxu0 %v1431
  %v1536 = vpop.f32.mrb[0].mxu0
  %v1537 = vadd.f32 %v1436, %v1536
  %v1538 = vpop.f32.mrb[0].mxu0
  %v1539 = vpop.f32.mrb[0].mxu0
  %v1540 = vadd.f32 %v1436, %v1539
  %v1541 = vpop.f32.mrb[0].mxu0
  %1542 = vdwg.mxu0
  %v1543 = vpack.c.bf16 %v1219, %v1216
  %1544 = vmatprep.subr.bf16.mxu0 0
  %1545 = vmatpush1.bf16.msra.mxu0 %v1543
  %1546 = vmatprep.subr.bf16.mxu0 0
  %1547 = vmatpush1.bf16.msra.mxu0 0
  %1548 = vmatprep.subr.bf16.mxu0 0
  %1549 = vmatpush1.bf16.msra.mxu0 0
  %1550 = vmatprep.subr.bf16.mxu0 0
  %1551 = vmatpush1.bf16.msra.mxu0 0
  %1552 = vmatprep.subr.bf16.mxu0 0
  %1553 = vmatpush1.bf16.msra.mxu0 0
  %1554 = vmatprep.subr.bf16.mxu0 0
  %1555 = vmatpush1.bf16.msra.mxu0 0
  %1556 = vmatprep.subr.bf16.mxu0 0
  %1557 = vmatpush1.bf16.msra.mxu0 0
  %1558 = vmatprep.subr.bf16.mxu0 0
  %1559 = vmatpush1.bf16.msra.mxu0 0
  %1560 = vmatprep.subr.bf16.mxu0 0
  %1561 = vmatpush1.bf16.msra.mxu0 0
  %1562 = vmatprep.subr.bf16.mxu0 0
  %1563 = vmatpush1.bf16.msra.mxu0 0
  %1564 = vmatprep.subr.bf16.mxu0 0
  %1565 = vmatpush1.bf16.msra.mxu0 0
  %1566 = vmatprep.subr.bf16.mxu0 0
  %1567 = vmatpush1.bf16.msra.mxu0 0
  %1568 = vmatprep.subr.bf16.mxu0 0
  %1569 = vmatpush1.bf16.msra.mxu0 0
  %1570 = vmatprep.subr.bf16.mxu0 0
  %1571 = vmatpush1.bf16.msra.mxu0 0
  %1572 = vmatprep.subr.bf16.mxu0 0
  %1573 = vmatpush1.bf16.msra.mxu0 0
  %1574 = vmatprep.subr.bf16.mxu0 0
  %1575 = vmatpush1.bf16.msra.mxu0 0
  %1576 = vmatprep.mubr.bf16.mxu0 0
  %1577 = vmatmul.mubr.bf16.gmra.mrb[0].mxu0 %v686
  %v1578 = vpop.f32.mrb[0].mxu0
  %v1579 = vadd.f32 0.0, %v1578
  %v1580 = vpop.f32.mrb[0].mxu0
  %v1581 = vpop.f32.mrb[0].mxu0
  %v1582 = vadd.f32 0.0, %v1581
  %v1583 = vpop.f32.mrb[0].mxu0
  %1584 = vmatprep.mubr.bf16.mxu0 0
  %1585 = vmatmul.mubr.bf16.gmra.mrb[0].mxu0 %v689
  %v1586 = vpop.f32.mrb[0].mxu0
  %v1587 = vadd.f32 0.0, %v1586
  %v1588 = vpop.f32.mrb[0].mxu0
  %v1589 = vpop.f32.mrb[0].mxu0
  %v1590 = vadd.f32 0.0, %v1589
  %v1591 = vpop.f32.mrb[0].mxu0
  %1592 = vmatprep.mubr.bf16.mxu0 0
  %1593 = vmatmul.mubr.bf16.gmra.mrb[0].mxu0 %v692
  %v1594 = vpop.f32.mrb[0].mxu0
  %v1595 = vadd.f32 0.0, %v1594
  %v1596 = vpop.f32.mrb[0].mxu0
  %v1597 = vpop.f32.mrb[0].mxu0
  %v1598 = vadd.f32 0.0, %v1597
  %v1599 = vpop.f32.mrb[0].mxu0
  %1600 = vdwg.mxu0
  %v1601 = vmul.f32 %v1579, %v1521
  %v1602 = vmul.f32 %v1582, %v1524
  %v1603 = vmul.f32 %v1587, %v1529
  %v1604 = vmul.f32 %v1590, %v1532
  %v1605 = vmul.f32 %v1595, %v1537
  %v1606 = vmul.f32 %v1598, %v1540
  %v1607 = vpack.c.bf16 %v1602, %v1601
  %v1608 = vpack.c.bf16 %v1604, %v1603
  %v1609 = vpack.c.bf16 %v1606, %v1605
  %1610 = vmatprep.subr.bf16.mxu0 0
  %1611 = vmatpush1.bf16.msra.mxu0 %v1607
  %1612 = vmatprep.subr.bf16.mxu0 0
  %1613 = vmatpush1.bf16.msra.mxu0 %v1608
  %1614 = vmatprep.subr.bf16.mxu0 0
  %1615 = vmatpush1.bf16.msra.mxu0 %v1609
  %1616 = vmatprep.subr.bf16.mxu0 0
  %1617 = vmatpush1.bf16.msra.mxu0 0
  %1618 = vmatprep.subr.bf16.mxu0 0
  %1619 = vmatpush1.bf16.msra.mxu0 0
  %1620 = vmatprep.subr.bf16.mxu0 0
  %1621 = vmatpush1.bf16.msra.mxu0 0
  %1622 = vmatprep.subr.bf16.mxu0 0
  %1623 = vmatpush1.bf16.msra.mxu0 0
  %1624 = vmatprep.subr.bf16.mxu0 0
  %1625 = vmatpush1.bf16.msra.mxu0 0
  %1626 = vmatprep.subr.bf16.mxu0 0
  %1627 = vmatpush1.bf16.msra.mxu0 0
  %1628 = vmatprep.subr.bf16.mxu0 0
  %1629 = vmatpush1.bf16.msra.mxu0 0
  %1630 = vmatprep.subr.bf16.mxu0 0
  %1631 = vmatpush1.bf16.msra.mxu0 0
  %1632 = vmatprep.subr.bf16.mxu0 0
  %1633 = vmatpush1.bf16.msra.mxu0 0
  %1634 = vmatprep.subr.bf16.mxu0 0
  %1635 = vmatpush1.bf16.msra.mxu0 0
  %1636 = vmatprep.subr.bf16.mxu0 0
  %1637 = vmatpush1.bf16.msra.mxu0 0
  %1638 = vmatprep.subr.bf16.mxu0 0
  %1639 = vmatpush1.bf16.msra.mxu0 0
  %1640 = vmatprep.subr.bf16.mxu0 0
  %1641 = vmatpush1.bf16.msra.mxu0 0
  %1642 = vmatprep.mubr.bf16.mxu0 0
  %1643 = vmatmul.mubr.bf16.gmra.mrb[0].mxu0 %v762
  %v1644 = vpop.f32.mrb[0].mxu0
  %v1645 = vadd.f32 0.0, %v1644
  %v1646 = vpop.f32.mrb[0].mxu0
  %v1647 = vpop.f32.mrb[0].mxu0
  %v1648 = vadd.f32 0.0, %v1647
  %v1649 = vpop.f32.mrb[0].mxu0
  %1650 = vdwg.mxu0
  %v1651 = vpack.c.bf16 %v1648, %v1645
  %v1653 = vlaneseq
  %v1654 = vshrl.u32 %v1653, 7
  %v1655 = vsub.s32 0, %v1654
  %v1656 = vrot.slane %v1123, %v1655
  %v1674 = vunpack.c.l.b16 %v1083
  %v1675 = vunpack.c.l.b16 %v1084
  %v1676 = vunpack.c.l.b16 %v1085
  %v1677 = vunpack.c.l.b16 %v1086
  %v1678 = vunpack.c.l.b16 %v1087
  %v1679 = vunpack.c.l.b16 %v1088
  %v1680 = vunpack.c.l.b16 %v1089
  %v1681 = vunpack.c.l.b16 %v1090
  %v1682 = vunpack.c.l.b16 %v1091
  %v1683 = vunpack.c.l.b16 %v1092
  %v1684 = vunpack.c.l.b16 %v1093
  %v1685 = vunpack.c.l.b16 %v1094
  %v1686 = vunpack.c.l.b16 %v1095
  %v1687 = vunpack.c.l.b16 %v1096
  %v1688 = vunpack.c.l.b16 %v1097
  %v1689 = vunpack.c.l.b16 %v1098
  %v1690 = vpack.c.b16 %v1675, %v1674
  %v1691 = vpack.c.b16 %v1677, %v1676
  %v1692 = vpack.c.b16 %v1679, %v1678
  %v1693 = vpack.c.b16 %v1681, %v1680
  %v1694 = vpack.c.b16 %v1683, %v1682
  %v1695 = vpack.c.b16 %v1685, %v1684
  %v1696 = vpack.c.b16 %v1687, %v1686
  %v1697 = vpack.c.b16 %v1689, %v1688
  %1706 = vmatprep.subr.bf16.mxu0 0
  %1707 = vmatpush1.bf16.msra.mxu0 %v1690
  %1708 = vmatprep.subr.bf16.mxu0 0
  %1709 = vmatpush1.bf16.msra.mxu0 %v1691
  %1710 = vmatprep.subr.bf16.mxu0 0
  %1711 = vmatpush1.bf16.msra.mxu0 %v1692
  %1712 = vmatprep.subr.bf16.mxu0 0
  %1713 = vmatpush1.bf16.msra.mxu0 %v1693
  %1714 = vmatprep.subr.bf16.mxu0 0
  %1715 = vmatpush1.bf16.msra.mxu0 %v1694
  %1716 = vmatprep.subr.bf16.mxu0 0
  %1717 = vmatpush1.bf16.msra.mxu0 %v1695
  %1718 = vmatprep.subr.bf16.mxu0 0
  %1719 = vmatpush1.bf16.msra.mxu0 %v1696
  %1720 = vmatprep.subr.bf16.mxu0 0
  %1721 = vmatpush1.bf16.msra.mxu0 %v1697
  %1722 = vmatprep.subr.bf16.mxu0 0
  %1723 = vmatpush1.bf16.msra.mxu0 0
  %1724 = vmatprep.subr.bf16.mxu0 0
  %1725 = vmatpush1.bf16.msra.mxu0 0
  %1726 = vmatprep.subr.bf16.mxu0 0
  %1727 = vmatpush1.bf16.msra.mxu0 0
  %1728 = vmatprep.subr.bf16.mxu0 0
  %1729 = vmatpush1.bf16.msra.mxu0 0
  %1730 = vmatprep.subr.bf16.mxu0 0
  %1731 = vmatpush1.bf16.msra.mxu0 0
  %1732 = vmatprep.subr.bf16.mxu0 0
  %1733 = vmatpush1.bf16.msra.mxu0 0
  %1734 = vmatprep.subr.bf16.mxu0 0
  %1735 = vmatpush1.bf16.msra.mxu0 0
  %1736 = vmatprep.subr.bf16.mxu0 0
  %1737 = vmatpush1.bf16.msra.mxu0 0
  %1738 = vmatprep.mubr.bf16.mxu0 0
  %1739 = vmatmul.mubr.bf16.gmra.mrb[0].mxu0 %v1651
  %v1740 = vpop.f32.mrb[0].mxu0
  %v1741 = vadd.f32 %v1656, %v1740
  %v1742 = vpop.f32.mrb[0].mxu0
  %v1743 = vpop.f32.mrb[0].mxu0
  %v1744 = vadd.f32 %v1656, %v1743
  %v1745 = vpop.f32.mrb[0].mxu0
  %1746 = vdwg.mxu0
  %v1747 = vmax.f32 %v1741, 0.0
  %v1748 = vmax.f32 %v1744, 0.0
  %v1749 = vand.u32 2147483647, %v1741
  %v1750 = vand.u32 2147483647, %v1744
  %v1751 = vsub.f32 0.0, %v1749
  %v1752 = vsub.f32 0.0, %v1750
  %v1753 = vmul.f32 %v1751, 1.442695
  %v1754 = vpow.pop %v1753
  %v1755 = vmul.f32 %v1752, 1.442695
  %v1756 = vpow.pop %v1755
  %v1757 = vadd.f32 %v1754, 1.0
  %v1758 = vlog2.pop %v1757
  %v1759 = vmul.f32 %v1758, 0.6931472
  %v1760 = vmul.f32 -0.5, %v1754
  %v1761 = vadd.f32 %v1760, 1.0
  %v1762 = vmul.f32 %v1761, %v1754
  %v1763 = vand.u32 2147483647, %v1754
  %vm1764 = vcmp.lt.f32.partialorder %v1763, 0.0004427343
  %v1765 = vsel %vm1764, %v1762, %v1759
  %v1766 = vadd.f32 %v1756, 1.0
  %v1767 = vlog2.pop %v1766
  %v1768 = vmul.f32 %v1767, 0.6931472
  %v1769 = vmul.f32 -0.5, %v1756
  %v1770 = vadd.f32 %v1769, 1.0
  %v1771 = vmul.f32 %v1770, %v1756
  %v1772 = vand.u32 2147483647, %v1756
  %vm1773 = vcmp.lt.f32.partialorder %v1772, 0.0004427343
  %v1774 = vsel %vm1773, %v1771, %v1768
  %v1775 = vadd.f32 %v1747, %v1765
  %v1776 = vadd.f32 %v1748, %v1774
  %v1777 = vsub.f32 %v1775, 0.6931472
  %v1778 = vsub.f32 %v1776, 0.6931472
  %v1779 = vpack.c.bf16 %v1778, %v1777
  %v1781 = vlaneseq
  %v1782 = vshrl.u32 %v1781, 7
  %v1783 = vsub.s32 0, %v1782
  %v1784 = vrot.slane %v1125, %v1783
  %v1802 = vunpack.c.l.b16 %v1100
  %v1803 = vunpack.c.l.b16 %v1101
  %v1804 = vunpack.c.l.b16 %v1102
  %v1805 = vunpack.c.l.b16 %v1103
  %v1806 = vunpack.c.l.b16 %v1104
  %v1807 = vunpack.c.l.b16 %v1105
  %v1808 = vunpack.c.l.b16 %v1106
  %v1809 = vunpack.c.l.b16 %v1107
  %v1810 = vunpack.c.l.b16 %v1108
  %v1811 = vunpack.c.l.b16 %v1109
  %v1812 = vunpack.c.l.b16 %v1110
  %v1813 = vunpack.c.l.b16 %v1111
  %v1814 = vunpack.c.l.b16 %v1112
  %v1815 = vunpack.c.l.b16 %v1113
  %v1816 = vunpack.c.l.b16 %v1114
  %v1817 = vunpack.c.l.b16 %v1115
  %v1818 = vpack.c.b16 %v1803, %v1802
  %v1819 = vpack.c.b16 %v1805, %v1804
  %v1820 = vpack.c.b16 %v1807, %v1806
  %v1821 = vpack.c.b16 %v1809, %v1808
  %v1822 = vpack.c.b16 %v1811, %v1810
  %v1823 = vpack.c.b16 %v1813, %v1812
  %v1824 = vpack.c.b16 %v1815, %v1814
  %v1825 = vpack.c.b16 %v1817, %v1816
  %1834 = vmatprep.subr.bf16.mxu0 0
  %1835 = vmatpush1.bf16.msra.mxu0 %v1818
  %1836 = vmatprep.subr.bf16.mxu0 0
  %1837 = vmatpush1.bf16.msra.mxu0 %v1819
  %1838 = vmatprep.subr.bf16.mxu0 0
  %1839 = vmatpush1.bf16.msra.mxu0 %v1820
  %1840 = vmatprep.subr.bf16.mxu0 0
  %1841 = vmatpush1.bf16.msra.mxu0 %v1821
  %1842 = vmatprep.subr.bf16.mxu0 0
  %1843 = vmatpush1.bf16.msra.mxu0 %v1822
  %1844 = vmatprep.subr.bf16.mxu0 0
  %1845 = vmatpush1.bf16.msra.mxu0 %v1823
  %1846 = vmatprep.subr.bf16.mxu0 0
  %1847 = vmatpush1.bf16.msra.mxu0 %v1824
  %1848 = vmatprep.subr.bf16.mxu0 0
  %1849 = vmatpush1.bf16.msra.mxu0 %v1825
  %1850 = vmatprep.subr.bf16.mxu0 0
  %1851 = vmatpush1.bf16.msra.mxu0 0
  %1852 = vmatprep.subr.bf16.mxu0 0
  %1853 = vmatpush1.bf16.msra.mxu0 0
  %1854 = vmatprep.subr.bf16.mxu0 0
  %1855 = vmatpush1.bf16.msra.mxu0 0
  %1856 = vmatprep.subr.bf16.mxu0 0
  %1857 = vmatpush1.bf16.msra.mxu0 0
  %1858 = vmatprep.subr.bf16.mxu0 0
  %1859 = vmatpush1.bf16.msra.mxu0 0
  %1860 = vmatprep.subr.bf16.mxu0 0
  %1861 = vmatpush1.bf16.msra.mxu0 0
  %1862 = vmatprep.subr.bf16.mxu0 0
  %1863 = vmatpush1.bf16.msra.mxu0 0
  %1864 = vmatprep.subr.bf16.mxu0 0
  %1865 = vmatpush1.bf16.msra.mxu0 0
  %1866 = vmatprep.mubr.bf16.mxu0 0
  %1867 = vmatmul.mubr.bf16.gmra.mrb[0].mxu0 %v1779
  %v1868 = vpop.f32.mrb[0].mxu0
  %v1869 = vadd.f32 %v1784, %v1868
  %v1870 = vpop.f32.mrb[0].mxu0
  %v1871 = vpop.f32.mrb[0].mxu0
  %v1872 = vadd.f32 %v1784, %v1871
  %v1873 = vpop.f32.mrb[0].mxu0
  %1874 = vdwg.mxu0
  %v1875 = vadd.f32 %v1029, %v1869
  %v1876 = vadd.f32 %v1030, %v1872
  %s1877 = scalar_lea.vmem %s6, 640
  %v1878 = vld [vmem:[%s1877] sm:$0xf]
  %v1879 = vld [vmem:[%s1877 + $0x4] sm:$0xf]
  %v1880 = vld [vmem:[%s1877 + $0x8] sm:$0xf]
  %v1881 = vld [vmem:[%s1877 + $0xc] sm:$0xf]
  %v1882 = vld [vmem:[%s1877 + $0x10] sm:$0xf]
  %v1883 = vld [vmem:[%s1877 + $0x14] sm:$0xf]
  %v1884 = vld [vmem:[%s1877 + $0x18] sm:$0xf]
  %v1885 = vld [vmem:[%s1877 + $0x1c] sm:$0xf]
  %v1886 = vld [vmem:[%s1877 + $0x20] sm:$0xf]
  %v1887 = vld [vmem:[%s1877 + $0x24] sm:$0xf]
  %v1888 = vld [vmem:[%s1877 + $0x28] sm:$0xf]
  %v1889 = vld [vmem:[%s1877 + $0x2c] sm:$0xf]
  %v1890 = vld [vmem:[%s1877 + $0x30] sm:$0xf]
  %v1891 = vld [vmem:[%s1877 + $0x34] sm:$0xf]
  %v1892 = vld [vmem:[%s1877 + $0x38] sm:$0xf]
  %v1893 = vld [vmem:[%s1877 + $0x3c] sm:$0xf]
  %s1894 = scalar_lea.vmem %s6, 704
  %v1895 = vld [vmem:[%s1894] sm:$0xf]
  %v1896 = vld [vmem:[%s1894 + $0x4] sm:$0xf]
  %v1897 = vld [vmem:[%s1894 + $0x8] sm:$0xf]
  %v1898 = vld [vmem:[%s1894 + $0xc] sm:$0xf]
  %v1899 = vld [vmem:[%s1894 + $0x10] sm:$0xf]
  %v1900 = vld [vmem:[%s1894 + $0x14] sm:$0xf]
  %v1901 = vld [vmem:[%s1894 + $0x18] sm:$0xf]
  %v1902 = vld [vmem:[%s1894 + $0x1c] sm:$0xf]
  %v1903 = vld [vmem:[%s1894 + $0x20] sm:$0xf]
  %v1904 = vld [vmem:[%s1894 + $0x24] sm:$0xf]
  %v1905 = vld [vmem:[%s1894 + $0x28] sm:$0xf]
  %v1906 = vld [vmem:[%s1894 + $0x2c] sm:$0xf]
  %v1907 = vld [vmem:[%s1894 + $0x30] sm:$0xf]
  %v1908 = vld [vmem:[%s1894 + $0x34] sm:$0xf]
  %v1909 = vld [vmem:[%s1894 + $0x38] sm:$0xf]
  %v1910 = vld [vmem:[%s1894 + $0x3c] sm:$0xf]
  %s1911 = scalar_lea.vmem %s6, 768
  %v1912 = vld [vmem:[%s1911] sm:$0xf]
  %v1913 = vld [vmem:[%s1911 + $0x4] sm:$0xf]
  %v1914 = vld [vmem:[%s1911 + $0x8] sm:$0xf]
  %v1915 = vld [vmem:[%s1911 + $0xc] sm:$0xf]
  %v1916 = vld [vmem:[%s1911 + $0x10] sm:$0xf]
  %v1917 = vld [vmem:[%s1911 + $0x14] sm:$0xf]
  %v1918 = vld [vmem:[%s1911 + $0x18] sm:$0xf]
  %v1919 = vld [vmem:[%s1911 + $0x1c] sm:$0xf]
  %v1920 = vld [vmem:[%s1911 + $0x20] sm:$0xf]
  %v1921 = vld [vmem:[%s1911 + $0x24] sm:$0xf]
  %v1922 = vld [vmem:[%s1911 + $0x28] sm:$0xf]
  %v1923 = vld [vmem:[%s1911 + $0x2c] sm:$0xf]
  %v1924 = vld [vmem:[%s1911 + $0x30] sm:$0xf]
  %v1925 = vld [vmem:[%s1911 + $0x34] sm:$0xf]
  %v1926 = vld [vmem:[%s1911 + $0x38] sm:$0xf]
  %v1927 = vld [vmem:[%s1911 + $0x3c] sm:$0xf]
  %s1928 = scalar_lea.vmem %s6, 832
  %v1929 = vld [vmem:[%s1928] sm:$0xf]
  %v1930 = vld [vmem:[%s1928 + $0x4] sm:$0xf]
  %v1931 = vld [vmem:[%s1928 + $0x8] sm:$0xf]
  %v1932 = vld [vmem:[%s1928 + $0xc] sm:$0xf]
  %v1933 = vld [vmem:[%s1928 + $0x10] sm:$0xf]
  %v1934 = vld [vmem:[%s1928 + $0x14] sm:$0xf]
  %v1935 = vld [vmem:[%s1928 + $0x18] sm:$0xf]
  %v1936 = vld [vmem:[%s1928 + $0x1c] sm:$0xf]
  %v1937 = vld [vmem:[%s1928 + $0x20] sm:$0xf]
  %v1938 = vld [vmem:[%s1928 + $0x24] sm:$0xf]
  %v1939 = vld [vmem:[%s1928 + $0x28] sm:$0xf]
  %v1940 = vld [vmem:[%s1928 + $0x2c] sm:$0xf]
  %v1941 = vld [vmem:[%s1928 + $0x30] sm:$0xf]
  %v1942 = vld [vmem:[%s1928 + $0x34] sm:$0xf]
  %v1943 = vld [vmem:[%s1928 + $0x38] sm:$0xf]
  %v1944 = vld [vmem:[%s1928 + $0x3c] sm:$0xf]
  %s1945 = scalar_lea.vmem %s6, 896
  %v1946 = vld [vmem:[%s1945] sm:$0xf]
  %v1947 = vld [vmem:[%s1945 + $0x4] sm:$0xf]
  %v1948 = vld [vmem:[%s1945 + $0x8] sm:$0xf]
  %v1949 = vld [vmem:[%s1945 + $0xc] sm:$0xf]
  %v1950 = vld [vmem:[%s1945 + $0x10] sm:$0xf]
  %v1951 = vld [vmem:[%s1945 + $0x14] sm:$0xf]
  %v1952 = vld [vmem:[%s1945 + $0x18] sm:$0xf]
  %v1953 = vld [vmem:[%s1945 + $0x1c] sm:$0xf]
  %v1954 = vld [vmem:[%s1945 + $0x20] sm:$0xf]
  %v1955 = vld [vmem:[%s1945 + $0x24] sm:$0xf]
  %v1956 = vld [vmem:[%s1945 + $0x28] sm:$0xf]
  %v1957 = vld [vmem:[%s1945 + $0x2c] sm:$0xf]
  %v1958 = vld [vmem:[%s1945 + $0x30] sm:$0xf]
  %v1959 = vld [vmem:[%s1945 + $0x34] sm:$0xf]
  %v1960 = vld [vmem:[%s1945 + $0x38] sm:$0xf]
  %v1961 = vld [vmem:[%s1945 + $0x3c] sm:$0xf]
  %s1962 = scalar_lea.vmem %s6, 960
  %v1963 = vld [vmem:[%s1962] sm:$0xf]
  %v1964 = vld [vmem:[%s1962 + $0x4] sm:$0xf]
  %v1965 = vld [vmem:[%s1962 + $0x8] sm:$0xf]
  %v1966 = vld [vmem:[%s1962 + $0xc] sm:$0xf]
  %v1967 = vld [vmem:[%s1962 + $0x10] sm:$0xf]
  %v1968 = vld [vmem:[%s1962 + $0x14] sm:$0xf]
  %v1969 = vld [vmem:[%s1962 + $0x18] sm:$0xf]
  %v1970 = vld [vmem:[%s1962 + $0x1c] sm:$0xf]
  %v1971 = vld [vmem:[%s1962 + $0x20] sm:$0xf]
  %v1972 = vld [vmem:[%s1962 + $0x24] sm:$0xf]
  %v1973 = vld [vmem:[%s1962 + $0x28] sm:$0xf]
  %v1974 = vld [vmem:[%s1962 + $0x2c] sm:$0xf]
  %v1975 = vld [vmem:[%s1962 + $0x30] sm:$0xf]
  %v1976 = vld [vmem:[%s1962 + $0x34] sm:$0xf]
  %v1977 = vld [vmem:[%s1962 + $0x38] sm:$0xf]
  %v1978 = vld [vmem:[%s1962 + $0x3c] sm:$0xf]
  %s1979 = scalar_lea.vmem %s6, 1024
  %v1980 = vld [vmem:[%s1979] sm:$0xf]
  %v1981 = vld [vmem:[%s1979 + $0x4] sm:$0xf]
  %v1982 = vld [vmem:[%s1979 + $0x8] sm:$0xf]
  %v1983 = vld [vmem:[%s1979 + $0xc] sm:$0xf]
  %v1984 = vld [vmem:[%s1979 + $0x10] sm:$0xf]
  %v1985 = vld [vmem:[%s1979 + $0x14] sm:$0xf]
  %v1986 = vld [vmem:[%s1979 + $0x18] sm:$0xf]
  %v1987 = vld [vmem:[%s1979 + $0x1c] sm:$0xf]
  %v1988 = vld [vmem:[%s1979 + $0x20] sm:$0xf]
  %v1989 = vld [vmem:[%s1979 + $0x24] sm:$0xf]
  %v1990 = vld [vmem:[%s1979 + $0x28] sm:$0xf]
  %v1991 = vld [vmem:[%s1979 + $0x2c] sm:$0xf]
  %v1992 = vld [vmem:[%s1979 + $0x30] sm:$0xf]
  %v1993 = vld [vmem:[%s1979 + $0x34] sm:$0xf]
  %v1994 = vld [vmem:[%s1979 + $0x38] sm:$0xf]
  %v1995 = vld [vmem:[%s1979 + $0x3c] sm:$0xf]
  %s1996 = scalar_lea.vmem %s6, 1088
  %v1997 = vld [vmem:[%s1996] sm:$0xf]
  %v1998 = vld [vmem:[%s1996 + $0x4] sm:$0xf]
  %v1999 = vld [vmem:[%s1996 + $0x8] sm:$0xf]
  %v2000 = vld [vmem:[%s1996 + $0xc] sm:$0xf]
  %v2001 = vld [vmem:[%s1996 + $0x10] sm:$0xf]
  %v2002 = vld [vmem:[%s1996 + $0x14] sm:$0xf]
  %v2003 = vld [vmem:[%s1996 + $0x18] sm:$0xf]
  %v2004 = vld [vmem:[%s1996 + $0x1c] sm:$0xf]
  %v2005 = vld [vmem:[%s1996 + $0x20] sm:$0xf]
  %v2006 = vld [vmem:[%s1996 + $0x24] sm:$0xf]
  %v2007 = vld [vmem:[%s1996 + $0x28] sm:$0xf]
  %v2008 = vld [vmem:[%s1996 + $0x2c] sm:$0xf]
  %v2009 = vld [vmem:[%s1996 + $0x30] sm:$0xf]
  %v2010 = vld [vmem:[%s1996 + $0x34] sm:$0xf]
  %v2011 = vld [vmem:[%s1996 + $0x38] sm:$0xf]
  %v2012 = vld [vmem:[%s1996 + $0x3c] sm:$0xf]
  %s2013 = scalar_lea.vmem %s7, 10
  %v2014 = vld [vmem:[%s2013] sm:$0x1]
  %s2015 = scalar_lea.vmem %s7, 11
  %v2016 = vld [vmem:[%s2015] sm:$0x1]
  %s2017 = scalar_lea.vmem %s7, 12
  %v2018 = vld [vmem:[%s2017] sm:$0x1]
  %s2019 = scalar_lea.vmem %s7, 13
  %v2020 = vld [vmem:[%s2019] sm:$0x1]
  %s2021 = scalar_lea.vmem %s7, 14
  %v2022 = vld [vmem:[%s2021] sm:$0x1]
  %s2023 = scalar_lea.vmem %s7, 15
  %v2024 = vld [vmem:[%s2023] sm:$0x1]
  %s2025 = scalar_lea.vmem %s7, 16
  %v2026 = vld [vmem:[%s2025] sm:$0x1]
  %v2027 = vpack.c.bf16 %v1876, %v1875
  %v2029 = vlaneseq
  %v2030 = vshrl.u32 %v2029, 7
  %v2031 = vsub.s32 0, %v2030
  %v2032 = vrot.slane %v2018, %v2031
  %v2050 = vunpack.c.l.b16 %v1912
  %v2051 = vunpack.c.l.b16 %v1913
  %v2052 = vunpack.c.l.b16 %v1914
  %v2053 = vunpack.c.l.b16 %v1915
  %v2054 = vunpack.c.l.b16 %v1916
  %v2055 = vunpack.c.l.b16 %v1917
  %v2056 = vunpack.c.l.b16 %v1918
  %v2057 = vunpack.c.l.b16 %v1919
  %v2058 = vunpack.c.l.b16 %v1920
  %v2059 = vunpack.c.l.b16 %v1921
  %v2060 = vunpack.c.l.b16 %v1922
  %v2061 = vunpack.c.l.b16 %v1923
  %v2062 = vunpack.c.l.b16 %v1924
  %v2063 = vunpack.c.l.b16 %v1925
  %v2064 = vunpack.c.l.b16 %v1926
  %v2065 = vunpack.c.l.b16 %v1927
  %v2066 = vpack.c.b16 %v2051, %v2050
  %v2067 = vpack.c.b16 %v2053, %v2052
  %v2068 = vpack.c.b16 %v2055, %v2054
  %v2069 = vpack.c.b16 %v2057, %v2056
  %v2070 = vpack.c.b16 %v2059, %v2058
  %v2071 = vpack.c.b16 %v2061, %v2060
  %v2072 = vpack.c.b16 %v2063, %v2062
  %v2073 = vpack.c.b16 %v2065, %v2064
  %2082 = vmatprep.subr.bf16.mxu0 0
  %2083 = vmatpush1.bf16.msra.mxu0 %v2066
  %2084 = vmatprep.subr.bf16.mxu0 0
  %2085 = vmatpush1.bf16.msra.mxu0 %v2067
  %2086 = vmatprep.subr.bf16.mxu0 0
  %2087 = vmatpush1.bf16.msra.mxu0 %v2068
  %2088 = vmatprep.subr.bf16.mxu0 0
  %2089 = vmatpush1.bf16.msra.mxu0 %v2069
  %2090 = vmatprep.subr.bf16.mxu0 0
  %2091 = vmatpush1.bf16.msra.mxu0 %v2070
  %2092 = vmatprep.subr.bf16.mxu0 0
  %2093 = vmatpush1.bf16.msra.mxu0 %v2071
  %2094 = vmatprep.subr.bf16.mxu0 0
  %2095 = vmatpush1.bf16.msra.mxu0 %v2072
  %2096 = vmatprep.subr.bf16.mxu0 0
  %2097 = vmatpush1.bf16.msra.mxu0 %v2073
  %2098 = vmatprep.subr.bf16.mxu0 0
  %2099 = vmatpush1.bf16.msra.mxu0 0
  %2100 = vmatprep.subr.bf16.mxu0 0
  %2101 = vmatpush1.bf16.msra.mxu0 0
  %2102 = vmatprep.subr.bf16.mxu0 0
  %2103 = vmatpush1.bf16.msra.mxu0 0
  %2104 = vmatprep.subr.bf16.mxu0 0
  %2105 = vmatpush1.bf16.msra.mxu0 0
  %2106 = vmatprep.subr.bf16.mxu0 0
  %2107 = vmatpush1.bf16.msra.mxu0 0
  %2108 = vmatprep.subr.bf16.mxu0 0
  %2109 = vmatpush1.bf16.msra.mxu0 0
  %2110 = vmatprep.subr.bf16.mxu0 0
  %2111 = vmatpush1.bf16.msra.mxu0 0
  %2112 = vmatprep.subr.bf16.mxu0 0
  %2113 = vmatpush1.bf16.msra.mxu0 0
  %2114 = vmatprep.mubr.bf16.mxu0 0
  %2115 = vmatmul.mubr.bf16.gmra.mrb[0].mxu0 %v2027
  %v2116 = vpop.f32.mrb[0].mxu0
  %v2117 = vadd.f32 %v2032, %v2116
  %v2118 = vpop.f32.mrb[0].mxu0
  %v2119 = vpop.f32.mrb[0].mxu0
  %v2120 = vadd.f32 %v2032, %v2119
  %v2121 = vpop.f32.mrb[0].mxu0
  %2122 = vdwg.mxu0
  %v2123 = vmax.f32 %v2117, 0.0
  %v2124 = vmax.f32 %v2120, 0.0
  %v2125 = vand.u32 2147483647, %v2117
  %v2126 = vand.u32 2147483647, %v2120
  %v2127 = vsub.f32 0.0, %v2125
  %v2128 = vsub.f32 0.0, %v2126
  %v2129 = vmul.f32 %v2127, 1.442695
  %v2130 = vpow.pop %v2129
  %v2131 = vmul.f32 %v2128, 1.442695
  %v2132 = vpow.pop %v2131
  %v2133 = vadd.f32 %v2130, 1.0
  %v2134 = vlog2.pop %v2133
  %v2135 = vmul.f32 %v2134, 0.6931472
  %v2136 = vmul.f32 -0.5, %v2130
  %v2137 = vadd.f32 %v2136, 1.0
  %v2138 = vmul.f32 %v2137, %v2130
  %v2139 = vand.u32 2147483647, %v2130
  %vm2140 = vcmp.lt.f32.partialorder %v2139, 0.0004427343
  %v2141 = vsel %vm2140, %v2138, %v2135
  %v2142 = vadd.f32 %v2132, 1.0
  %v2143 = vlog2.pop %v2142
  %v2144 = vmul.f32 %v2143, 0.6931472
  %v2145 = vmul.f32 -0.5, %v2132
  %v2146 = vadd.f32 %v2145, 1.0
  %v2147 = vmul.f32 %v2146, %v2132
  %v2148 = vand.u32 2147483647, %v2132
  %vm2149 = vcmp.lt.f32.partialorder %v2148, 0.0004427343
  %v2150 = vsel %vm2149, %v2147, %v2144
  %v2151 = vadd.f32 %v2123, %v2141
  %v2152 = vadd.f32 %v2124, %v2150
  %v2153 = vsub.f32 %v2151, 0.6931472
  %v2154 = vsub.f32 %v2152, 0.6931472
  %v2155 = vpack.c.bf16 %v2154, %v2153
  %v2157 = vlaneseq
  %v2158 = vshrl.u32 %v2157, 7
  %v2159 = vsub.s32 0, %v2158
  %v2160 = vrot.slane %v2020, %v2159
  %v2178 = vunpack.c.l.b16 %v1929
  %v2179 = vunpack.c.l.b16 %v1930
  %v2180 = vunpack.c.l.b16 %v1931
  %v2181 = vunpack.c.l.b16 %v1932
  %v2182 = vunpack.c.l.b16 %v1933
  %v2183 = vunpack.c.l.b16 %v1934
  %v2184 = vunpack.c.l.b16 %v1935
  %v2185 = vunpack.c.l.b16 %v1936
  %v2186 = vunpack.c.l.b16 %v1937
  %v2187 = vunpack.c.l.b16 %v1938
  %v2188 = vunpack.c.l.b16 %v1939
  %v2189 = vunpack.c.l.b16 %v1940
  %v2190 = vunpack.c.l.b16 %v1941
  %v2191 = vunpack.c.l.b16 %v1942
  %v2192 = vunpack.c.l.b16 %v1943
  %v2193 = vunpack.c.l.b16 %v1944
  %v2194 = vpack.c.b16 %v2179, %v2178
  %v2195 = vpack.c.b16 %v2181, %v2180
  %v2196 = vpack.c.b16 %v2183, %v2182
  %v2197 = vpack.c.b16 %v2185, %v2184
  %v2198 = vpack.c.b16 %v2187, %v2186
  %v2199 = vpack.c.b16 %v2189, %v2188
  %v2200 = vpack.c.b16 %v2191, %v2190
  %v2201 = vpack.c.b16 %v2193, %v2192
  %2210 = vmatprep.subr.bf16.mxu0 0
  %2211 = vmatpush1.bf16.msra.mxu0 %v2194
  %2212 = vmatprep.subr.bf16.mxu0 0
  %2213 = vmatpush1.bf16.msra.mxu0 %v2195
  %2214 = vmatprep.subr.bf16.mxu0 0
  %2215 = vmatpush1.bf16.msra.mxu0 %v2196
  %2216 = vmatprep.subr.bf16.mxu0 0
  %2217 = vmatpush1.bf16.msra.mxu0 %v2197
  %2218 = vmatprep.subr.bf16.mxu0 0
  %2219 = vmatpush1.bf16.msra.mxu0 %v2198
  %2220 = vmatprep.subr.bf16.mxu0 0
  %2221 = vmatpush1.bf16.msra.mxu0 %v2199
  %2222 = vmatprep.subr.bf16.mxu0 0
  %2223 = vmatpush1.bf16.msra.mxu0 %v2200
  %2224 = vmatprep.subr.bf16.mxu0 0
  %2225 = vmatpush1.bf16.msra.mxu0 %v2201
  %2226 = vmatprep.subr.bf16.mxu0 0
  %2227 = vmatpush1.bf16.msra.mxu0 0
  %2228 = vmatprep.subr.bf16.mxu0 0
  %2229 = vmatpush1.bf16.msra.mxu0 0
  %2230 = vmatprep.subr.bf16.mxu0 0
  %2231 = vmatpush1.bf16.msra.mxu0 0
  %2232 = vmatprep.subr.bf16.mxu0 0
  %2233 = vmatpush1.bf16.msra.mxu0 0
  %2234 = vmatprep.subr.bf16.mxu0 0
  %2235 = vmatpush1.bf16.msra.mxu0 0
  %2236 = vmatprep.subr.bf16.mxu0 0
  %2237 = vmatpush1.bf16.msra.mxu0 0
  %2238 = vmatprep.subr.bf16.mxu0 0
  %2239 = vmatpush1.bf16.msra.mxu0 0
  %2240 = vmatprep.subr.bf16.mxu0 0
  %2241 = vmatpush1.bf16.msra.mxu0 0
  %2242 = vmatprep.mubr.bf16.mxu0 0
  %2243 = vmatmul.mubr.bf16.gmra.mrb[0].mxu0 %v2155
  %v2244 = vpop.f32.mrb[0].mxu0
  %v2245 = vadd.f32 %v2160, %v2244
  %v2246 = vpop.f32.mrb[0].mxu0
  %v2247 = vpop.f32.mrb[0].mxu0
  %v2248 = vadd.f32 %v2160, %v2247
  %v2249 = vpop.f32.mrb[0].mxu0
  %2250 = vdwg.mxu0
  %v2251 = vpack.c.bf16 %v2248, %v2245
  %v2253 = vsel %vm684, %v99, 0
  %2255 = vmatprep.subr.bf16.mxu0 0
  %2256 = vmatpush1.bf16.msra.mxu0 %v2251
  %2257 = vmatprep.subr.bf16.mxu0 0
  %2258 = vmatpush1.bf16.msra.mxu0 0
  %2259 = vmatprep.subr.bf16.mxu0 0
  %2260 = vmatpush1.bf16.msra.mxu0 0
  %2261 = vmatprep.subr.bf16.mxu0 0
  %2262 = vmatpush1.bf16.msra.mxu0 0
  %2263 = vmatprep.subr.bf16.mxu0 0
  %2264 = vmatpush1.bf16.msra.mxu0 0
  %2265 = vmatprep.subr.bf16.mxu0 0
  %2266 = vmatpush1.bf16.msra.mxu0 0
  %2267 = vmatprep.subr.bf16.mxu0 0
  %2268 = vmatpush1.bf16.msra.mxu0 0
  %2269 = vmatprep.subr.bf16.mxu0 0
  %2270 = vmatpush1.bf16.msra.mxu0 0
  %2271 = vmatprep.subr.bf16.mxu0 0
  %2272 = vmatpush1.bf16.msra.mxu0 0
  %2273 = vmatprep.subr.bf16.mxu0 0
  %2274 = vmatpush1.bf16.msra.mxu0 0
  %2275 = vmatprep.subr.bf16.mxu0 0
  %2276 = vmatpush1.bf16.msra.mxu0 0
  %2277 = vmatprep.subr.bf16.mxu0 0
  %2278 = vmatpush1.bf16.msra.mxu0 0
  %2279 = vmatprep.subr.bf16.mxu0 0
  %2280 = vmatpush1.bf16.msra.mxu0 0
  %2281 = vmatprep.subr.bf16.mxu0 0
  %2282 = vmatpush1.bf16.msra.mxu0 0
  %2283 = vmatprep.subr.bf16.mxu0 0
  %2284 = vmatpush1.bf16.msra.mxu0 0
  %2285 = vmatprep.subr.bf16.mxu0 0
  %2286 = vmatpush1.bf16.msra.mxu0 0
  %2287 = vmatprep.mubr.bf16.mxu0 0
  %2288 = vmatmul.mubr.bf16.gmra.mrb[0].mxu0 %v2253
  %v2289 = vpop.f32.mrb[0].mxu0
  %v2290 = vadd.f32 0.0, %v2289
  %v2291 = vpop.f32.mrb[0].mxu0
  %v2292 = vpop.f32.mrb[0].mxu0
  %v2293 = vpop.f32.mrb[0].mxu0
  %2294 = vdwg.mxu0
  %v2295 = vld [vmem:[%s1] sm:$0xff]
  %v2296 = vpack.c.bf16 %v2295, %v2295
  %v2298 = vlaneseq
  %v2299 = vshrl.u32 %v2298, 7
  %v2300 = vsub.s32 0, %v2299
  %v2301 = vrot.slane %v2014, %v2300
  %v2319 = vunpack.c.l.b16 %v1878
  %v2320 = vunpack.c.l.b16 %v1879
  %v2321 = vunpack.c.l.b16 %v1880
  %v2322 = vunpack.c.l.b16 %v1881
  %v2323 = vunpack.c.l.b16 %v1882
  %v2324 = vunpack.c.l.b16 %v1883
  %v2325 = vunpack.c.l.b16 %v1884
  %v2326 = vunpack.c.l.b16 %v1885
  %v2327 = vunpack.c.l.b16 %v1886
  %v2328 = vunpack.c.l.b16 %v1887
  %v2329 = vunpack.c.l.b16 %v1888
  %v2330 = vunpack.c.l.b16 %v1889
  %v2331 = vunpack.c.l.b16 %v1890
  %v2332 = vunpack.c.l.b16 %v1891
  %v2333 = vunpack.c.l.b16 %v1892
  %v2334 = vunpack.c.l.b16 %v1893
  %v2335 = vpack.c.b16 %v2320, %v2319
  %v2336 = vpack.c.b16 %v2322, %v2321
  %v2337 = vpack.c.b16 %v2324, %v2323
  %v2338 = vpack.c.b16 %v2326, %v2325
  %v2339 = vpack.c.b16 %v2328, %v2327
  %v2340 = vpack.c.b16 %v2330, %v2329
  %v2341 = vpack.c.b16 %v2332, %v2331
  %v2342 = vpack.c.b16 %v2334, %v2333
  %2351 = vmatprep.subr.bf16.mxu0 0
  %2352 = vmatpush1.bf16.msra.mxu0 %v2335
  %2353 = vmatprep.subr.bf16.mxu0 0
  %2354 = vmatpush1.bf16.msra.mxu0 %v2336
  %2355 = vmatprep.subr.bf16.mxu0 0
  %2356 = vmatpush1.bf16.msra.mxu0 %v2337
  %2357 = vmatprep.subr.bf16.mxu0 0
  %2358 = vmatpush1.bf16.msra.mxu0 %v2338
  %2359 = vmatprep.subr.bf16.mxu0 0
  %2360 = vmatpush1.bf16.msra.mxu0 %v2339
  %2361 = vmatprep.subr.bf16.mxu0 0
  %2362 = vmatpush1.bf16.msra.mxu0 %v2340
  %2363 = vmatprep.subr.bf16.mxu0 0
  %2364 = vmatpush1.bf16.msra.mxu0 %v2341
  %2365 = vmatprep.subr.bf16.mxu0 0
  %2366 = vmatpush1.bf16.msra.mxu0 %v2342
  %2367 = vmatprep.subr.bf16.mxu0 0
  %2368 = vmatpush1.bf16.msra.mxu0 0
  %2369 = vmatprep.subr.bf16.mxu0 0
  %2370 = vmatpush1.bf16.msra.mxu0 0
  %2371 = vmatprep.subr.bf16.mxu0 0
  %2372 = vmatpush1.bf16.msra.mxu0 0
  %2373 = vmatprep.subr.bf16.mxu0 0
  %2374 = vmatpush1.bf16.msra.mxu0 0
  %2375 = vmatprep.subr.bf16.mxu0 0
  %2376 = vmatpush1.bf16.msra.mxu0 0
  %2377 = vmatprep.subr.bf16.mxu0 0
  %2378 = vmatpush1.bf16.msra.mxu0 0
  %2379 = vmatprep.subr.bf16.mxu0 0
  %2380 = vmatpush1.bf16.msra.mxu0 0
  %2381 = vmatprep.subr.bf16.mxu0 0
  %2382 = vmatpush1.bf16.msra.mxu0 0
  %2383 = vmatprep.mubr.bf16.mxu0 0
  %2384 = vmatmul.mubr.bf16.gmra.mrb[0].mxu0 %v2296
  %v2385 = vpop.f32.mrb[0].mxu0
  %v2386 = vadd.f32 %v2301, %v2385
  %v2387 = vpop.f32.mrb[0].mxu0
  %v2388 = vpop.f32.mrb[0].mxu0
  %v2389 = vpop.f32.mrb[0].mxu0
  %2390 = vdwg.mxu0
  %v2391 = vmax.f32 %v2386, 0.0
  %v2392 = vand.u32 2147483647, %v2386
  %v2393 = vsub.f32 0.0, %v2392
  %v2394 = vmul.f32 %v2393, 1.442695
  %v2395 = vpow.pop %v2394
  %v2396 = vadd.f32 %v2395, 1.0
  %v2397 = vlog2.pop %v2396
  %v2398 = vmul.f32 %v2397, 0.6931472
  %v2399 = vmul.f32 -0.5, %v2395
  %v2400 = vadd.f32 %v2399, 1.0
  %v2401 = vmul.f32 %v2400, %v2395
  %v2402 = vand.u32 2147483647, %v2395
  %vm2403 = vcmp.lt.f32.partialorder %v2402, 0.0004427343
  %v2404 = vsel %vm2403, %v2401, %v2398
  %v2405 = vadd.f32 %v2391, %v2404
  %v2406 = vsub.f32 %v2405, 0.6931472
  %v2407 = vpack.c.bf16 %v2406, %v2406
  %v2409 = vlaneseq
  %v2410 = vshrl.u32 %v2409, 7
  %v2411 = vsub.s32 0, %v2410
  %v2412 = vrot.slane %v2016, %v2411
  %v2430 = vunpack.c.l.b16 %v1895
  %v2431 = vunpack.c.l.b16 %v1896
  %v2432 = vunpack.c.l.b16 %v1897
  %v2433 = vunpack.c.l.b16 %v1898
  %v2434 = vunpack.c.l.b16 %v1899
  %v2435 = vunpack.c.l.b16 %v1900
  %v2436 = vunpack.c.l.b16 %v1901
  %v2437 = vunpack.c.l.b16 %v1902
  %v2438 = vunpack.c.l.b16 %v1903
  %v2439 = vunpack.c.l.b16 %v1904
  %v2440 = vunpack.c.l.b16 %v1905
  %v2441 = vunpack.c.l.b16 %v1906
  %v2442 = vunpack.c.l.b16 %v1907
  %v2443 = vunpack.c.l.b16 %v1908
  %v2444 = vunpack.c.l.b16 %v1909
  %v2445 = vunpack.c.l.b16 %v1910
  %v2446 = vpack.c.b16 %v2431, %v2430
  %v2447 = vpack.c.b16 %v2433, %v2432
  %v2448 = vpack.c.b16 %v2435, %v2434
  %v2449 = vpack.c.b16 %v2437, %v2436
  %v2450 = vpack.c.b16 %v2439, %v2438
  %v2451 = vpack.c.b16 %v2441, %v2440
  %v2452 = vpack.c.b16 %v2443, %v2442
  %v2453 = vpack.c.b16 %v2445, %v2444
  %2462 = vmatprep.subr.bf16.mxu0 0
  %2463 = vmatpush1.bf16.msra.mxu0 %v2446
  %2464 = vmatprep.subr.bf16.mxu0 0
  %2465 = vmatpush1.bf16.msra.mxu0 %v2447
  %2466 = vmatprep.subr.bf16.mxu0 0
  %2467 = vmatpush1.bf16.msra.mxu0 %v2448
  %2468 = vmatprep.subr.bf16.mxu0 0
  %2469 = vmatpush1.bf16.msra.mxu0 %v2449
  %2470 = vmatprep.subr.bf16.mxu0 0
  %2471 = vmatpush1.bf16.msra.mxu0 %v2450
  %2472 = vmatprep.subr.bf16.mxu0 0
  %2473 = vmatpush1.bf16.msra.mxu0 %v2451
  %2474 = vmatprep.subr.bf16.mxu0 0
  %2475 = vmatpush1.bf16.msra.mxu0 %v2452
  %2476 = vmatprep.subr.bf16.mxu0 0
  %2477 = vmatpush1.bf16.msra.mxu0 %v2453
  %2478 = vmatprep.subr.bf16.mxu0 0
  %2479 = vmatpush1.bf16.msra.mxu0 0
  %2480 = vmatprep.subr.bf16.mxu0 0
  %2481 = vmatpush1.bf16.msra.mxu0 0
  %2482 = vmatprep.subr.bf16.mxu0 0
  %2483 = vmatpush1.bf16.msra.mxu0 0
  %2484 = vmatprep.subr.bf16.mxu0 0
  %2485 = vmatpush1.bf16.msra.mxu0 0
  %2486 = vmatprep.subr.bf16.mxu0 0
  %2487 = vmatpush1.bf16.msra.mxu0 0
  %2488 = vmatprep.subr.bf16.mxu0 0
  %2489 = vmatpush1.bf16.msra.mxu0 0
  %2490 = vmatprep.subr.bf16.mxu0 0
  %2491 = vmatpush1.bf16.msra.mxu0 0
  %2492 = vmatprep.subr.bf16.mxu0 0
  %2493 = vmatpush1.bf16.msra.mxu0 0
  %2494 = vmatprep.mubr.bf16.mxu0 0
  %2495 = vmatmul.mubr.bf16.gmra.mrb[0].mxu0 %v2407
  %v2496 = vpop.f32.mrb[0].mxu0
  %v2497 = vadd.f32 %v2412, %v2496
  %v2498 = vpop.f32.mrb[0].mxu0
  %v2499 = vpop.f32.mrb[0].mxu0
  %v2500 = vpop.f32.mrb[0].mxu0
  %2501 = vdwg.mxu0
  %v2502 = vpack.c.bf16 %v2290, %v2290
  %v2503 = vpack.c.bf16 %v2497, %v2497
  %v2520 = vunpack.c.l.b16 %v1963
  %v2521 = vunpack.c.l.b16 %v1964
  %v2522 = vunpack.c.l.b16 %v1965
  %v2523 = vunpack.c.l.b16 %v1966
  %v2524 = vunpack.c.l.b16 %v1967
  %v2525 = vunpack.c.l.b16 %v1968
  %v2526 = vunpack.c.l.b16 %v1969
  %v2527 = vunpack.c.l.b16 %v1970
  %v2528 = vunpack.c.l.b16 %v1971
  %v2529 = vunpack.c.l.b16 %v1972
  %v2530 = vunpack.c.l.b16 %v1973
  %v2531 = vunpack.c.l.b16 %v1974
  %v2532 = vunpack.c.l.b16 %v1975
  %v2533 = vunpack.c.l.b16 %v1976
  %v2534 = vunpack.c.l.b16 %v1977
  %v2535 = vunpack.c.l.b16 %v1978
  %v2536 = vpack.c.b16 %v2521, %v2520
  %v2537 = vpack.c.b16 %v2523, %v2522
  %v2538 = vpack.c.b16 %v2525, %v2524
  %v2539 = vpack.c.b16 %v2527, %v2526
  %v2540 = vpack.c.b16 %v2529, %v2528
  %v2541 = vpack.c.b16 %v2531, %v2530
  %v2542 = vpack.c.b16 %v2533, %v2532
  %v2543 = vpack.c.b16 %v2535, %v2534
  %2552 = vmatprep.subr.bf16.mxu0 0
  %2553 = vmatpush1.bf16.msra.mxu0 %v2536
  %2554 = vmatprep.subr.bf16.mxu0 0
  %2555 = vmatpush1.bf16.msra.mxu0 %v2537
  %2556 = vmatprep.subr.bf16.mxu0 0
  %2557 = vmatpush1.bf16.msra.mxu0 %v2538
  %2558 = vmatprep.subr.bf16.mxu0 0
  %2559 = vmatpush1.bf16.msra.mxu0 %v2539
  %2560 = vmatprep.subr.bf16.mxu0 0
  %2561 = vmatpush1.bf16.msra.mxu0 %v2540
  %2562 = vmatprep.subr.bf16.mxu0 0
  %2563 = vmatpush1.bf16.msra.mxu0 %v2541
  %2564 = vmatprep.subr.bf16.mxu0 0
  %2565 = vmatpush1.bf16.msra.mxu0 %v2542
  %2566 = vmatprep.subr.bf16.mxu0 0
  %2567 = vmatpush1.bf16.msra.mxu0 %v2543
  %2568 = vmatprep.subr.bf16.mxu0 0
  %2569 = vmatpush1.bf16.msra.mxu0 0
  %2570 = vmatprep.subr.bf16.mxu0 0
  %2571 = vmatpush1.bf16.msra.mxu0 0
  %2572 = vmatprep.subr.bf16.mxu0 0
  %2573 = vmatpush1.bf16.msra.mxu0 0
  %2574 = vmatprep.subr.bf16.mxu0 0
  %2575 = vmatpush1.bf16.msra.mxu0 0
  %2576 = vmatprep.subr.bf16.mxu0 0
  %2577 = vmatpush1.bf16.msra.mxu0 0
  %2578 = vmatprep.subr.bf16.mxu0 0
  %2579 = vmatpush1.bf16.msra.mxu0 0
  %2580 = vmatprep.subr.bf16.mxu0 0
  %2581 = vmatpush1.bf16.msra.mxu0 0
  %2582 = vmatprep.subr.bf16.mxu0 0
  %2583 = vmatpush1.bf16.msra.mxu0 0
  %2584 = vmatprep.mubr.bf16.mxu0 0
  %2585 = vmatmul.mubr.bf16.gmra.mrb[0].mxu0 %v2503
  %v2586 = vpop.f32.mrb[0].mxu0
  %v2587 = vadd.f32 0.0, %v2586
  %v2588 = vpop.f32.mrb[0].mxu0
  %v2589 = vpop.f32.mrb[0].mxu0
  %v2590 = vpop.f32.mrb[0].mxu0
  %2591 = vdwg.mxu0
  %v2608 = vunpack.c.l.b16 %v1946
  %v2609 = vunpack.c.l.b16 %v1947
  %v2610 = vunpack.c.l.b16 %v1948
  %v2611 = vunpack.c.l.b16 %v1949
  %v2612 = vunpack.c.l.b16 %v1950
  %v2613 = vunpack.c.l.b16 %v1951
  %v2614 = vunpack.c.l.b16 %v1952
  %v2615 = vunpack.c.l.b16 %v1953
  %v2616 = vunpack.c.l.b16 %v1954
  %v2617 = vunpack.c.l.b16 %v1955
  %v2618 = vunpack.c.l.b16 %v1956
  %v2619 = vunpack.c.l.b16 %v1957
  %v2620 = vunpack.c.l.b16 %v1958
  %v2621 = vunpack.c.l.b16 %v1959
  %v2622 = vunpack.c.l.b16 %v1960
  %v2623 = vunpack.c.l.b16 %v1961
  %v2624 = vpack.c.b16 %v2609, %v2608
  %v2625 = vpack.c.b16 %v2611, %v2610
  %v2626 = vpack.c.b16 %v2613, %v2612
  %v2627 = vpack.c.b16 %v2615, %v2614
  %v2628 = vpack.c.b16 %v2617, %v2616
  %v2629 = vpack.c.b16 %v2619, %v2618
  %v2630 = vpack.c.b16 %v2621, %v2620
  %v2631 = vpack.c.b16 %v2623, %v2622
  %2640 = vmatprep.subr.bf16.mxu0 0
  %2641 = vmatpush1.bf16.msra.mxu0 %v2624
  %2642 = vmatprep.subr.bf16.mxu0 0
  %2643 = vmatpush1.bf16.msra.mxu0 %v2625
  %2644 = vmatprep.subr.bf16.mxu0 0
  %2645 = vmatpush1.bf16.msra.mxu0 %v2626
  %2646 = vmatprep.subr.bf16.mxu0 0
  %2647 = vmatpush1.bf16.msra.mxu0 %v2627
  %2648 = vmatprep.subr.bf16.mxu0 0
  %2649 = vmatpush1.bf16.msra.mxu0 %v2628
  %2650 = vmatprep.subr.bf16.mxu0 0
  %2651 = vmatpush1.bf16.msra.mxu0 %v2629
  %2652 = vmatprep.subr.bf16.mxu0 0
  %2653 = vmatpush1.bf16.msra.mxu0 %v2630
  %2654 = vmatprep.subr.bf16.mxu0 0
  %2655 = vmatpush1.bf16.msra.mxu0 %v2631
  %2656 = vmatprep.subr.bf16.mxu0 0
  %2657 = vmatpush1.bf16.msra.mxu0 0
  %2658 = vmatprep.subr.bf16.mxu0 0
  %2659 = vmatpush1.bf16.msra.mxu0 0
  %2660 = vmatprep.subr.bf16.mxu0 0
  %2661 = vmatpush1.bf16.msra.mxu0 0
  %2662 = vmatprep.subr.bf16.mxu0 0
  %2663 = vmatpush1.bf16.msra.mxu0 0
  %2664 = vmatprep.subr.bf16.mxu0 0
  %2665 = vmatpush1.bf16.msra.mxu0 0
  %2666 = vmatprep.subr.bf16.mxu0 0
  %2667 = vmatpush1.bf16.msra.mxu0 0
  %2668 = vmatprep.subr.bf16.mxu0 0
  %2669 = vmatpush1.bf16.msra.mxu0 0
  %2670 = vmatprep.subr.bf16.mxu0 0
  %2671 = vmatpush1.bf16.msra.mxu0 0
  %2672 = vmatprep.mubr.bf16.mxu0 0
  %2673 = vmatmul.mubr.bf16.gmra.mrb[0].mxu0 %v2502
  %v2674 = vpop.f32.mrb[0].mxu0
  %v2675 = vadd.f32 %v2587, %v2674
  %v2676 = vpop.f32.mrb[0].mxu0
  %v2677 = vpop.f32.mrb[0].mxu0
  %v2678 = vpop.f32.mrb[0].mxu0
  %2679 = vdwg.mxu0
  %v2681 = vlaneseq
  %v2682 = vshrl.u32 %v2681, 7
  %v2683 = vsub.s32 0, %v2682
  %v2684 = vrot.slane %v2022, %v2683
  %v2686 = vadd.f32 %v2675, %v2684
  %v2687 = vmax.f32 %v2686, 0.0
  %v2688 = vand.u32 2147483647, %v2686
  %v2689 = vsub.f32 0.0, %v2688
  %v2690 = vmul.f32 %v2689, 1.442695
  %v2691 = vpow.pop %v2690
  %v2692 = vadd.f32 %v2691, 1.0
  %v2693 = vlog2.pop %v2692
  %v2694 = vmul.f32 %v2693, 0.6931472
  %v2695 = vmul.f32 -0.5, %v2691
  %v2696 = vadd.f32 %v2695, 1.0
  %v2697 = vmul.f32 %v2696, %v2691
  %v2698 = vand.u32 2147483647, %v2691
  %vm2699 = vcmp.lt.f32.partialorder %v2698, 0.0004427343
  %v2700 = vsel %vm2699, %v2697, %v2694
  %v2701 = vadd.f32 %v2687, %v2700
  %v2702 = vsub.f32 %v2701, 0.6931472
  %v2703 = vpack.c.bf16 %v2702, %v2702
  %v2705 = vlaneseq
  %v2706 = vshrl.u32 %v2705, 7
  %v2707 = vsub.s32 0, %v2706
  %v2708 = vrot.slane %v2024, %v2707
  %v2726 = vunpack.c.l.b16 %v1980
  %v2727 = vunpack.c.l.b16 %v1981
  %v2728 = vunpack.c.l.b16 %v1982
  %v2729 = vunpack.c.l.b16 %v1983
  %v2730 = vunpack.c.l.b16 %v1984
  %v2731 = vunpack.c.l.b16 %v1985
  %v2732 = vunpack.c.l.b16 %v1986
  %v2733 = vunpack.c.l.b16 %v1987
  %v2734 = vunpack.c.l.b16 %v1988
  %v2735 = vunpack.c.l.b16 %v1989
  %v2736 = vunpack.c.l.b16 %v1990
  %v2737 = vunpack.c.l.b16 %v1991
  %v2738 = vunpack.c.l.b16 %v1992
  %v2739 = vunpack.c.l.b16 %v1993
  %v2740 = vunpack.c.l.b16 %v1994
  %v2741 = vunpack.c.l.b16 %v1995
  %v2742 = vpack.c.b16 %v2727, %v2726
  %v2743 = vpack.c.b16 %v2729, %v2728
  %v2744 = vpack.c.b16 %v2731, %v2730
  %v2745 = vpack.c.b16 %v2733, %v2732
  %v2746 = vpack.c.b16 %v2735, %v2734
  %v2747 = vpack.c.b16 %v2737, %v2736
  %v2748 = vpack.c.b16 %v2739, %v2738
  %v2749 = vpack.c.b16 %v2741, %v2740
  %2758 = vmatprep.subr.bf16.mxu0 0
  %2759 = vmatpush1.bf16.msra.mxu0 %v2742
  %2760 = vmatprep.subr.bf16.mxu0 0
  %2761 = vmatpush1.bf16.msra.mxu0 %v2743
  %2762 = vmatprep.subr.bf16.mxu0 0
  %2763 = vmatpush1.bf16.msra.mxu0 %v2744
  %2764 = vmatprep.subr.bf16.mxu0 0
  %2765 = vmatpush1.bf16.msra.mxu0 %v2745
  %2766 = vmatprep.subr.bf16.mxu0 0
  %2767 = vmatpush1.bf16.msra.mxu0 %v2746
  %2768 = vmatprep.subr.bf16.mxu0 0
  %2769 = vmatpush1.bf16.msra.mxu0 %v2747
  %2770 = vmatprep.subr.bf16.mxu0 0
  %2771 = vmatpush1.bf16.msra.mxu0 %v2748
  %2772 = vmatprep.subr.bf16.mxu0 0
  %2773 = vmatpush1.bf16.msra.mxu0 %v2749
  %2774 = vmatprep.subr.bf16.mxu0 0
  %2775 = vmatpush1.bf16.msra.mxu0 0
  %2776 = vmatprep.subr.bf16.mxu0 0
  %2777 = vmatpush1.bf16.msra.mxu0 0
  %2778 = vmatprep.subr.bf16.mxu0 0
  %2779 = vmatpush1.bf16.msra.mxu0 0
  %2780 = vmatprep.subr.bf16.mxu0 0
  %2781 = vmatpush1.bf16.msra.mxu0 0
  %2782 = vmatprep.subr.bf16.mxu0 0
  %2783 = vmatpush1.bf16.msra.mxu0 0
  %2784 = vmatprep.subr.bf16.mxu0 0
  %2785 = vmatpush1.bf16.msra.mxu0 0
  %2786 = vmatprep.subr.bf16.mxu0 0
  %2787 = vmatpush1.bf16.msra.mxu0 0
  %2788 = vmatprep.subr.bf16.mxu0 0
  %2789 = vmatpush1.bf16.msra.mxu0 0
  %2790 = vmatprep.mubr.bf16.mxu0 0
  %2791 = vmatmul.mubr.bf16.gmra.mrb[0].mxu0 %v2703
  %v2792 = vpop.f32.mrb[0].mxu0
  %v2793 = vadd.f32 %v2708, %v2792
  %v2794 = vpop.f32.mrb[0].mxu0
  %v2795 = vpop.f32.mrb[0].mxu0
  %v2796 = vpop.f32.mrb[0].mxu0
  %2797 = vdwg.mxu0
  %v2798 = vmax.f32 %v2793, 0.0
  %v2799 = vand.u32 2147483647, %v2793
  %v2800 = vsub.f32 0.0, %v2799
  %v2801 = vmul.f32 %v2800, 1.442695
  %v2802 = vpow.pop %v2801
  %v2803 = vadd.f32 %v2802, 1.0
  %v2804 = vlog2.pop %v2803
  %v2805 = vmul.f32 %v2804, 0.6931472
  %v2806 = vmul.f32 -0.5, %v2802
  %v2807 = vadd.f32 %v2806, 1.0
  %v2808 = vmul.f32 %v2807, %v2802
  %v2809 = vand.u32 2147483647, %v2802
  %vm2810 = vcmp.lt.f32.partialorder %v2809, 0.0004427343
  %v2811 = vsel %vm2810, %v2808, %v2805
  %v2812 = vadd.f32 %v2798, %v2811
  %v2813 = vsub.f32 %v2812, 0.6931472
  %v2814 = vpack.c.bf16 %v2813, %v2813
  %v2816 = vlaneseq
  %v2817 = vshrl.u32 %v2816, 7
  %v2818 = vsub.s32 0, %v2817
  %v2819 = vrot.slane %v2026, %v2818
  %v2837 = vunpack.c.l.b16 %v1997
  %v2838 = vunpack.c.l.b16 %v1998
  %v2839 = vunpack.c.l.b16 %v1999
  %v2840 = vunpack.c.l.b16 %v2000
  %v2841 = vunpack.c.l.b16 %v2001
  %v2842 = vunpack.c.l.b16 %v2002
  %v2843 = vunpack.c.l.b16 %v2003
  %v2844 = vunpack.c.l.b16 %v2004
  %v2845 = vunpack.c.l.b16 %v2005
  %v2846 = vunpack.c.l.b16 %v2006
  %v2847 = vunpack.c.l.b16 %v2007
  %v2848 = vunpack.c.l.b16 %v2008
  %v2849 = vunpack.c.l.b16 %v2009
  %v2850 = vunpack.c.l.b16 %v2010
  %v2851 = vunpack.c.l.b16 %v2011
  %v2852 = vunpack.c.l.b16 %v2012
  %v2853 = vpack.c.b16 %v2838, %v2837
  %v2854 = vpack.c.b16 %v2840, %v2839
  %v2855 = vpack.c.b16 %v2842, %v2841
  %v2856 = vpack.c.b16 %v2844, %v2843
  %v2857 = vpack.c.b16 %v2846, %v2845
  %v2858 = vpack.c.b16 %v2848, %v2847
  %v2859 = vpack.c.b16 %v2850, %v2849
  %v2860 = vpack.c.b16 %v2852, %v2851
  %2869 = vmatprep.subr.bf16.mxu0 0
  %2870 = vmatpush1.bf16.msra.mxu0 %v2853
  %2871 = vmatprep.subr.bf16.mxu0 0
  %2872 = vmatpush1.bf16.msra.mxu0 %v2854
  %2873 = vmatprep.subr.bf16.mxu0 0
  %2874 = vmatpush1.bf16.msra.mxu0 %v2855
  %2875 = vmatprep.subr.bf16.mxu0 0
  %2876 = vmatpush1.bf16.msra.mxu0 %v2856
  %2877 = vmatprep.subr.bf16.mxu0 0
  %2878 = vmatpush1.bf16.msra.mxu0 %v2857
  %2879 = vmatprep.subr.bf16.mxu0 0
  %2880 = vmatpush1.bf16.msra.mxu0 %v2858
  %2881 = vmatprep.subr.bf16.mxu0 0
  %2882 = vmatpush1.bf16.msra.mxu0 %v2859
  %2883 = vmatprep.subr.bf16.mxu0 0
  %2884 = vmatpush1.bf16.msra.mxu0 %v2860
  %2885 = vmatprep.subr.bf16.mxu0 0
  %2886 = vmatpush1.bf16.msra.mxu0 0
  %2887 = vmatprep.subr.bf16.mxu0 0
  %2888 = vmatpush1.bf16.msra.mxu0 0
  %2889 = vmatprep.subr.bf16.mxu0 0
  %2890 = vmatpush1.bf16.msra.mxu0 0
  %2891 = vmatprep.subr.bf16.mxu0 0
  %2892 = vmatpush1.bf16.msra.mxu0 0
  %2893 = vmatprep.subr.bf16.mxu0 0
  %2894 = vmatpush1.bf16.msra.mxu0 0
  %2895 = vmatprep.subr.bf16.mxu0 0
  %2896 = vmatpush1.bf16.msra.mxu0 0
  %2897 = vmatprep.subr.bf16.mxu0 0
  %2898 = vmatpush1.bf16.msra.mxu0 0
  %2899 = vmatprep.subr.bf16.mxu0 0
  %2900 = vmatpush1.bf16.msra.mxu0 0
  %2901 = vmatprep.mubr.bf16.mxu0 0
  %2902 = vmatmul.mubr.bf16.gmra.mrb[0].mxu0 %v2814
  %v2903 = vpop.f32.mrb[0].mxu0
  %v2904 = vadd.f32 %v2819, %v2903
  %v2905 = vpop.f32.mrb[0].mxu0
  %v2906 = vpop.f32.mrb[0].mxu0
  %v2907 = vpop.f32.mrb[0].mxu0
  %2908 = vdwg.mxu0
  %2909 = vst [vmem:[%s8] sm:$0xff] %v2904
  // Predicated region
  $region34: #{zschnet_forward.1} parent=0 // pred_check
    _
  $region35: #{zschnet_forward.1} parent=0 // pred_check_branch
    %2911 = sbr.rel (0) target = $region37
  $region36: #{zschnet_forward.1} parent=0 // pred_region
    _
  $region37: #{zschnet_forward.1} parent=0 // pred_fallthru
    _
  // Predicated region
  $region38: #{zschnet_forward.1} parent=0 // pred_check
    _
  $region39: #{zschnet_forward.1} parent=0 // pred_check_branch
    %2913 = sbr.rel (0) target = $region41
  $region40: #{zschnet_forward.1} parent=0 // pred_region
    _
  $region41: #{zschnet_forward.1} parent=0 // pred_fallthru
    _

</llo_original>
